<compile_context>
chip_gen: v6e
topology: v6e:2x2x1
jax: 0.10.0
libtpu: 0.0.40
codegen_flags: <defaults>
</compile_context>

<pallas_src>
import functools

import jax
import jax.numpy as jnp
from jax.experimental import pallas as pl
from jax.experimental.pallas import tpu as pltpu

EPS = 1e-5
SLOPE = 0.2
KW = 4          # conv kernel size
PAD = 2         # padw = ceil((kw - 1) / 2)
LANE = 128      # TPU lane width


def _round_up(x, m):
    return ((x + m - 1) // m) * m


def _pick_tile(mpad):
    """Largest lane tile (multiple of 128) that divides the padded M."""
    if mpad <= 512:
        return mpad
    return max(t for t in (512, 384, 256, 128) if mpad % t == 0)


def _mosaic_params(semantics, buffer_bytes):
    """CompilerParams with a tile-derived scoped-VMEM limit (headroom for
    double buffers), capped at 64 MiB so it is valid on every generation."""
    limit = min(64 << 20, max(16 << 20, 2 * int(buffer_bytes) + (2 << 20)))
    return pltpu.CompilerParams(dimension_semantics=semantics,
                                vmem_limit_bytes=limit)


# ------------------------------ Pallas kernels -------------------------------
def _conv_bias_act_kernel(w_ref, b_ref, p_ref, o_ref, *, slope):
    """One M-tile: o = [LeakyReLU](W @ patches + b). bf16 MXU feed, f32 acc."""
    z = jnp.dot(w_ref[...], p_ref[...], preferred_element_type=jnp.float32)
    z = z + b_ref[...]
    if slope is not None:
        z = jnp.where(z > 0.0, z, slope * z)
    o_ref[...] = z.astype(o_ref.dtype)


def _conv_stats_kernel(w_ref, p_ref, z_ref, sum_ref, ssq_ref):
    """BN pass A: z = W @ patches (f32) per M-tile; per-channel sum and
    sum-of-squares accumulated across the ("arbitrary") M grid axis.
    Padded M columns are all-zero patches -> contribute 0 to both sums."""
    m = pl.program_id(0)

    @pl.when(m == 0)
    def _():
        sum_ref[...] = jnp.zeros_like(sum_ref)
        ssq_ref[...] = jnp.zeros_like(ssq_ref)

    z = jnp.dot(w_ref[...], p_ref[...], preferred_element_type=jnp.float32)
    z_ref[...] = z
    sum_ref[...] += jnp.sum(z, axis=1, keepdims=True)
    ssq_ref[...] += jnp.sum(z * z, axis=1, keepdims=True)


def _bn_act_kernel(sum_ref, ssq_ref, g_ref, b_ref, z_ref, o_ref, *,
                   slope, eps, count):
    """BN pass B (parallel over M tiles): normalize + affine + LeakyReLU.
    `count` is the TRUE N*Ho*Wo, not the lane-padded width."""
    inv_n = 1.0 / count
    mean = sum_ref[...] * inv_n
    var = ssq_ref[...] * inv_n - mean * mean           # biased var (training BN)
    scale = g_ref[...] * jax.lax.rsqrt(var + eps)
    shift = b_ref[...] - mean * scale
    y = z_ref[...] * scale + shift
    y = jnp.where(y > 0.0, y, slope * y)
    o_ref[...] = y.astype(o_ref.dtype)


# --------------------------------- wrappers ----------------------------------
def _im2col(xc, stride):
    """Channel-major (C, N, H, W) -> lane-padded bf16 patch slab (C*16, Mpad).

    XLA glue: zero pad + strided patch extraction. Row ordering is
    c*16 + kh*4 + kw, matching w.reshape(Cout, Cin*16).
    # TODO(synk): fold this into the kernel (shifted in-VMEM matmuls) to kill
    # the 16x HBM blowup at production sizes.
    """
    C, N, H, W = xc.shape
    Ho = (H + 2 * PAD - KW) // stride + 1
    Wo = (W + 2 * PAD - KW) // stride + 1
    M = N * Ho * Wo
    xp = jnp.pad(xc, ((0, 0), (0, 0), (PAD, PAD), (PAD, PAD)))
    cols = []
    for kh in range(KW):
        for kw in range(KW):
            cols.append(xp[:, :, kh:kh + stride * (Ho - 1) + 1:stride,
                               kw:kw + stride * (Wo - 1) + 1:stride])
    patches = jnp.stack(cols, axis=1).reshape(C * KW * KW, M)
    mpad = _round_up(M, LANE)
    tile = _pick_tile(mpad)
    patches = jnp.pad(patches, ((0, 0), (0, mpad - M))).astype(jnp.bfloat16)
    return patches, Ho, Wo, M, mpad, tile


def _conv_bias_layer(xc, w, b, stride, *, act, out_dtype):
    """Conv2d(k=4, stride, pad=2, bias=True) [+ LeakyReLU], channel-major io."""
    Cout, Cin = w.shape[0], w.shape[1]
    N = xc.shape[1]
    patches, Ho, Wo, M, mpad, tile = _im2col(xc, stride)
    K = Cin * KW * KW
    w2d = w.reshape(Cout, K).astype(jnp.bfloat16)
    b2d = b.reshape(Cout, 1).astype(jnp.float32)
    grid = (mpad // tile,)

    buf = 2 * (K * tile * 2 + Cout * tile * 4) + Cout * K * 2 + Cout * 4
    cost = pl.CostEstimate(
        flops=2 * Cout * K * mpad, transcendentals=0,
        bytes_accessed=int(patches.size * 2 + w2d.size * 2 + Cout * mpad * 4))

    y = pl.pallas_call(
        functools.partial(_conv_bias_act_kernel, slope=SLOPE if act else None),
        out_shape=jax.ShapeDtypeStruct((Cout, mpad), out_dtype),
        grid_spec=pltpu.PrefetchScalarGridSpec(
            num_scalar_prefetch=0,
            grid=grid,
            in_specs=[
                pl.BlockSpec((Cout, K), lambda m: (0, 0)),      # weights, resident
                pl.BlockSpec((Cout, 1), lambda m: (0, 0)),      # bias
                pl.BlockSpec((K, tile), lambda m: (0, m)),      # patch tile
            ],
            out_specs=pl.BlockSpec((Cout, tile), lambda m: (0, m)),
        ),
        compiler_params=_mosaic_params(("parallel",), buf),
        cost_estimate=cost,
    )(w2d, b2d, patches)

    return y[:, :M].reshape(Cout, N, Ho, Wo)


def _conv_bn_layer(xc, w, gamma, beta, stride):
    """Conv2d(k=4, stride, pad=2, no bias) + BatchNorm(batch stats) + LeakyReLU."""
    Cout, Cin = w.shape[0], w.shape[1]
    N = xc.shape[1]
    patches, Ho, Wo, M, mpad, tile = _im2col(xc, stride)
    K = Cin * KW * KW
    w2d = w.reshape(Cout, K).astype(jnp.bfloat16)
    grid = (mpad // tile,)

    # -- pass A: tiled matmul + per-channel sum / sumsq (reduction over M) ----
    buf_a = 2 * (K * tile * 2 + Cout * tile * 4) + Cout * K * 2 + 2 * Cout * 4
    cost_a = pl.CostEstimate(
        flops=2 * Cout * K * mpad + 3 * Cout * mpad, transcendentals=0,
        bytes_accessed=int(patches.size * 2 + w2d.size * 2 + Cout * mpad * 4))
    z, s1, s2 = pl.pallas_call(
        _conv_stats_kernel,
        out_shape=(
            jax.ShapeDtypeStruct((Cout, mpad), jnp.float32),   # f32 accumulator z
            jax.ShapeDtypeStruct((Cout, 1), jnp.float32),      # sum
            jax.ShapeDtypeStruct((Cout, 1), jnp.float32),      # sum of squares
        ),
        grid_spec=pltpu.PrefetchScalarGridSpec(
            num_scalar_prefetch=0,
            grid=grid,
            in_specs=[
                pl.BlockSpec((Cout, K), lambda m: (0, 0)),
                pl.BlockSpec((K, tile), lambda m: (0, m)),
            ],
            out_specs=[
                pl.BlockSpec((Cout, tile), lambda m: (0, m)),
                pl.BlockSpec((Cout, 1), lambda m: (0, 0)),      # accumulator out
                pl.BlockSpec((Cout, 1), lambda m: (0, 0)),      # accumulator out
            ],
        ),
        compiler_params=_mosaic_params(("arbitrary",), buf_a),
        cost_estimate=cost_a,
    )(w2d, patches)

    # -- pass B: normalize + affine + LeakyReLU (parallel over M tiles) -------
    buf_b = 2 * (Cout * tile * 4 + Cout * tile * 2) + 4 * Cout * 4
    cost_b = pl.CostEstimate(
        flops=4 * Cout * mpad, transcendentals=int(Cout),
        bytes_accessed=int(Cout * mpad * 4 + Cout * mpad * 2))
    y = pl.pallas_call(
        functools.partial(_bn_act_kernel, slope=SLOPE, eps=EPS, count=float(M)),
        out_shape=jax.ShapeDtypeStruct((Cout, mpad), jnp.bfloat16),
        grid_spec=pltpu.PrefetchScalarGridSpec(
            num_scalar_prefetch=0,
            grid=grid,
            in_specs=[
                pl.BlockSpec((Cout, 1), lambda m: (0, 0)),      # sum
                pl.BlockSpec((Cout, 1), lambda m: (0, 0)),      # sumsq
                pl.BlockSpec((Cout, 1), lambda m: (0, 0)),      # gamma
                pl.BlockSpec((Cout, 1), lambda m: (0, 0)),      # beta
                pl.BlockSpec((Cout, tile), lambda m: (0, m)),   # z tile
            ],
            out_specs=pl.BlockSpec((Cout, tile), lambda m: (0, m)),
        ),
        compiler_params=_mosaic_params(("parallel",), buf_b),
        cost_estimate=cost_b,
    )(s1, s2, gamma.reshape(Cout, 1).astype(jnp.float32),
      beta.reshape(Cout, 1).astype(jnp.float32), z)

    return y[:, :M].reshape(Cout, N, Ho, Wo)


def nlayer_discriminator_forward(x, p):
    """NLayerDiscriminator(input_nc=3, n_layers=3, BatchNorm2d, no sigmoid)."""
    # Channel-major layout for the whole stack: one transpose in, one out.
    h = jnp.transpose(x, (1, 0, 2, 3)).astype(jnp.bfloat16)
    h = _conv_bias_layer(h, p["w1"], p["b1"], 2, act=True, out_dtype=jnp.bfloat16)
    h = _conv_bn_layer(h, p["w2"], p["g2"], p["be2"], 2)
    h = _conv_bn_layer(h, p["w3"], p["g3"], p["be3"], 2)
    h = _conv_bn_layer(h, p["w4"], p["g4"], p["be4"], 1)
    # Final 1-channel conv: pad Cout 1 -> 8 (full sublanes), slice back after.
    w5 = jnp.pad(p["w5"], ((0, 8 - p["w5"].shape[0]), (0, 0), (0, 0), (0, 0)))
    b5 = jnp.pad(p["b5"], ((0, 8 - p["b5"].shape[0]),))
    h = _conv_bias_layer(h, w5, b5, 1, act=False, out_dtype=jnp.float32)
    return jnp.transpose(h[:1], (1, 0, 2, 3))               # back to NCHW once


# -------------------- pure-JAX reference (for verification) ------------------
def _ref_conv(x, w, b, stride):
    y = jax.lax.conv_general_dilated(
        x, w, window_strides=(stride, stride), padding=[(PAD, PAD), (PAD, PAD)],
        dimension_numbers=("NCHW", "OIHW", "NCHW"),
        precision=jax.lax.Precision.HIGHEST)
    if b is not None:
        y = y + b[None, :, None, None]
    return y


def _ref_bn(x, g, b):
    mean = jnp.mean(x, axis=(0, 2, 3), keepdims=True)
    var = jnp.mean(jnp.square(x - mean), axis=(0, 2, 3), keepdims=True)
    xn = (x - mean) * jax.lax.rsqrt(var + EPS)
    return xn * g[None, :, None, None] + b[None, :, None, None]


def _lrelu(x):
    return jnp.where(x > 0, x, SLOPE * x)


def reference_forward(x, p):
    h = _lrelu(_ref_conv(x, p["w1"], p["b1"], 2))
    h = _lrelu(_ref_bn(_ref_conv(h, p["w2"], None, 2), p["g2"], p["be2"]))
    h = _lrelu(_ref_bn(_ref_conv(h, p["w3"], None, 2), p["g3"], p["be3"]))
    h = _lrelu(_ref_bn(_ref_conv(h, p["w4"], None, 1), p["g4"], p["be4"]))
    return _ref_conv(h, p["w5"], p["b5"], 1)


if __name__ == "__main__":
    N, IN_NC, H, W = 2, 3, 32, 32
    NDF = 8  # ndf reduced from 64 to keep the example small
    key = jax.random.PRNGKey(0)
    ks = jax.random.split(key, 16)

    def uinit(k, shape, fan_in):
        s = 1.0 / jnp.sqrt(jnp.float32(fan_in))
        return jax.random.uniform(k, shape, jnp.float32, -s, s)

    c1, c2, c3, c4 = NDF, 2 * NDF, 4 * NDF, 8 * NDF
    p = {
        "w1": uinit(ks[0], (c1, IN_NC, 4, 4), IN_NC * 16),
        "b1": uinit(ks[1], (c1,), IN_NC * 16),
        "w2": uinit(ks[2], (c2, c1, 4, 4), c1 * 16),
        "g2": 1.0 + 0.1 * jax.random.normal(ks[3], (c2,), jnp.float32),
        "be2": 0.1 * jax.random.normal(ks[4], (c2,), jnp.float32),
        "w3": uinit(ks[5], (c3, c2, 4, 4), c2 * 16),
        "g3": 1.0 + 0.1 * jax.random.normal(ks[6], (c3,), jnp.float32),
        "be3": 0.1 * jax.random.normal(ks[7], (c3,), jnp.float32),
        "w4": uinit(ks[8], (c4, c3, 4, 4), c3 * 16),
        "g4": 1.0 + 0.1 * jax.random.normal(ks[9], (c4,), jnp.float32),
        "be4": 0.1 * jax.random.normal(ks[10], (c4,), jnp.float32),
        "w5": uinit(ks[11], (1, c4, 4, 4), c4 * 16),
        "b5": uinit(ks[12], (1,), c4 * 16),
    }
    x = jax.random.normal(ks[13], (N, IN_NC, H, W), jnp.float32)

    out = jax.block_until_ready(jax.jit(nlayer_discriminator_forward)(x, p))
    ref = jax.block_until_ready(reference_forward(x, p))

    assert out.shape == ref.shape == (N, 1, 7, 7), out.shape
    assert bool(jnp.all(jnp.isfinite(out)))
    # bf16 MXU feeds -> compare with a relative (Frobenius) tolerance.
    rel = float(jnp.linalg.norm(out - ref) / (jnp.linalg.norm(ref) + 1e-12))
    assert rel < 5e-2, f"relative mismatch vs reference: {rel}"
    print("KERNEL_OK")
</pallas_src>

<mosaic_0001>
module attributes {stable_mosaic.version = 11 : i64} {
  func.func @_conv_bias_act_kernel(%arg0: i32, %arg1: memref<8x48xbf16, #tpu.memory_space<vmem>>, %arg2: memref<8x1xf32, #tpu.memory_space<vmem>>, %arg3: memref<48x128xbf16, #tpu.memory_space<vmem>>, %arg4: memref<8x128xbf16, #tpu.memory_space<vmem>>) attributes {dimension_semantics = [#tpu.dimension_semantics<parallel>], iteration_bounds = array<i64: 5>, scalar_prefetch = 0 : i64, scratch_operands = 0 : i64, tpu.core_type = #tpu.core_type<tc>, window_params = [{pipeline_mode = #tpu.pipeline_mode<synchronous>, transform_indices = @transform_0, window_bounds = array<i64: 8, 48>}, {pipeline_mode = #tpu.pipeline_mode<synchronous>, transform_indices = @transform_1, window_bounds = array<i64: 8, 1>}, {transform_indices = @transform_2, window_bounds = array<i64: 48, 128>}, {transform_indices = @transform_3, window_bounds = array<i64: 8, 128>}]} {
    %c0 = arith.constant 0 : index
    %c0_0 = arith.constant 0 : index
    %0 = vector.load %arg1[%c0, %c0_0] : memref<8x48xbf16, #tpu.memory_space<vmem>>, vector<8x48xbf16>
    %c0_1 = arith.constant 0 : index
    %c0_2 = arith.constant 0 : index
    %1 = vector.load %arg3[%c0_1, %c0_2] : memref<48x128xbf16, #tpu.memory_space<vmem>>, vector<48x128xbf16>
    %cst = arith.constant dense<0.000000e+00> : vector<8x128xf32>
    %2 = tpu.matmul %0, %1, %cst {dimension_numbers = #tpu.dot_dimension_numbers<[1], [0], [0], [1], [0, 0, 1, 1], [], []>} : vector<8x48xbf16>, vector<48x128xbf16>, vector<8x128xf32> -> vector<8x128xf32>
    %c0_3 = arith.constant 0 : index
    %c0_4 = arith.constant 0 : index
    %3 = vector.load %arg2[%c0_3, %c0_4] : memref<8x1xf32, #tpu.memory_space<vmem>>, vector<8x1xf32>
    %4 = vector.broadcast %3 : vector<8x1xf32> to vector<8x128xf32>
    %5 = arith.addf %2, %4 : vector<8x128xf32>
    %cst_5 = arith.constant 0.000000e+00 : f32
    %6 = vector.broadcast %cst_5 : f32 to vector<8x128xf32>
    %7 = arith.cmpf ogt, %5, %6 : vector<8x128xf32>
    %cst_6 = arith.constant 2.000000e-01 : f32
    %8 = vector.broadcast %cst_6 : f32 to vector<8x128xf32>
    %9 = arith.mulf %8, %5 : vector<8x128xf32>
    %10 = arith.select %7, %5, %9 : vector<8x128xi1>, vector<8x128xf32>
    %11 = arith.truncf %10 : vector<8x128xf32> to vector<8x128xbf16>
    %c0_7 = arith.constant 0 : index
    %c0_8 = arith.constant 0 : index
    %12 = vector.load %arg4[%c0_7, %c0_8] : memref<8x128xbf16, #tpu.memory_space<vmem>>, vector<8x128xbf16>
    tpu.vector_store %arg4[%c0_7, %c0_8], %11 {strides = array<i32>} : memref<8x128xbf16, #tpu.memory_space<vmem>>, vector<8x128xbf16>,
    return
  }
  func.func @transform_0(%arg0: i32) -> (i32, i32) {
    %c0_i32 = arith.constant 0 : i32
    %c0_i32_0 = arith.constant 0 : i32
    %c0_i32_1 = arith.constant 0 : i32
    return %c0_i32, %c0_i32_0 : i32, i32
  }
  func.func @transform_1(%arg0: i32) -> (i32, i32) {
    %c0_i32 = arith.constant 0 : i32
    %c0_i32_0 = arith.constant 0 : i32
    %c0_i32_1 = arith.constant 0 : i32
    return %c0_i32, %c0_i32_0 : i32, i32
  }
  func.func @transform_2(%arg0: i32) -> (i32, i32) {
    %c0_i32 = arith.constant 0 : i32
    %c0_i32_0 = arith.constant 0 : i32
    return %c0_i32, %arg0 : i32, i32
  }
  func.func @transform_3(%arg0: i32) -> (i32, i32) {
    %c0_i32 = arith.constant 0 : i32
    %c0_i32_0 = arith.constant 0 : i32
    return %c0_i32, %arg0 : i32, i32
  }
}

module attributes {stable_mosaic.version = 11 : i64} {
  func.func @_conv_stats_kernel(%arg0: i32, %arg1: memref<16x128xbf16, #tpu.memory_space<vmem>>, %arg2: memref<128x256xbf16, #tpu.memory_space<vmem>>, %arg3: memref<16x256xf32, #tpu.memory_space<vmem>>, %arg4: memref<16x1xf32, #tpu.memory_space<vmem>>, %arg5: memref<16x1xf32, #tpu.memory_space<vmem>>) attributes {dimension_semantics = [#tpu.dimension_semantics<arbitrary>], iteration_bounds = array<i64: 1>, scalar_prefetch = 0 : i64, scratch_operands = 0 : i64, tpu.core_type = #tpu.core_type<tc>, window_params = [{pipeline_mode = #tpu.pipeline_mode<synchronous>, transform_indices = @transform_0, window_bounds = array<i64: 16, 128>}, {transform_indices = @transform_1, window_bounds = array<i64: 128, 256>}, {transform_indices = @transform_2, window_bounds = array<i64: 16, 256>}, {pipeline_mode = #tpu.pipeline_mode<synchronous>, transform_indices = @transform_3, window_bounds = array<i64: 16, 1>}, {pipeline_mode = #tpu.pipeline_mode<synchronous>, transform_indices = @transform_4, window_bounds = array<i64: 16, 1>}]} {
    %c0_i32 = arith.constant 0 : i32
    %0 = arith.cmpi eq, %arg0, %c0_i32 : i32
    %1 = arith.extui %0 : i1 to i32
    %c0_i32_0 = arith.constant 0 : i32
    %2 = arith.cmpi ne, %1, %c0_i32_0 : i32
    scf.if %2 {
      %cst_16 = arith.constant 0.000000e+00 : f32
      %18 = vector.broadcast %cst_16 : f32 to vector<16x1xf32>
      %c0_17 = arith.constant 0 : index
      %c0_18 = arith.constant 0 : index
      %19 = vector.load %arg4[%c0_17, %c0_18] : memref<16x1xf32, #tpu.memory_space<vmem>>, vector<16x1xf32>
      tpu.vector_store %arg4[%c0_17, %c0_18], %18 {strides = array<i32>} : memref<16x1xf32, #tpu.memory_space<vmem>>, vector<16x1xf32>,
      %cst_19 = arith.constant 0.000000e+00 : f32
      %20 = vector.broadcast %cst_19 : f32 to vector<16x1xf32>
      %c0_20 = arith.constant 0 : index
      %c0_21 = arith.constant 0 : index
      %21 = vector.load %arg5[%c0_20, %c0_21] : memref<16x1xf32, #tpu.memory_space<vmem>>, vector<16x1xf32>
      tpu.vector_store %arg5[%c0_20, %c0_21], %20 {strides = array<i32>} : memref<16x1xf32, #tpu.memory_space<vmem>>, vector<16x1xf32>,
    } else {
    }
    %c0 = arith.constant 0 : index
    %c0_1 = arith.constant 0 : index
    %3 = vector.load %arg1[%c0, %c0_1] : memref<16x128xbf16, #tpu.memory_space<vmem>>, vector<16x128xbf16>
    %c0_2 = arith.constant 0 : index
    %c0_3 = arith.constant 0 : index
    %4 = vector.load %arg2[%c0_2, %c0_3] : memref<128x256xbf16, #tpu.memory_space<vmem>>, vector<128x256xbf16>
    %cst = arith.constant dense<0.000000e+00> : vector<16x256xf32>
    %5 = tpu.matmul %3, %4, %cst {dimension_numbers = #tpu.dot_dimension_numbers<[1], [0], [0], [1], [0, 0, 1, 1], [], []>} : vector<16x128xbf16>, vector<128x256xbf16>, vector<16x256xf32> -> vector<16x256xf32>
    %c0_4 = arith.constant 0 : index
    %c0_5 = arith.constant 0 : index
    %6 = vector.load %arg3[%c0_4, %c0_5] : memref<16x256xf32, #tpu.memory_space<vmem>>, vector<16x256xf32>
    tpu.vector_store %arg3[%c0_4, %c0_5], %5 {strides = array<i32>} : memref<16x256xf32, #tpu.memory_space<vmem>>, vector<16x256xf32>,
    %c0_6 = arith.constant 0 : index
    %c0_7 = arith.constant 0 : index
    %7 = vector.load %arg4[%c0_6, %c0_7] : memref<16x1xf32, #tpu.memory_space<vmem>>, vector<16x1xf32>
    %cst_8 = arith.constant dense<0.000000e+00> : vector<16xf32>
    %8 = vector.multi_reduction <add>, %5, %cst_8 [1] : vector<16x256xf32> to vector<16xf32>
    %9 = vector.shape_cast %8 : vector<16xf32> to vector<16x1xf32>
    %10 = arith.addf %7, %9 : vector<16x1xf32>
    %c0_9 = arith.constant 0 : index
    %c0_10 = arith.constant 0 : index
    %11 = vector.load %arg4[%c0_9, %c0_10] : memref<16x1xf32, #tpu.memory_space<vmem>>, vector<16x1xf32>
    tpu.vector_store %arg4[%c0_9, %c0_10], %10 {strides = array<i32>} : memref<16x1xf32, #tpu.memory_space<vmem>>, vector<16x1xf32>,
    %c0_11 = arith.constant 0 : index
    %c0_12 = arith.constant 0 : index
    %12 = vector.load %arg5[%c0_11, %c0_12] : memref<16x1xf32, #tpu.memory_space<vmem>>, vector<16x1xf32>
    %13 = arith.mulf %5, %5 : vector<16x256xf32>
    %cst_13 = arith.constant dense<0.000000e+00> : vector<16xf32>
    %14 = vector.multi_reduction <add>, %13, %cst_13 [1] : vector<16x256xf32> to vector<16xf32>
    %15 = vector.shape_cast %14 : vector<16xf32> to vector<16x1xf32>
    %16 = arith.addf %12, %15 : vector<16x1xf32>
    %c0_14 = arith.constant 0 : index
    %c0_15 = arith.constant 0 : index
    %17 = vector.load %arg5[%c0_14, %c0_15] : memref<16x1xf32, #tpu.memory_space<vmem>>, vector<16x1xf32>
    tpu.vector_store %arg5[%c0_14, %c0_15], %16 {strides = array<i32>} : memref<16x1xf32, #tpu.memory_space<vmem>>, vector<16x1xf32>,
    return
  }
  func.func @transform_0(%arg0: i32) -> (i32, i32) {
    %c0_i32 = arith.constant 0 : i32
    %c0_i32_0 = arith.constant 0 : i32
    %c0_i32_1 = arith.constant 0 : i32
    return %c0_i32, %c0_i32_0 : i32, i32
  }
  func.func @transform_1(%arg0: i32) -> (i32, i32) {
    %c0_i32 = arith.constant 0 : i32
    %c0_i32_0 = arith.constant 0 : i32
    return %c0_i32, %arg0 : i32, i32
  }
  func.func @transform_2(%arg0: i32) -> (i32, i32) {
    %c0_i32 = arith.constant 0 : i32
    %c0_i32_0 = arith.constant 0 : i32
    return %c0_i32, %arg0 : i32, i32
  }
  func.func @transform_3(%arg0: i32) -> (i32, i32) {
    %c0_i32 = arith.constant 0 : i32
    %c0_i32_0 = arith.constant 0 : i32
    %c0_i32_1 = arith.constant 0 : i32
    return %c0_i32, %c0_i32_0 : i32, i32
  }
  func.func @transform_4(%arg0: i32) -> (i32, i32) {
    %c0_i32 = arith.constant 0 : i32
    %c0_i32_0 = arith.constant 0 : i32
    %c0_i32_1 = arith.constant 0 : i32
    return %c0_i32, %c0_i32_0 : i32, i32
  }
}

module attributes {stable_mosaic.version = 11 : i64} {
  func.func @_bn_act_kernel(%arg0: i32, %arg1: memref<16x1xf32, #tpu.memory_space<vmem>>, %arg2: memref<16x1xf32, #tpu.memory_space<vmem>>, %arg3: memref<16x1xf32, #tpu.memory_space<vmem>>, %arg4: memref<16x1xf32, #tpu.memory_space<vmem>>, %arg5: memref<16x256xf32, #tpu.memory_space<vmem>>, %arg6: memref<16x256xbf16, #tpu.memory_space<vmem>>) attributes {dimension_semantics = [#tpu.dimension_semantics<parallel>], iteration_bounds = array<i64: 1>, scalar_prefetch = 0 : i64, scratch_operands = 0 : i64, tpu.core_type = #tpu.core_type<tc>, window_params = [{pipeline_mode = #tpu.pipeline_mode<synchronous>, transform_indices = @transform_0, window_bounds = array<i64: 16, 1>}, {pipeline_mode = #tpu.pipeline_mode<synchronous>, transform_indices = @transform_1, window_bounds = array<i64: 16, 1>}, {pipeline_mode = #tpu.pipeline_mode<synchronous>, transform_indices = @transform_2, window_bounds = array<i64: 16, 1>}, {pipeline_mode = #tpu.pipeline_mode<synchronous>, transform_indices = @transform_3, window_bounds = array<i64: 16, 1>}, {transform_indices = @transform_4, window_bounds = array<i64: 16, 256>}, {transform_indices = @transform_5, window_bounds = array<i64: 16, 256>}]} {
    %c0 = arith.constant 0 : index
    %c0_0 = arith.constant 0 : index
    %0 = vector.load %arg1[%c0, %c0_0] : memref<16x1xf32, #tpu.memory_space<vmem>>, vector<16x1xf32>
    %cst = arith.constant 0.00617283955 : f32
    %1 = vector.broadcast %cst : f32 to vector<16x1xf32>
    %2 = arith.mulf %0, %1 : vector<16x1xf32>
    %c0_1 = arith.constant 0 : index
    %c0_2 = arith.constant 0 : index
    %3 = vector.load %arg2[%c0_1, %c0_2] : memref<16x1xf32, #tpu.memory_space<vmem>>, vector<16x1xf32>
    %cst_3 = arith.constant 0.00617283955 : f32
    %4 = vector.broadcast %cst_3 : f32 to vector<16x1xf32>
    %5 = arith.mulf %3, %4 : vector<16x1xf32>
    %6 = arith.mulf %2, %2 : vector<16x1xf32>
    %7 = arith.subf %5, %6 : vector<16x1xf32>
    %c0_4 = arith.constant 0 : index
    %c0_5 = arith.constant 0 : index
    %8 = vector.load %arg3[%c0_4, %c0_5] : memref<16x1xf32, #tpu.memory_space<vmem>>, vector<16x1xf32>
    %cst_6 = arith.constant 9.99999974E-6 : f32
    %9 = vector.broadcast %cst_6 : f32 to vector<16x1xf32>
    %10 = arith.addf %7, %9 : vector<16x1xf32>
    %11 = math.rsqrt %10 : vector<16x1xf32>
    %12 = arith.mulf %8, %11 : vector<16x1xf32>
    %c0_7 = arith.constant 0 : index
    %c0_8 = arith.constant 0 : index
    %13 = vector.load %arg4[%c0_7, %c0_8] : memref<16x1xf32, #tpu.memory_space<vmem>>, vector<16x1xf32>
    %14 = arith.mulf %2, %12 : vector<16x1xf32>
    %15 = arith.subf %13, %14 : vector<16x1xf32>
    %c0_9 = arith.constant 0 : index
    %c0_10 = arith.constant 0 : index
    %16 = vector.load %arg5[%c0_9, %c0_10] : memref<16x256xf32, #tpu.memory_space<vmem>>, vector<16x256xf32>
    %17 = vector.broadcast %12 : vector<16x1xf32> to vector<16x256xf32>
    %18 = arith.mulf %16, %17 : vector<16x256xf32>
    %19 = vector.broadcast %15 : vector<16x1xf32> to vector<16x256xf32>
    %20 = arith.addf %18, %19 : vector<16x256xf32>
    %cst_11 = arith.constant 0.000000e+00 : f32
    %21 = vector.broadcast %cst_11 : f32 to vector<16x256xf32>
    %22 = arith.cmpf ogt, %20, %21 : vector<16x256xf32>
    %cst_12 = arith.constant 2.000000e-01 : f32
    %23 = vector.broadcast %cst_12 : f32 to vector<16x256xf32>
    %24 = arith.mulf %23, %20 : vector<16x256xf32>
    %25 = arith.select %22, %20, %24 : vector<16x256xi1>, vector<16x256xf32>
    %26 = arith.truncf %25 : vector<16x256xf32> to vector<16x256xbf16>
    %c0_13 = arith.constant 0 : index
    %c0_14 = arith.constant 0 : index
    %27 = vector.load %arg6[%c0_13, %c0_14] : memref<16x256xbf16, #tpu.memory_space<vmem>>, vector<16x256xbf16>
    tpu.vector_store %arg6[%c0_13, %c0_14], %26 {strides = array<i32>} : memref<16x256xbf16, #tpu.memory_space<vmem>>, vector<16x256xbf16>,
    return
  }
  func.func @transform_0(%arg0: i32) -> (i32, i32) {
    %c0_i32 = arith.constant 0 : i32
    %c0_i32_0 = arith.constant 0 : i32
    %c0_i32_1 = arith.constant 0 : i32
    return %c0_i32, %c0_i32_0 : i32, i32
  }
  func.func @transform_1(%arg0: i32) -> (i32, i32) {
    %c0_i32 = arith.constant 0 : i32
    %c0_i32_0 = arith.constant 0 : i32
    %c0_i32_1 = arith.constant 0 : i32
    return %c0_i32, %c0_i32_0 : i32, i32
  }
  func.func @transform_2(%arg0: i32) -> (i32, i32) {
    %c0_i32 = arith.constant 0 : i32
    %c0_i32_0 = arith.constant 0 : i32
    %c0_i32_1 = arith.constant 0 : i32
    return %c0_i32, %c0_i32_0 : i32, i32
  }
  func.func @transform_3(%arg0: i32) -> (i32, i32) {
    %c0_i32 = arith.constant 0 : i32
    %c0_i32_0 = arith.constant 0 : i32
    %c0_i32_1 = arith.constant 0 : i32
    return %c0_i32, %c0_i32_0 : i32, i32
  }
  func.func @transform_4(%arg0: i32) -> (i32, i32) {
    %c0_i32 = arith.constant 0 : i32
    %c0_i32_0 = arith.constant 0 : i32
    return %c0_i32, %arg0 : i32, i32
  }
  func.func @transform_5(%arg0: i32) -> (i32, i32) {
    %c0_i32 = arith.constant 0 : i32
    %c0_i32_0 = arith.constant 0 : i32
    return %c0_i32, %arg0 : i32, i32
  }
}

module attributes {stable_mosaic.version = 11 : i64} {
  func.func @_conv_stats_kernel(%arg0: i32, %arg1: memref<32x256xbf16, #tpu.memory_space<vmem>>, %arg2: memref<256x128xbf16, #tpu.memory_space<vmem>>, %arg3: memref<32x128xf32, #tpu.memory_space<vmem>>, %arg4: memref<32x1xf32, #tpu.memory_space<vmem>>, %arg5: memref<32x1xf32, #tpu.memory_space<vmem>>) attributes {dimension_semantics = [#tpu.dimension_semantics<arbitrary>], iteration_bounds = array<i64: 1>, scalar_prefetch = 0 : i64, scratch_operands = 0 : i64, tpu.core_type = #tpu.core_type<tc>, window_params = [{pipeline_mode = #tpu.pipeline_mode<synchronous>, transform_indices = @transform_0, window_bounds = array<i64: 32, 256>}, {transform_indices = @transform_1, window_bounds = array<i64: 256, 128>}, {transform_indices = @transform_2, window_bounds = array<i64: 32, 128>}, {pipeline_mode = #tpu.pipeline_mode<synchronous>, transform_indices = @transform_3, window_bounds = array<i64: 32, 1>}, {pipeline_mode = #tpu.pipeline_mode<synchronous>, transform_indices = @transform_4, window_bounds = array<i64: 32, 1>}]} {
    %c0_i32 = arith.constant 0 : i32
    %0 = arith.cmpi eq, %arg0, %c0_i32 : i32
    %1 = arith.extui %0 : i1 to i32
    %c0_i32_0 = arith.constant 0 : i32
    %2 = arith.cmpi ne, %1, %c0_i32_0 : i32
    scf.if %2 {
      %cst_16 = arith.constant 0.000000e+00 : f32
      %18 = vector.broadcast %cst_16 : f32 to vector<32x1xf32>
      %c0_17 = arith.constant 0 : index
      %c0_18 = arith.constant 0 : index
      %19 = vector.load %arg4[%c0_17, %c0_18] : memref<32x1xf32, #tpu.memory_space<vmem>>, vector<32x1xf32>
      tpu.vector_store %arg4[%c0_17, %c0_18], %18 {strides = array<i32>} : memref<32x1xf32, #tpu.memory_space<vmem>>, vector<32x1xf32>,
      %cst_19 = arith.constant 0.000000e+00 : f32
      %20 = vector.broadcast %cst_19 : f32 to vector<32x1xf32>
      %c0_20 = arith.constant 0 : index
      %c0_21 = arith.constant 0 : index
      %21 = vector.load %arg5[%c0_20, %c0_21] : memref<32x1xf32, #tpu.memory_space<vmem>>, vector<32x1xf32>
      tpu.vector_store %arg5[%c0_20, %c0_21], %20 {strides = array<i32>} : memref<32x1xf32, #tpu.memory_space<vmem>>, vector<32x1xf32>,
    } else {
    }
    %c0 = arith.constant 0 : index
    %c0_1 = arith.constant 0 : index
    %3 = vector.load %arg1[%c0, %c0_1] : memref<32x256xbf16, #tpu.memory_space<vmem>>, vector<32x256xbf16>
    %c0_2 = arith.constant 0 : index
    %c0_3 = arith.constant 0 : index
    %4 = vector.load %arg2[%c0_2, %c0_3] : memref<256x128xbf16, #tpu.memory_space<vmem>>, vector<256x128xbf16>
    %cst = arith.constant dense<0.000000e+00> : vector<32x128xf32>
    %5 = tpu.matmul %3, %4, %cst {dimension_numbers = #tpu.dot_dimension_numbers<[1], [0], [0], [1], [0, 0, 1, 1], [], []>} : vector<32x256xbf16>, vector<256x128xbf16>, vector<32x128xf32> -> vector<32x128xf32>
    %c0_4 = arith.constant 0 : index
    %c0_5 = arith.constant 0 : index
    %6 = vector.load %arg3[%c0_4, %c0_5] : memref<32x128xf32, #tpu.memory_space<vmem>>, vector<32x128xf32>
    tpu.vector_store %arg3[%c0_4, %c0_5], %5 {strides = array<i32>} : memref<32x128xf32, #tpu.memory_space<vmem>>, vector<32x128xf32>,
    %c0_6 = arith.constant 0 : index
    %c0_7 = arith.constant 0 : index
    %7 = vector.load %arg4[%c0_6, %c0_7] : memref<32x1xf32, #tpu.memory_space<vmem>>, vector<32x1xf32>
    %cst_8 = arith.constant dense<0.000000e+00> : vector<32xf32>
    %8 = vector.multi_reduction <add>, %5, %cst_8 [1] : vector<32x128xf32> to vector<32xf32>
    %9 = vector.shape_cast %8 : vector<32xf32> to vector<32x1xf32>
    %10 = arith.addf %7, %9 : vector<32x1xf32>
    %c0_9 = arith.constant 0 : index
    %c0_10 = arith.constant 0 : index
    %11 = vector.load %arg4[%c0_9, %c0_10] : memref<32x1xf32, #tpu.memory_space<vmem>>, vector<32x1xf32>
    tpu.vector_store %arg4[%c0_9, %c0_10], %10 {strides = array<i32>} : memref<32x1xf32, #tpu.memory_space<vmem>>, vector<32x1xf32>,
    %c0_11 = arith.constant 0 : index
    %c0_12 = arith.constant 0 : index
    %12 = vector.load %arg5[%c0_11, %c0_12] : memref<32x1xf32, #tpu.memory_space<vmem>>, vector<32x1xf32>
    %13 = arith.mulf %5, %5 : vector<32x128xf32>
    %cst_13 = arith.constant dense<0.000000e+00> : vector<32xf32>
    %14 = vector.multi_reduction <add>, %13, %cst_13 [1] : vector<32x128xf32> to vector<32xf32>
    %15 = vector.shape_cast %14 : vector<32xf32> to vector<32x1xf32>
    %16 = arith.addf %12, %15 : vector<32x1xf32>
    %c0_14 = arith.constant 0 : index
    %c0_15 = arith.constant 0 : index
    %17 = vector.load %arg5[%c0_14, %c0_15] : memref<32x1xf32, #tpu.memory_space<vmem>>, vector<32x1xf32>
    tpu.vector_store %arg5[%c0_14, %c0_15], %16 {strides = array<i32>} : memref<32x1xf32, #tpu.memory_space<vmem>>, vector<32x1xf32>,
    return
  }
  func.func @transform_0(%arg0: i32) -> (i32, i32) {
    %c0_i32 = arith.constant 0 : i32
    %c0_i32_0 = arith.constant 0 : i32
    %c0_i32_1 = arith.constant 0 : i32
    return %c0_i32, %c0_i32_0 : i32, i32
  }
  func.func @transform_1(%arg0: i32) -> (i32, i32) {
    %c0_i32 = arith.constant 0 : i32
    %c0_i32_0 = arith.constant 0 : i32
    return %c0_i32, %arg0 : i32, i32
  }
  func.func @transform_2(%arg0: i32) -> (i32, i32) {
    %c0_i32 = arith.constant 0 : i32
    %c0_i32_0 = arith.constant 0 : i32
    return %c0_i32, %arg0 : i32, i32
  }
  func.func @transform_3(%arg0: i32) -> (i32, i32) {
    %c0_i32 = arith.constant 0 : i32
    %c0_i32_0 = arith.constant 0 : i32
    %c0_i32_1 = arith.constant 0 : i32
    return %c0_i32, %c0_i32_0 : i32, i32
  }
  func.func @transform_4(%arg0: i32) -> (i32, i32) {
    %c0_i32 = arith.constant 0 : i32
    %c0_i32_0 = arith.constant 0 : i32
    %c0_i32_1 = arith.constant 0 : i32
    return %c0_i32, %c0_i32_0 : i32, i32
  }
}

module attributes {stable_mosaic.version = 11 : i64} {
  func.func @_bn_act_kernel(%arg0: i32, %arg1: memref<32x1xf32, #tpu.memory_space<vmem>>, %arg2: memref<32x1xf32, #tpu.memory_space<vmem>>, %arg3: memref<32x1xf32, #tpu.memory_space<vmem>>, %arg4: memref<32x1xf32, #tpu.memory_space<vmem>>, %arg5: memref<32x128xf32, #tpu.memory_space<vmem>>, %arg6: memref<32x128xbf16, #tpu.memory_space<vmem>>) attributes {dimension_semantics = [#tpu.dimension_semantics<parallel>], iteration_bounds = array<i64: 1>, scalar_prefetch = 0 : i64, scratch_operands = 0 : i64, tpu.core_type = #tpu.core_type<tc>, window_params = [{pipeline_mode = #tpu.pipeline_mode<synchronous>, transform_indices = @transform_0, window_bounds = array<i64: 32, 1>}, {pipeline_mode = #tpu.pipeline_mode<synchronous>, transform_indices = @transform_1, window_bounds = array<i64: 32, 1>}, {pipeline_mode = #tpu.pipeline_mode<synchronous>, transform_indices = @transform_2, window_bounds = array<i64: 32, 1>}, {pipeline_mode = #tpu.pipeline_mode<synchronous>, transform_indices = @transform_3, window_bounds = array<i64: 32, 1>}, {transform_indices = @transform_4, window_bounds = array<i64: 32, 128>}, {transform_indices = @transform_5, window_bounds = array<i64: 32, 128>}]} {
    %c0 = arith.constant 0 : index
    %c0_0 = arith.constant 0 : index
    %0 = vector.load %arg1[%c0, %c0_0] : memref<32x1xf32, #tpu.memory_space<vmem>>, vector<32x1xf32>
    %cst = arith.constant 2.000000e-02 : f32
    %1 = vector.broadcast %cst : f32 to vector<32x1xf32>
    %2 = arith.mulf %0, %1 : vector<32x1xf32>
    %c0_1 = arith.constant 0 : index
    %c0_2 = arith.constant 0 : index
    %3 = vector.load %arg2[%c0_1, %c0_2] : memref<32x1xf32, #tpu.memory_space<vmem>>, vector<32x1xf32>
    %cst_3 = arith.constant 2.000000e-02 : f32
    %4 = vector.broadcast %cst_3 : f32 to vector<32x1xf32>
    %5 = arith.mulf %3, %4 : vector<32x1xf32>
    %6 = arith.mulf %2, %2 : vector<32x1xf32>
    %7 = arith.subf %5, %6 : vector<32x1xf32>
    %c0_4 = arith.constant 0 : index
    %c0_5 = arith.constant 0 : index
    %8 = vector.load %arg3[%c0_4, %c0_5] : memref<32x1xf32, #tpu.memory_space<vmem>>, vector<32x1xf32>
    %cst_6 = arith.constant 9.99999974E-6 : f32
    %9 = vector.broadcast %cst_6 : f32 to vector<32x1xf32>
    %10 = arith.addf %7, %9 : vector<32x1xf32>
    %11 = math.rsqrt %10 : vector<32x1xf32>
    %12 = arith.mulf %8, %11 : vector<32x1xf32>
    %c0_7 = arith.constant 0 : index
    %c0_8 = arith.constant 0 : index
    %13 = vector.load %arg4[%c0_7, %c0_8] : memref<32x1xf32, #tpu.memory_space<vmem>>, vector<32x1xf32>
    %14 = arith.mulf %2, %12 : vector<32x1xf32>
    %15 = arith.subf %13, %14 : vector<32x1xf32>
    %c0_9 = arith.constant 0 : index
    %c0_10 = arith.constant 0 : index
    %16 = vector.load %arg5[%c0_9, %c0_10] : memref<32x128xf32, #tpu.memory_space<vmem>>, vector<32x128xf32>
    %17 = vector.broadcast %12 : vector<32x1xf32> to vector<32x128xf32>
    %18 = arith.mulf %16, %17 : vector<32x128xf32>
    %19 = vector.broadcast %15 : vector<32x1xf32> to vector<32x128xf32>
    %20 = arith.addf %18, %19 : vector<32x128xf32>
    %cst_11 = arith.constant 0.000000e+00 : f32
    %21 = vector.broadcast %cst_11 : f32 to vector<32x128xf32>
    %22 = arith.cmpf ogt, %20, %21 : vector<32x128xf32>
    %cst_12 = arith.constant 2.000000e-01 : f32
    %23 = vector.broadcast %cst_12 : f32 to vector<32x128xf32>
    %24 = arith.mulf %23, %20 : vector<32x128xf32>
    %25 = arith.select %22, %20, %24 : vector<32x128xi1>, vector<32x128xf32>
    %26 = arith.truncf %25 : vector<32x128xf32> to vector<32x128xbf16>
    %c0_13 = arith.constant 0 : index
    %c0_14 = arith.constant 0 : index
    %27 = vector.load %arg6[%c0_13, %c0_14] : memref<32x128xbf16, #tpu.memory_space<vmem>>, vector<32x128xbf16>
    tpu.vector_store %arg6[%c0_13, %c0_14], %26 {strides = array<i32>} : memref<32x128xbf16, #tpu.memory_space<vmem>>, vector<32x128xbf16>,
    return
  }
  func.func @transform_0(%arg0: i32) -> (i32, i32) {
    %c0_i32 = arith.constant 0 : i32
    %c0_i32_0 = arith.constant 0 : i32
    %c0_i32_1 = arith.constant 0 : i32
    return %c0_i32, %c0_i32_0 : i32, i32
  }
  func.func @transform_1(%arg0: i32) -> (i32, i32) {
    %c0_i32 = arith.constant 0 : i32
    %c0_i32_0 = arith.constant 0 : i32
    %c0_i32_1 = arith.constant 0 : i32
    return %c0_i32, %c0_i32_0 : i32, i32
  }
  func.func @transform_2(%arg0: i32) -> (i32, i32) {
    %c0_i32 = arith.constant 0 : i32
    %c0_i32_0 = arith.constant 0 : i32
    %c0_i32_1 = arith.constant 0 : i32
    return %c0_i32, %c0_i32_0 : i32, i32
  }
  func.func @transform_3(%arg0: i32) -> (i32, i32) {
    %c0_i32 = arith.constant 0 : i32
    %c0_i32_0 = arith.constant 0 : i32
    %c0_i32_1 = arith.constant 0 : i32
    return %c0_i32, %c0_i32_0 : i32, i32
  }
  func.func @transform_4(%arg0: i32) -> (i32, i32) {
    %c0_i32 = arith.constant 0 : i32
    %c0_i32_0 = arith.constant 0 : i32
    return %c0_i32, %arg0 : i32, i32
  }
  func.func @transform_5(%arg0: i32) -> (i32, i32) {
    %c0_i32 = arith.constant 0 : i32
    %c0_i32_0 = arith.constant 0 : i32
    return %c0_i32, %arg0 : i32, i32
  }
}

module attributes {stable_mosaic.version = 11 : i64} {
  func.func @_conv_stats_kernel(%arg0: i32, %arg1: memref<64x512xbf16, #tpu.memory_space<vmem>>, %arg2: memref<512x128xbf16, #tpu.memory_space<vmem>>, %arg3: memref<64x128xf32, #tpu.memory_space<vmem>>, %arg4: memref<64x1xf32, #tpu.memory_space<vmem>>, %arg5: memref<64x1xf32, #tpu.memory_space<vmem>>) attributes {dimension_semantics = [#tpu.dimension_semantics<arbitrary>], iteration_bounds = array<i64: 1>, scalar_prefetch = 0 : i64, scratch_operands = 0 : i64, tpu.core_type = #tpu.core_type<tc>, window_params = [{pipeline_mode = #tpu.pipeline_mode<synchronous>, transform_indices = @transform_0, window_bounds = array<i64: 64, 512>}, {transform_indices = @transform_1, window_bounds = array<i64: 512, 128>}, {transform_indices = @transform_2, window_bounds = array<i64: 64, 128>}, {pipeline_mode = #tpu.pipeline_mode<synchronous>, transform_indices = @transform_3, window_bounds = array<i64: 64, 1>}, {pipeline_mode = #tpu.pipeline_mode<synchronous>, transform_indices = @transform_4, window_bounds = array<i64: 64, 1>}]} {
    %c0_i32 = arith.constant 0 : i32
    %0 = arith.cmpi eq, %arg0, %c0_i32 : i32
    %1 = arith.extui %0 : i1 to i32
    %c0_i32_0 = arith.constant 0 : i32
    %2 = arith.cmpi ne, %1, %c0_i32_0 : i32
    scf.if %2 {
      %cst_16 = arith.constant 0.000000e+00 : f32
      %18 = vector.broadcast %cst_16 : f32 to vector<64x1xf32>
      %c0_17 = arith.constant 0 : index
      %c0_18 = arith.constant 0 : index
      %19 = vector.load %arg4[%c0_17, %c0_18] : memref<64x1xf32, #tpu.memory_space<vmem>>, vector<64x1xf32>
      tpu.vector_store %arg4[%c0_17, %c0_18], %18 {strides = array<i32>} : memref<64x1xf32, #tpu.memory_space<vmem>>, vector<64x1xf32>,
      %cst_19 = arith.constant 0.000000e+00 : f32
      %20 = vector.broadcast %cst_19 : f32 to vector<64x1xf32>
      %c0_20 = arith.constant 0 : index
      %c0_21 = arith.constant 0 : index
      %21 = vector.load %arg5[%c0_20, %c0_21] : memref<64x1xf32, #tpu.memory_space<vmem>>, vector<64x1xf32>
      tpu.vector_store %arg5[%c0_20, %c0_21], %20 {strides = array<i32>} : memref<64x1xf32, #tpu.memory_space<vmem>>, vector<64x1xf32>,
    } else {
    }
    %c0 = arith.constant 0 : index
    %c0_1 = arith.constant 0 : index
    %3 = vector.load %arg1[%c0, %c0_1] : memref<64x512xbf16, #tpu.memory_space<vmem>>, vector<64x512xbf16>
    %c0_2 = arith.constant 0 : index
    %c0_3 = arith.constant 0 : index
    %4 = vector.load %arg2[%c0_2, %c0_3] : memref<512x128xbf16, #tpu.memory_space<vmem>>, vector<512x128xbf16>
    %cst = arith.constant dense<0.000000e+00> : vector<64x128xf32>
    %5 = tpu.matmul %3, %4, %cst {dimension_numbers = #tpu.dot_dimension_numbers<[1], [0], [0], [1], [0, 0, 1, 1], [], []>} : vector<64x512xbf16>, vector<512x128xbf16>, vector<64x128xf32> -> vector<64x128xf32>
    %c0_4 = arith.constant 0 : index
    %c0_5 = arith.constant 0 : index
    %6 = vector.load %arg3[%c0_4, %c0_5] : memref<64x128xf32, #tpu.memory_space<vmem>>, vector<64x128xf32>
    tpu.vector_store %arg3[%c0_4, %c0_5], %5 {strides = array<i32>} : memref<64x128xf32, #tpu.memory_space<vmem>>, vector<64x128xf32>,
    %c0_6 = arith.constant 0 : index
    %c0_7 = arith.constant 0 : index
    %7 = vector.load %arg4[%c0_6, %c0_7] : memref<64x1xf32, #tpu.memory_space<vmem>>, vector<64x1xf32>
    %cst_8 = arith.constant dense<0.000000e+00> : vector<64xf32>
    %8 = vector.multi_reduction <add>, %5, %cst_8 [1] : vector<64x128xf32> to vector<64xf32>
    %9 = vector.shape_cast %8 : vector<64xf32> to vector<64x1xf32>
    %10 = arith.addf %7, %9 : vector<64x1xf32>
    %c0_9 = arith.constant 0 : index
    %c0_10 = arith.constant 0 : index
    %11 = vector.load %arg4[%c0_9, %c0_10] : memref<64x1xf32, #tpu.memory_space<vmem>>, vector<64x1xf32>
    tpu.vector_store %arg4[%c0_9, %c0_10], %10 {strides = array<i32>} : memref<64x1xf32, #tpu.memory_space<vmem>>, vector<64x1xf32>,
    %c0_11 = arith.constant 0 : index
    %c0_12 = arith.constant 0 : index
    %12 = vector.load %arg5[%c0_11, %c0_12] : memref<64x1xf32, #tpu.memory_space<vmem>>, vector<64x1xf32>
    %13 = arith.mulf %5, %5 : vector<64x128xf32>
    %cst_13 = arith.constant dense<0.000000e+00> : vector<64xf32>
    %14 = vector.multi_reduction <add>, %13, %cst_13 [1] : vector<64x128xf32> to vector<64xf32>
    %15 = vector.shape_cast %14 : vector<64xf32> to vector<64x1xf32>
    %16 = arith.addf %12, %15 : vector<64x1xf32>
    %c0_14 = arith.constant 0 : index
    %c0_15 = arith.constant 0 : index
    %17 = vector.load %arg5[%c0_14, %c0_15] : memref<64x1xf32, #tpu.memory_space<vmem>>, vector<64x1xf32>
    tpu.vector_store %arg5[%c0_14, %c0_15], %16 {strides = array<i32>} : memref<64x1xf32, #tpu.memory_space<vmem>>, vector<64x1xf32>,
    return
  }
  func.func @transform_0(%arg0: i32) -> (i32, i32) {
    %c0_i32 = arith.constant 0 : i32
    %c0_i32_0 = arith.constant 0 : i32
    %c0_i32_1 = arith.constant 0 : i32
    return %c0_i32, %c0_i32_0 : i32, i32
  }
  func.func @transform_1(%arg0: i32) -> (i32, i32) {
    %c0_i32 = arith.constant 0 : i32
    %c0_i32_0 = arith.constant 0 : i32
    return %c0_i32, %arg0 : i32, i32
  }
  func.func @transform_2(%arg0: i32) -> (i32, i32) {
    %c0_i32 = arith.constant 0 : i32
    %c0_i32_0 = arith.constant 0 : i32
    return %c0_i32, %arg0 : i32, i32
  }
  func.func @transform_3(%arg0: i32) -> (i32, i32) {
    %c0_i32 = arith.constant 0 : i32
    %c0_i32_0 = arith.constant 0 : i32
    %c0_i32_1 = arith.constant 0 : i32
    return %c0_i32, %c0_i32_0 : i32, i32
  }
  func.func @transform_4(%arg0: i32) -> (i32, i32) {
    %c0_i32 = arith.constant 0 : i32
    %c0_i32_0 = arith.constant 0 : i32
    %c0_i32_1 = arith.constant 0 : i32
    return %c0_i32, %c0_i32_0 : i32, i32
  }
}

module attributes {stable_mosaic.version = 11 : i64} {
  func.func @_bn_act_kernel(%arg0: i32, %arg1: memref<64x1xf32, #tpu.memory_space<vmem>>, %arg2: memref<64x1xf32, #tpu.memory_space<vmem>>, %arg3: memref<64x1xf32, #tpu.memory_space<vmem>>, %arg4: memref<64x1xf32, #tpu.memory_space<vmem>>, %arg5: memref<64x128xf32, #tpu.memory_space<vmem>>, %arg6: memref<64x128xbf16, #tpu.memory_space<vmem>>) attributes {dimension_semantics = [#tpu.dimension_semantics<parallel>], iteration_bounds = array<i64: 1>, scalar_prefetch = 0 : i64, scratch_operands = 0 : i64, tpu.core_type = #tpu.core_type<tc>, window_params = [{pipeline_mode = #tpu.pipeline_mode<synchronous>, transform_indices = @transform_0, window_bounds = array<i64: 64, 1>}, {pipeline_mode = #tpu.pipeline_mode<synchronous>, transform_indices = @transform_1, window_bounds = array<i64: 64, 1>}, {pipeline_mode = #tpu.pipeline_mode<synchronous>, transform_indices = @transform_2, window_bounds = array<i64: 64, 1>}, {pipeline_mode = #tpu.pipeline_mode<synchronous>, transform_indices = @transform_3, window_bounds = array<i64: 64, 1>}, {transform_indices = @transform_4, window_bounds = array<i64: 64, 128>}, {transform_indices = @transform_5, window_bounds = array<i64: 64, 128>}]} {
    %c0 = arith.constant 0 : index
    %c0_0 = arith.constant 0 : index
    %0 = vector.load %arg1[%c0, %c0_0] : memref<64x1xf32, #tpu.memory_space<vmem>>, vector<64x1xf32>
    %cst = arith.constant 0.013888889 : f32
    %1 = vector.broadcast %cst : f32 to vector<64x1xf32>
    %2 = arith.mulf %0, %1 : vector<64x1xf32>
    %c0_1 = arith.constant 0 : index
    %c0_2 = arith.constant 0 : index
    %3 = vector.load %arg2[%c0_1, %c0_2] : memref<64x1xf32, #tpu.memory_space<vmem>>, vector<64x1xf32>
    %cst_3 = arith.constant 0.013888889 : f32
    %4 = vector.broadcast %cst_3 : f32 to vector<64x1xf32>
    %5 = arith.mulf %3, %4 : vector<64x1xf32>
    %6 = arith.mulf %2, %2 : vector<64x1xf32>
    %7 = arith.subf %5, %6 : vector<64x1xf32>
    %c0_4 = arith.constant 0 : index
    %c0_5 = arith.constant 0 : index
    %8 = vector.load %arg3[%c0_4, %c0_5] : memref<64x1xf32, #tpu.memory_space<vmem>>, vector<64x1xf32>
    %cst_6 = arith.constant 9.99999974E-6 : f32
    %9 = vector.broadcast %cst_6 : f32 to vector<64x1xf32>
    %10 = arith.addf %7, %9 : vector<64x1xf32>
    %11 = math.rsqrt %10 : vector<64x1xf32>
    %12 = arith.mulf %8, %11 : vector<64x1xf32>
    %c0_7 = arith.constant 0 : index
    %c0_8 = arith.constant 0 : index
    %13 = vector.load %arg4[%c0_7, %c0_8] : memref<64x1xf32, #tpu.memory_space<vmem>>, vector<64x1xf32>
    %14 = arith.mulf %2, %12 : vector<64x1xf32>
    %15 = arith.subf %13, %14 : vector<64x1xf32>
    %c0_9 = arith.constant 0 : index
    %c0_10 = arith.constant 0 : index
    %16 = vector.load %arg5[%c0_9, %c0_10] : memref<64x128xf32, #tpu.memory_space<vmem>>, vector<64x128xf32>
    %17 = vector.broadcast %12 : vector<64x1xf32> to vector<64x128xf32>
    %18 = arith.mulf %16, %17 : vector<64x128xf32>
    %19 = vector.broadcast %15 : vector<64x1xf32> to vector<64x128xf32>
    %20 = arith.addf %18, %19 : vector<64x128xf32>
    %cst_11 = arith.constant 0.000000e+00 : f32
    %21 = vector.broadcast %cst_11 : f32 to vector<64x128xf32>
    %22 = arith.cmpf ogt, %20, %21 : vector<64x128xf32>
    %cst_12 = arith.constant 2.000000e-01 : f32
    %23 = vector.broadcast %cst_12 : f32 to vector<64x128xf32>
    %24 = arith.mulf %23, %20 : vector<64x128xf32>
    %25 = arith.select %22, %20, %24 : vector<64x128xi1>, vector<64x128xf32>
    %26 = arith.truncf %25 : vector<64x128xf32> to vector<64x128xbf16>
    %c0_13 = arith.constant 0 : index
    %c0_14 = arith.constant 0 : index
    %27 = vector.load %arg6[%c0_13, %c0_14] : memref<64x128xbf16, #tpu.memory_space<vmem>>, vector<64x128xbf16>
    tpu.vector_store %arg6[%c0_13, %c0_14], %26 {strides = array<i32>} : memref<64x128xbf16, #tpu.memory_space<vmem>>, vector<64x128xbf16>,
    return
  }
  func.func @transform_0(%arg0: i32) -> (i32, i32) {
    %c0_i32 = arith.constant 0 : i32
    %c0_i32_0 = arith.constant 0 : i32
    %c0_i32_1 = arith.constant 0 : i32
    return %c0_i32, %c0_i32_0 : i32, i32
  }
  func.func @transform_1(%arg0: i32) -> (i32, i32) {
    %c0_i32 = arith.constant 0 : i32
    %c0_i32_0 = arith.constant 0 : i32
    %c0_i32_1 = arith.constant 0 : i32
    return %c0_i32, %c0_i32_0 : i32, i32
  }
  func.func @transform_2(%arg0: i32) -> (i32, i32) {
    %c0_i32 = arith.constant 0 : i32
    %c0_i32_0 = arith.constant 0 : i32
    %c0_i32_1 = arith.constant 0 : i32
    return %c0_i32, %c0_i32_0 : i32, i32
  }
  func.func @transform_3(%arg0: i32) -> (i32, i32) {
    %c0_i32 = arith.constant 0 : i32
    %c0_i32_0 = arith.constant 0 : i32
    %c0_i32_1 = arith.constant 0 : i32
    return %c0_i32, %c0_i32_0 : i32, i32
  }
  func.func @transform_4(%arg0: i32) -> (i32, i32) {
    %c0_i32 = arith.constant 0 : i32
    %c0_i32_0 = arith.constant 0 : i32
    return %c0_i32, %arg0 : i32, i32
  }
  func.func @transform_5(%arg0: i32) -> (i32, i32) {
    %c0_i32 = arith.constant 0 : i32
    %c0_i32_0 = arith.constant 0 : i32
    return %c0_i32, %arg0 : i32, i32
  }
}

module attributes {stable_mosaic.version = 11 : i64} {
  func.func @_conv_bias_act_kernel(%arg0: i32, %arg1: memref<8x1024xbf16, #tpu.memory_space<vmem>>, %arg2: memref<8x1xf32, #tpu.memory_space<vmem>>, %arg3: memref<1024x128xbf16, #tpu.memory_space<vmem>>, %arg4: memref<8x128xf32, #tpu.memory_space<vmem>>) attributes {dimension_semantics = [#tpu.dimension_semantics<parallel>], iteration_bounds = array<i64: 1>, scalar_prefetch = 0 : i64, scratch_operands = 0 : i64, tpu.core_type = #tpu.core_type<tc>, window_params = [{pipeline_mode = #tpu.pipeline_mode<synchronous>, transform_indices = @transform_0, window_bounds = array<i64: 8, 1024>}, {pipeline_mode = #tpu.pipeline_mode<synchronous>, transform_indices = @transform_1, window_bounds = array<i64: 8, 1>}, {transform_indices = @transform_2, window_bounds = array<i64: 1024, 128>}, {transform_indices = @transform_3, window_bounds = array<i64: 8, 128>}]} {
    %c0 = arith.constant 0 : index
    %c0_0 = arith.constant 0 : index
    %0 = vector.load %arg1[%c0, %c0_0] : memref<8x1024xbf16, #tpu.memory_space<vmem>>, vector<8x1024xbf16>
    %c0_1 = arith.constant 0 : index
    %c0_2 = arith.constant 0 : index
    %1 = vector.load %arg3[%c0_1, %c0_2] : memref<1024x128xbf16, #tpu.memory_space<vmem>>, vector<1024x128xbf16>
    %cst = arith.constant dense<0.000000e+00> : vector<8x128xf32>
    %2 = tpu.matmul %0, %1, %cst {dimension_numbers = #tpu.dot_dimension_numbers<[1], [0], [0], [1], [0, 0, 1, 1], [], []>} : vector<8x1024xbf16>, vector<1024x128xbf16>, vector<8x128xf32> -> vector<8x128xf32>
    %c0_3 = arith.constant 0 : index
    %c0_4 = arith.constant 0 : index
    %3 = vector.load %arg2[%c0_3, %c0_4] : memref<8x1xf32, #tpu.memory_space<vmem>>, vector<8x1xf32>
    %4 = vector.broadcast %3 : vector<8x1xf32> to vector<8x128xf32>
    %5 = arith.addf %2, %4 : vector<8x128xf32>
    %c0_5 = arith.constant 0 : index
    %c0_6 = arith.constant 0 : index
    %6 = vector.load %arg4[%c0_5, %c0_6] : memref<8x128xf32, #tpu.memory_space<vmem>>, vector<8x128xf32>
    tpu.vector_store %arg4[%c0_5, %c0_6], %5 {strides = array<i32>} : memref<8x128xf32, #tpu.memory_space<vmem>>, vector<8x128xf32>,
    return
  }
  func.func @transform_0(%arg0: i32) -> (i32, i32) {
    %c0_i32 = arith.constant 0 : i32
    %c0_i32_0 = arith.constant 0 : i32
    %c0_i32_1 = arith.constant 0 : i32
    return %c0_i32, %c0_i32_0 : i32, i32
  }
  func.func @transform_1(%arg0: i32) -> (i32, i32) {
    %c0_i32 = arith.constant 0 : i32
    %c0_i32_0 = arith.constant 0 : i32
    %c0_i32_1 = arith.constant 0 : i32
    return %c0_i32, %c0_i32_0 : i32, i32
  }
  func.func @transform_2(%arg0: i32) -> (i32, i32) {
    %c0_i32 = arith.constant 0 : i32
    %c0_i32_0 = arith.constant 0 : i32
    return %c0_i32, %arg0 : i32, i32
  }
  func.func @transform_3(%arg0: i32) -> (i32, i32) {
    %c0_i32 = arith.constant 0 : i32
    %c0_i32_0 = arith.constant 0 : i32
    return %c0_i32, %arg0 : i32, i32
  }
}

</mosaic_0001>

<llo_original>
// kernel: nlayer_discriminator_forward.8
$region0: #{nlayer_discriminator_forward.8}
  #allocation0 [shape = 'u32[]', space=smem, size = 0x4, offset = 0x4, fixed_abs, tag = 'smem constant byte address 0x4 - core index']
  #allocation1 [shape = 'u32[144,128]{1,0:T(1,128)}', space=vmem, size = 0x12000, scoped, tag = 'internal scratch']
  %s0 = inlined_call_operand.vmem [shape: bf16[8,48], index: 0, kind: input, shape index: {}]
  %s1 = inlined_call_operand.vmem [shape: f32[8,1], index: 1, kind: input, shape index: {}]
  %s2 = inlined_call_operand.vmem [shape: bf16[48,640], index: 2, kind: input, shape index: {}]
  %s3 = inlined_call_operand.vmem [shape: bf16[8,640], index: 3, kind: output, shape index: {}]
  %s4 = sld [smem:[#allocation0]]
  $region86: #{nlayer_discriminator_forward.8} parent=0
    _
  %s6 = ssub.s32 1, %s4
  %s7 = scalar_select 0, %s6, %s4
  $region1: #{nlayer_discriminator_forward.8} parent=0
    #allocation2 [shape = 'u8[24576]{0}', space=vmem, size = 0x6000, scoped, tag = 'input window, operand 2']
    loop: start=0, step=1, limit=7
    $region2: #{nlayer_discriminator_forward.8} parent=1 // loop_pre_header
      _
    $region3: #{nlayer_discriminator_forward.8} parent=1 // loop_header
      %s9 = sphi 0, %s13
      %p10 = scmp.ge.s32.totalorder %s9, 7
      %s17 = sphi 0, %s17
      %s19 = sphi 0, %s17
      %s20 = sphi 0, %s19
      %s34 = sphi 0, %s20
      %s38 = sphi 0, %s38
      %s40 = sphi 0, %s38
      %s41 = sphi 0, %s40
      %s55 = sphi 0, %s41
      %s61 = sphi 0, %s63
      %s64 = sphi 0, %s61
      %s65 = sphi 0, %s64
      %s81 = sphi 0, %s65
      %s87 = sphi 0, %s89
      %s90 = sphi 0, %s87
      %s91 = sphi 0, %s90
      %s107 = sphi 0, %s91
    $region4: #{nlayer_discriminator_forward.8} parent=1 // loop_header_branch
      %12 = sbr.rel (%p10) target = $region8
    $region5: #{nlayer_discriminator_forward.8} parent=1 // loop_body
      %s14 = ssub.s32 %s9, 1
      %s15 = ssub.s32 %s9, 2
      %s16 = sadd.s32 %s9, 1
      %s18 = sadd.s32 %s17, 1
      %p21 = scmp.eq.s32.totalorder %s9, 4
      %p22 = scmp.ne.s32.totalorder %s17, %s19
      %p23 = scmp.eq.s32.totalorder %s9, 0
      %p24 = por %p22, %p23
      %p25 = scmp.ne.s32.totalorder %s17, %s19
      %p26 = scmp.eq.s32.totalorder %s14, 4
      %p27 = por %p25, %p26
      %p28 = scmp.ne.s32.totalorder %s19, %s20
      %p29 = scmp.eq.s32.totalorder %s14, 0
      %p30 = por %p28, %p29
      %p31 = scmp.ne.s32.totalorder %s19, %s20
      %p32 = scmp.eq.s32.totalorder %s15, 4
      %p33 = por %p31, %p32
      %p35 = scmp.ne.s32.totalorder %s20, %s34
      %p36 = scmp.eq.s32.totalorder %s15, 0
      %p37 = por %p35, %p36
      %s39 = sadd.s32 %s38, 1
      %p42 = scmp.eq.s32.totalorder %s9, 4
      %p43 = scmp.ne.s32.totalorder %s38, %s40
      %p44 = scmp.eq.s32.totalorder %s9, 0
      %p45 = por %p43, %p44
      %p46 = scmp.ne.s32.totalorder %s38, %s40
      %p47 = scmp.eq.s32.totalorder %s14, 4
      %p48 = por %p46, %p47
      %p49 = scmp.ne.s32.totalorder %s40, %s41
      %p50 = scmp.eq.s32.totalorder %s14, 0
      %p51 = por %p49, %p50
      %p52 = scmp.ne.s32.totalorder %s40, %s41
      %p53 = scmp.eq.s32.totalorder %s15, 4
      %p54 = por %p52, %p53
      %p56 = scmp.ne.s32.totalorder %s41, %s55
      %p57 = scmp.eq.s32.totalorder %s15, 0
      %p58 = por %p56, %p57
      %s59 = ssub.s32 %s9, %s16
      %p60 = scmp.eq.s32.totalorder %s59, 0
      %s62 = sadd.s32 %s61, 1
      %s63 = scalar_select %p60, %s61, %s62
      %p66 = pneg %p60
      %p67 = scmp.eq.s32.totalorder %s9, 4
      %p68 = por %p66, %p67
      %p69 = scmp.ne.s32.totalorder %s61, %s64
      %p70 = scmp.eq.s32.totalorder %s9, 0
      %p71 = por %p69, %p70
      %p72 = scmp.ne.s32.totalorder %s61, %s64
      %p73 = scmp.eq.s32.totalorder %s14, 4
      %p74 = por %p72, %p73
      %p75 = scmp.ne.s32.totalorder %s64, %s65
      %p76 = scmp.eq.s32.totalorder %s14, 0
      %p77 = por %p75, %p76
      %p78 = scmp.ne.s32.totalorder %s64, %s65
      %p79 = scmp.eq.s32.totalorder %s15, 4
      %p80 = por %p78, %p79
      %p82 = scmp.ne.s32.totalorder %s65, %s81
      %p83 = scmp.eq.s32.totalorder %s15, 0
      %p84 = por %p82, %p83
      %s85 = ssub.s32 %s9, %s16
      %p86 = scmp.eq.s32.totalorder %s85, 0
      %s88 = sadd.s32 %s87, 1
      %s89 = scalar_select %p86, %s87, %s88
      %p92 = pneg %p86
      %p93 = scmp.eq.s32.totalorder %s9, 4
      %p94 = por %p92, %p93
      %p95 = scmp.ne.s32.totalorder %s87, %s90
      %p96 = scmp.eq.s32.totalorder %s9, 0
      %p97 = por %p95, %p96
      %p98 = scmp.ne.s32.totalorder %s87, %s90
      %p99 = scmp.eq.s32.totalorder %s14, 4
      %p100 = por %p98, %p99
      %p101 = scmp.ne.s32.totalorder %s90, %s91
      %p102 = scmp.eq.s32.totalorder %s14, 0
      %p103 = por %p101, %p102
      %p104 = scmp.ne.s32.totalorder %s90, %s91
      %p105 = scmp.eq.s32.totalorder %s15, 4
      %p106 = por %p104, %p105
      %p108 = scmp.ne.s32.totalorder %s91, %s107
      %p109 = scmp.eq.s32.totalorder %s15, 0
      %p110 = por %p108, %p109
      %p111 = scmp.le.s32.totalorder 1, %s9
      %p112 = scmp.lt.s32.totalorder %s9, 6
      %p113 = pnand %p111, %p112
      %p114 = pneg %p113
      // Predicated region
      $region9: #{nlayer_discriminator_forward.8} parent=5 // pred_check
        _
      $region10: #{nlayer_discriminator_forward.8} parent=5 // pred_check_branch
        %116 = sbr.rel (%p113) target = $region12
      $region11: #{nlayer_discriminator_forward.8} parent=5 // pred_region
        %s117 = ssub.s32 %s9, 1
        // Predicated region
        $region13: #{nlayer_discriminator_forward.8} parent=11 // pred_check
          %p118 = pneg %p30
        $region14: #{nlayer_discriminator_forward.8} parent=11 // pred_check_branch
          %120 = sbr.rel (%p118) target = $region16
        $region15: #{nlayer_discriminator_forward.8} parent=11 // pred_region
          _
        $region16: #{nlayer_discriminator_forward.8} parent=11 // pred_fallthru
          _
        // Predicated region
        $region17: #{nlayer_discriminator_forward.8} parent=11 // pred_check
          %p121 = pneg %p51
        $region18: #{nlayer_discriminator_forward.8} parent=11 // pred_check_branch
          %123 = sbr.rel (%p121) target = $region20
        $region19: #{nlayer_discriminator_forward.8} parent=11 // pred_region
          _
        $region20: #{nlayer_discriminator_forward.8} parent=11 // pred_fallthru
          _
      $region12: #{nlayer_discriminator_forward.8} parent=5 // pred_fallthru
        _
      %p124 = scmp.lt.s32.totalorder %s9, 5
      // Predicated region
      $region21: #{nlayer_discriminator_forward.8} parent=5 // pred_check
        %p125 = pneg %p124
      $region22: #{nlayer_discriminator_forward.8} parent=5 // pred_check_branch
        %127 = sbr.rel (%p125) target = $region24
      $region23: #{nlayer_discriminator_forward.8} parent=5 // pred_region
        // Predicated region
        $region25: #{nlayer_discriminator_forward.8} parent=23 // pred_check
          %p128 = pneg %p71
        $region26: #{nlayer_discriminator_forward.8} parent=23 // pred_check_branch
          %130 = sbr.rel (%p128) target = $region28
        $region27: #{nlayer_discriminator_forward.8} parent=23 // pred_region
          %s131 = sand.u32 %s61, 1
          %s132 = sand.u32 %s61, 1
          %s133 = smul.addr %s132, 24
          %s134 = scalar_lea.vmem [#allocation2], %s133
          %s135 = smul.addr %s9, 4
          %s136 = scalar_lea.vmem %s2, %s135
          // Predicated region
          $region29: #{nlayer_discriminator_forward.8} parent=27 // pred_check
            _
          $region30: #{nlayer_discriminator_forward.8} parent=27 // pred_check_branch
            %138 = sbr.rel (0) target = $region32
          $region31: #{nlayer_discriminator_forward.8} parent=27 // pred_region
            // Predicated region
            $region33: #{nlayer_discriminator_forward.8} parent=31 // pred_check
              _
            $region34: #{nlayer_discriminator_forward.8} parent=31 // pred_check_branch
              %140 = sbr.rel target = $region36
            $region35: #{nlayer_discriminator_forward.8} parent=31 // pred_region
              // Predicated region
              $region48: #{nlayer_discriminator_forward.8} parent=35 // pred_check
                _
              $region49: #{nlayer_discriminator_forward.8} parent=35 // pred_check_branch
                %166 = sbr.rel (0) target = $region51
              $region50: #{nlayer_discriminator_forward.8} parent=35 // pred_region
                loop: start=0, step=1, limit=1
                $region52: #{nlayer_discriminator_forward.8} parent=50 // loop_pre_header
                  _
                $region53: #{nlayer_discriminator_forward.8} parent=50 // loop_header
                  %s168 = sphi 0, %s172
                  %p169 = scmp.ge.s32.totalorder %s168, 1
                  %s173 = sphi %s136, %s136
                  %s174 = sphi %s134, %s134
                $region54: #{nlayer_discriminator_forward.8} parent=50 // loop_header_branch
                  %171 = sbr.rel (%p169) target = $region58
                $region55: #{nlayer_discriminator_forward.8} parent=50 // loop_body
                  _
                $region56: #{nlayer_discriminator_forward.8} parent=50 // loop_footer
                  %s172 = sadd.s32 1, %s168
                $region57: #{nlayer_discriminator_forward.8} parent=50 // loop_footer_branch
                  %167 = sbr.rel target = $region53
                $region58: #{nlayer_discriminator_forward.8} parent=50 // loop_exit
                  _
                %s176 = ssub.s32 16, 1
                loop: start=0, step=1, limit=1
                $region59: #{nlayer_discriminator_forward.8} parent=50 // loop_pre_header
                  _
                $region60: #{nlayer_discriminator_forward.8} parent=50 // loop_header
                  %s178 = sphi 0, %s182
                  %p179 = scmp.ge.s32.totalorder %s178, 1
                  %s183 = sphi %s136, %s136
                  %s184 = sphi %s134, %s134
                $region61: #{nlayer_discriminator_forward.8} parent=50 // loop_header_branch
                  %181 = sbr.rel (%p179) target = $region65
                $region62: #{nlayer_discriminator_forward.8} parent=50 // loop_body
                  %v185 = vld [vmem:[%s183] sm:%s176]
                  %186 = vst [vmem:[%s184] sm:%s176] %v185
                  %v187 = vld [vmem:[%s183 + $0x14] sm:%s176]
                  %188 = vst [vmem:[%s184 + $0x4] sm:%s176] %v187
                  %v189 = vld [vmem:[%s183 + $0x28] sm:%s176]
                  %190 = vst [vmem:[%s184 + $0x8] sm:%s176] %v189
                  %v191 = vld [vmem:[%s183 + $0x3c] sm:%s176]
                  %192 = vst [vmem:[%s184 + $0xc] sm:%s176] %v191
                  %v193 = vld [vmem:[%s183 + $0x50] sm:%s176]
                  %194 = vst [vmem:[%s184 + $0x10] sm:%s176] %v193
                  %v195 = vld [vmem:[%s183 + $0x64] sm:%s176]
                  %196 = vst [vmem:[%s184 + $0x14] sm:%s176] %v195
                $region63: #{nlayer_discriminator_forward.8} parent=50 // loop_footer
                  %s182 = sadd.s32 1, %s178
                $region64: #{nlayer_discriminator_forward.8} parent=50 // loop_footer_branch
                  %177 = sbr.rel target = $region60
                $region65: #{nlayer_discriminator_forward.8} parent=50 // loop_exit
                  _
              $region51: #{nlayer_discriminator_forward.8} parent=35 // pred_fallthru
                _
            $region36: #{nlayer_discriminator_forward.8} parent=31 // pred_fallthru
              _
            // Predicated region
            $region37: #{nlayer_discriminator_forward.8} parent=31 // pred_check
              _
            $region38: #{nlayer_discriminator_forward.8} parent=31 // pred_check_branch
              %142 = sbr.rel (0) target = $region40
            $region39: #{nlayer_discriminator_forward.8} parent=31 // pred_region
              %s144 = ssub.s32 16, 1
              loop: start=0, step=1, limit=1
              $region41: #{nlayer_discriminator_forward.8} parent=39 // loop_pre_header
                _
              $region42: #{nlayer_discriminator_forward.8} parent=39 // loop_header
                %s146 = sphi 0, %s150
                %p147 = scmp.ge.s32.totalorder %s146, 1
                %s151 = sphi %s136, %s136
                %s152 = sphi %s134, %s134
              $region43: #{nlayer_discriminator_forward.8} parent=39 // loop_header_branch
                %149 = sbr.rel (%p147) target = $region47
              $region44: #{nlayer_discriminator_forward.8} parent=39 // loop_body
                %v153 = vld [vmem:[%s151] sm:%s144]
                %154 = vst [vmem:[%s152] sm:%s144] %v153
                %v155 = vld [vmem:[%s151 + $0x14] sm:%s144]
                %156 = vst [vmem:[%s152 + $0x4] sm:%s144] %v155
                %v157 = vld [vmem:[%s151 + $0x28] sm:%s144]
                %158 = vst [vmem:[%s152 + $0x8] sm:%s144] %v157
                %v159 = vld [vmem:[%s151 + $0x3c] sm:%s144]
                %160 = vst [vmem:[%s152 + $0xc] sm:%s144] %v159
                %v161 = vld [vmem:[%s151 + $0x50] sm:%s144]
                %162 = vst [vmem:[%s152 + $0x10] sm:%s144] %v161
                %v163 = vld [vmem:[%s151 + $0x64] sm:%s144]
                %164 = vst [vmem:[%s152 + $0x14] sm:%s144] %v163
              $region45: #{nlayer_discriminator_forward.8} parent=39 // loop_footer
                %s150 = sadd.s32 1, %s146
              $region46: #{nlayer_discriminator_forward.8} parent=39 // loop_footer_branch
                %145 = sbr.rel target = $region42
              $region47: #{nlayer_discriminator_forward.8} parent=39 // loop_exit
                _
            $region40: #{nlayer_discriminator_forward.8} parent=31 // pred_fallthru
              _
          $region32: #{nlayer_discriminator_forward.8} parent=27 // pred_fallthru
            _
          %197 = vnop
        $region28: #{nlayer_discriminator_forward.8} parent=23 // pred_fallthru
          _
      $region24: #{nlayer_discriminator_forward.8} parent=5 // pred_fallthru
        _
      %p198 = scmp.le.s32.totalorder 1, %s9
      %p199 = scmp.lt.s32.totalorder %s9, 6
      %p200 = pnand %p198, %p199
      %p201 = pneg %p200
      // Predicated region
      $region66: #{nlayer_discriminator_forward.8} parent=5 // pred_check
        _
      $region67: #{nlayer_discriminator_forward.8} parent=5 // pred_check_branch
        %203 = sbr.rel (%p200) target = $region69
      $region68: #{nlayer_discriminator_forward.8} parent=5 // pred_region
        %s204 = ssub.s32 %s9, 1
        %s205 = sand.u32 %s64, 1
        %s206 = sand.u32 %s64, 1
        %s207 = smul.addr %s206, 24
        %s208 = scalar_lea.vmem [#allocation2], %s207
        // Predicated region
        $region70: #{nlayer_discriminator_forward.8} parent=68 // pred_check
          %p209 = pneg %p77
        $region71: #{nlayer_discriminator_forward.8} parent=68 // pred_check_branch
          %211 = sbr.rel (%p209) target = $region73
        $region72: #{nlayer_discriminator_forward.8} parent=68 // pred_region
          _
        $region73: #{nlayer_discriminator_forward.8} parent=68 // pred_fallthru
          _
        %p212 = pneg %p30
        %p213 = pneg %p27
        %p214 = pneg %p51
        %p215 = pneg %p48
        %s216 = sand.u32 %s64, 1
        %s217 = sand.u32 %s64, 1
        %s218 = smul.addr %s217, 24
        %s219 = scalar_lea.vmem [#allocation2], %s218
        %p220 = pneg %p77
        %p221 = pneg %p74
        %p222 = pneg %p103
        %p223 = pneg %p100
        %p224 = scmp.lt.s32.totalorder %s14, 4
        %s225 = scalar_select %p224, %s14, 4
        %s226 = smul.addr %s225, 4
        %s227 = scalar_lea.vmem %s3, %s226
        %p228 = scmp.lt.s32.totalorder %s14, 4
        %s229 = scalar_select %p228, %s14, 4
        %s230 = smul.addr %s229, 4
        %s231 = scalar_lea.vmem %s3, %s230
        %v233 = vld [vmem:[%s0] sm:$0xf]
        %v234 = vld [vmem:[%s208] sm:$0xf]
        %v235 = vld [vmem:[%s208 + $0x4] sm:$0xf]
        %v236 = vld [vmem:[%s208 + $0x8] sm:$0xf]
        %v237 = vld [vmem:[%s208 + $0xc] sm:$0xf]
        %v238 = vld [vmem:[%s208 + $0x10] sm:$0xf]
        %v239 = vld [vmem:[%s208 + $0x14] sm:$0xf]
        %v240 = vld [vmem:[%s1] sm:$0xff]
        %242 = vset.pattern.permute.xlu0 0
        %243 = vperm.xlu0 %242, %v240
        %v244 = vpop.permute.xlu0 %243
        %v252 = vunpack.c.l.b16 %v234
        %v253 = vunpack.c.l.b16 %v235
        %v254 = vunpack.c.l.b16 %v236
        %v255 = vunpack.c.l.b16 %v237
        %v256 = vunpack.c.l.b16 %v238
        %v257 = vunpack.c.l.b16 %v239
        %v258 = vpack.c.b16 %v253, %v252
        %v259 = vpack.c.b16 %v255, %v254
        %v260 = vpack.c.b16 %v257, %v256
        %vm264 = vcmask 392192
        %v266 = vsel %vm264, %v233, 0
        %268 = vmatprep.subr.bf16.mxu0 0
        %269 = vmatpush1.bf16.msra.mxu0 0
        %270 = vmatprep.subr.bf16.mxu0 0
        %271 = vmatpush1.bf16.msra.mxu0 0
        %272 = vmatprep.subr.bf16.mxu0 0
        %273 = vmatpush1.bf16.msra.mxu0 0
        %274 = vmatprep.subr.bf16.mxu0 0
        %275 = vmatpush1.bf16.msra.mxu0 0
        %276 = vmatprep.subr.bf16.mxu0 0
        %277 = vmatpush1.bf16.msra.mxu0 0
        %278 = vmatprep.subr.bf16.mxu0 0
        %279 = vmatpush1.bf16.msra.mxu0 %v260
        %280 = vmatprep.subr.bf16.mxu0 0
        %281 = vmatpush1.bf16.msra.mxu0 %v259
        %282 = vmatprep.subr.bf16.mxu0 0
        %283 = vmatpush1.bf16.msra.mxu0 %v258
        %284 = vmatprep.subr.bf16.mxu0 0
        %285 = vmatpush2.bf16.msra.mxu0 0
        %286 = vmatprep.subr.bf16.mxu0 0
        %287 = vmatpush2.bf16.msra.mxu0 0
        %288 = vmatprep.subr.bf16.mxu0 0
        %289 = vmatpush2.bf16.msra.mxu0 0
        %290 = vmatprep.subr.bf16.mxu0 0
        %291 = vmatpush2.bf16.msra.mxu0 0
        %292 = vmatprep.subr.bf16.mxu0 0
        %293 = vmatpush2.bf16.msra.mxu0 0
        %294 = vmatprep.subr.bf16.mxu0 0
        %295 = vmatpush2.bf16.msra.mxu0 0
        %296 = vmatprep.subr.bf16.mxu0 0
        %297 = vmatpush2.bf16.msra.mxu0 0
        %298 = vmatprep.subr.bf16.mxu0 0
        %299 = vmatpush2.bf16.msra.mxu0 0
        %300 = vmatprep.mubr.bf16.mxu0 0
        %301 = vmatmul.mubr.bf16.gmra.mxu0 %v266
        %v302 = vpop.f32.mrf.mxu0
        %v303 = vadd.f32 %v244, %v302
        %v304 = vpop.f32.mrf.mxu0
        %v305 = vpop.f32.mrf.mxu0
        %v306 = vpop.f32.mrf.mxu0
        %307 = vdwg.mxu0
        %vm308 = vcmp.gt.f32.partialorder %v303, 0.0
        %v309 = vmul.f32 %v303, 0.2
        %v310 = vsel %vm308, %v303, %v309
        %v311 = vpack.c.bf16 %v310, %v310
        %312 = vst [vmem:[%s231] sm:$0xf] %v311
        %p313 = scmp.lt.s32.totalorder %s14, 4
        %s314 = scalar_select %p313, %s14, 4
        %s315 = smul.addr %s314, 4
        %s316 = scalar_lea.vmem %s3, %s315
        // Predicated region
        $region74: #{nlayer_discriminator_forward.8} parent=68 // pred_check
          %p317 = pneg %p100
        $region75: #{nlayer_discriminator_forward.8} parent=68 // pred_check_branch
          %319 = sbr.rel (%p317) target = $region77
        $region76: #{nlayer_discriminator_forward.8} parent=68 // pred_region
          _
        $region77: #{nlayer_discriminator_forward.8} parent=68 // pred_fallthru
          _
      $region69: #{nlayer_discriminator_forward.8} parent=5 // pred_fallthru
        _
      %p320 = scmp.le.s32.totalorder 2, %s9
      // Predicated region
      $region78: #{nlayer_discriminator_forward.8} parent=5 // pred_check
        %p321 = pneg %p320
      $region79: #{nlayer_discriminator_forward.8} parent=5 // pred_check_branch
        %323 = sbr.rel (%p321) target = $region81
      $region80: #{nlayer_discriminator_forward.8} parent=5 // pred_region
        %s324 = ssub.s32 %s9, 2
        // Predicated region
        $region82: #{nlayer_discriminator_forward.8} parent=80 // pred_check
          %p325 = pneg %p106
        $region83: #{nlayer_discriminator_forward.8} parent=80 // pred_check_branch
          %327 = sbr.rel (%p325) target = $region85
        $region84: #{nlayer_discriminator_forward.8} parent=80 // pred_region
          %p328 = scmp.lt.s32.totalorder %s15, 4
          %s329 = scalar_select %p328, %s15, 4
          %s330 = smul.addr %s329, 4
          %s331 = scalar_lea.vmem %s3, %s330
        $region85: #{nlayer_discriminator_forward.8} parent=80 // pred_fallthru
          _
      $region81: #{nlayer_discriminator_forward.8} parent=5 // pred_fallthru
        _
    $region6: #{nlayer_discriminator_forward.8} parent=1 // loop_footer
      %s13 = sadd.s32 1, %s9
    $region7: #{nlayer_discriminator_forward.8} parent=1 // loop_footer_branch
      %8 = sbr.rel target = $region3
    $region8: #{nlayer_discriminator_forward.8} parent=1 // loop_exit
      _

// kernel: nlayer_discriminator_forward.9
$region0: #{nlayer_discriminator_forward.9}
  #allocation0 [shape = 'u32[]', space=smem, size = 0x4, offset = 0x4, fixed_abs, tag = 'smem constant byte address 0x4 - core index']
  #allocation1 [shape = 'u32[144,128]{1,0:T(1,128)}', space=vmem, size = 0x12000, scoped, tag = 'internal scratch']
  %s0 = inlined_call_operand.vmem [shape: bf16[16,128], index: 0, kind: input, shape index: {}]
  %s1 = inlined_call_operand.vmem [shape: bf16[128,256], index: 1, kind: input, shape index: {}]
  %s2 = inlined_call_operand.vmem [shape: f32[16,256], index: 2, kind: output, shape index: {0}]
  %s3 = inlined_call_operand.vmem [shape: f32[16,1], index: 3, kind: output, shape index: {1}]
  %s4 = inlined_call_operand.vmem [shape: f32[16,1], index: 4, kind: output, shape index: {2}]
  %5 = xla_tuple %s2, %s3, %s4
  %s6 = sld [smem:[#allocation0]]
  $region38: #{nlayer_discriminator_forward.9} parent=0
    _
  %s8 = ssub.s32 1, %s6
  %s9 = scalar_select 0, %s8, %s6
  // Predicated region
  $region2: #{nlayer_discriminator_forward.9} parent=0 // pred_check
    _
  $region3: #{nlayer_discriminator_forward.9} parent=0 // pred_check_branch
    %11 = sbr.rel (0) target = $region5
  $region4: #{nlayer_discriminator_forward.9} parent=0 // pred_region
    _
  $region5: #{nlayer_discriminator_forward.9} parent=0 // pred_fallthru
    _
  // Predicated region
  $region6: #{nlayer_discriminator_forward.9} parent=0 // pred_check
    _
  $region7: #{nlayer_discriminator_forward.9} parent=0 // pred_check_branch
    %13 = sbr.rel (0) target = $region9
  $region8: #{nlayer_discriminator_forward.9} parent=0 // pred_region
    _
  $region9: #{nlayer_discriminator_forward.9} parent=0 // pred_fallthru
    _
  %p15 = scmp.eq.s32.totalorder 0, 0
  // Predicated region
  $region10: #{nlayer_discriminator_forward.9} parent=0 // pred_check
    %p16 = pneg %p15
  $region11: #{nlayer_discriminator_forward.9} parent=0 // pred_check_branch
    %18 = sbr.rel (%p16) target = $region13
  $region12: #{nlayer_discriminator_forward.9} parent=0 // pred_region
    %vm19 = vcmask 7168
    %20 = vst.msk [vmem:[%s3] sm:$0xff] %vm19, 0.0
    %21 = vst.msk [vmem:[%s3 + $0x8] sm:$0xff] %vm19, 0.0
    %22 = vst.msk [vmem:[%s4] sm:$0xff] %vm19, 0.0
    %23 = vst.msk [vmem:[%s4 + $0x8] sm:$0xff] %vm19, 0.0
  $region13: #{nlayer_discriminator_forward.9} parent=0 // pred_fallthru
    _
  %v24 = vld [vmem:[%s0] sm:$0xf]
  %v25 = vld [vmem:[%s0 + $0x4] sm:$0xf]
  %v26 = vld [vmem:[%s1] sm:$0xff]
  %v27 = vld [vmem:[%s1 + $0x8] sm:$0xff]
  %v28 = vld [vmem:[%s1 + $0x10] sm:$0xff]
  %v29 = vld [vmem:[%s1 + $0x18] sm:$0xff]
  %v30 = vld [vmem:[%s1 + $0x20] sm:$0xff]
  %v31 = vld [vmem:[%s1 + $0x28] sm:$0xff]
  %v32 = vld [vmem:[%s1 + $0x30] sm:$0xff]
  %v33 = vld [vmem:[%s1 + $0x38] sm:$0xff]
  %v34 = vld [vmem:[%s1 + $0x40] sm:$0xff]
  %v35 = vld [vmem:[%s1 + $0x48] sm:$0xff]
  %v36 = vld [vmem:[%s1 + $0x50] sm:$0xff]
  %v37 = vld [vmem:[%s1 + $0x58] sm:$0xff]
  %v38 = vld [vmem:[%s1 + $0x60] sm:$0xff]
  %v39 = vld [vmem:[%s1 + $0x68] sm:$0xff]
  %v40 = vld [vmem:[%s1 + $0x70] sm:$0xff]
  %v41 = vld [vmem:[%s1 + $0x78] sm:$0xff]
  %v44 = vunpack.c.l.b16 %v24
  %v45 = vunpack.c.l.b16 %v25
  %v46 = vpack.c.b16 %v45, %v44
  %v64 = vunpack.c.l.b16 %v26
  %v65 = vunpack.c.h.b16 %v26
  %v66 = vunpack.c.l.b16 %v27
  %v67 = vunpack.c.h.b16 %v27
  %v68 = vunpack.c.l.b16 %v28
  %v69 = vunpack.c.h.b16 %v28
  %v70 = vunpack.c.l.b16 %v29
  %v71 = vunpack.c.h.b16 %v29
  %v72 = vunpack.c.l.b16 %v30
  %v73 = vunpack.c.h.b16 %v30
  %v74 = vunpack.c.l.b16 %v31
  %v75 = vunpack.c.h.b16 %v31
  %v76 = vunpack.c.l.b16 %v32
  %v77 = vunpack.c.h.b16 %v32
  %v78 = vunpack.c.l.b16 %v33
  %v79 = vunpack.c.h.b16 %v33
  %v80 = vunpack.c.l.b16 %v34
  %v81 = vunpack.c.h.b16 %v34
  %v82 = vunpack.c.l.b16 %v35
  %v83 = vunpack.c.h.b16 %v35
  %v84 = vunpack.c.l.b16 %v36
  %v85 = vunpack.c.h.b16 %v36
  %v86 = vunpack.c.l.b16 %v37
  %v87 = vunpack.c.h.b16 %v37
  %v88 = vunpack.c.l.b16 %v38
  %v89 = vunpack.c.h.b16 %v38
  %v90 = vunpack.c.l.b16 %v39
  %v91 = vunpack.c.h.b16 %v39
  %v92 = vunpack.c.l.b16 %v40
  %v93 = vunpack.c.h.b16 %v40
  %v94 = vunpack.c.l.b16 %v41
  %v95 = vunpack.c.h.b16 %v41
  %v96 = vpack.c.b16 %v66, %v64
  %v97 = vpack.c.b16 %v67, %v65
  %v98 = vpack.c.b16 %v70, %v68
  %v99 = vpack.c.b16 %v71, %v69
  %v100 = vpack.c.b16 %v74, %v72
  %v101 = vpack.c.b16 %v75, %v73
  %v102 = vpack.c.b16 %v78, %v76
  %v103 = vpack.c.b16 %v79, %v77
  %v104 = vpack.c.b16 %v82, %v80
  %v105 = vpack.c.b16 %v83, %v81
  %v106 = vpack.c.b16 %v86, %v84
  %v107 = vpack.c.b16 %v87, %v85
  %v108 = vpack.c.b16 %v90, %v88
  %v109 = vpack.c.b16 %v91, %v89
  %v110 = vpack.c.b16 %v94, %v92
  %v111 = vpack.c.b16 %v95, %v93
  %128 = vmatprep.subr.bf16.mxu0 %v111
  %129 = vmatpush1.bf16.msra.mxu0 %v110
  %130 = vmatprep.subr.bf16.mxu0 %v109
  %131 = vmatpush1.bf16.msra.mxu0 %v108
  %132 = vmatprep.subr.bf16.mxu0 %v107
  %133 = vmatpush1.bf16.msra.mxu0 %v106
  %134 = vmatprep.subr.bf16.mxu0 %v105
  %135 = vmatpush1.bf16.msra.mxu0 %v104
  %136 = vmatprep.subr.bf16.mxu0 %v103
  %137 = vmatpush1.bf16.msra.mxu0 %v102
  %138 = vmatprep.subr.bf16.mxu0 %v101
  %139 = vmatpush1.bf16.msra.mxu0 %v100
  %140 = vmatprep.subr.bf16.mxu0 %v99
  %141 = vmatpush1.bf16.msra.mxu0 %v98
  %142 = vmatprep.subr.bf16.mxu0 %v97
  %143 = vmatpush1.bf16.msra.mxu0 %v96
  %144 = vmatprep.subr.bf16.mxu0 0
  %145 = vmatpush2.bf16.msra.mxu0 0
  %146 = vmatprep.subr.bf16.mxu0 0
  %147 = vmatpush2.bf16.msra.mxu0 0
  %148 = vmatprep.subr.bf16.mxu0 0
  %149 = vmatpush2.bf16.msra.mxu0 0
  %150 = vmatprep.subr.bf16.mxu0 0
  %151 = vmatpush2.bf16.msra.mxu0 0
  %152 = vmatprep.subr.bf16.mxu0 0
  %153 = vmatpush2.bf16.msra.mxu0 0
  %154 = vmatprep.subr.bf16.mxu0 0
  %155 = vmatpush2.bf16.msra.mxu0 0
  %156 = vmatprep.subr.bf16.mxu0 0
  %157 = vmatpush2.bf16.msra.mxu0 0
  %158 = vmatprep.subr.bf16.mxu0 0
  %159 = vmatpush2.bf16.msra.mxu0 0
  %160 = vmatprep.mubr.bf16.mxu0 0
  %161 = vmatmul.mubr.bf16.gmra.mxu0 %v46
  %v162 = vpop.f32.mrf.mxu0
  %v163 = vadd.f32 0.0, %v162
  %v164 = vpop.f32.mrf.mxu0
  %v165 = vadd.f32 0.0, %v164
  %v166 = vpop.f32.mrf.mxu0
  %v167 = vadd.f32 0.0, %v166
  %v168 = vpop.f32.mrf.mxu0
  %v169 = vadd.f32 0.0, %v168
  %170 = vdwg.mxu0
  %171 = vst [vmem:[%s2] sm:$0xff] %v163
  %172 = vst [vmem:[%s2 + $0x8] sm:$0xff] %v165
  %173 = vst [vmem:[%s2 + $0x10] sm:$0xff] %v167
  %174 = vst [vmem:[%s2 + $0x18] sm:$0xff] %v169
  %v175 = vld [vmem:[%s3] sm:$0xff]
  %v176 = vld [vmem:[%s3 + $0x8] sm:$0xff]
  %v177 = vadd.f32 %v163, %v165
  %178 = vadd.xlane.f32.xlu0 %v177
  %v179 = vpop.xlane.xlu0 %178
  %v180 = vadd.f32 %v167, %v169
  %181 = vadd.xlane.f32.xlu0 %v180
  %v182 = vpop.xlane.xlu0 %181
  %v183 = vadd.f32 %v175, %v179
  %v184 = vadd.f32 %v176, %v182
  %vm185 = vcmask 7168
  %186 = vst.msk [vmem:[%s3] sm:$0xff] %vm185, %v183
  %187 = vst.msk [vmem:[%s3 + $0x8] sm:$0xff] %vm185, %v184
  %v188 = vld [vmem:[%s4] sm:$0xff]
  %v189 = vld [vmem:[%s4 + $0x8] sm:$0xff]
  %v190 = vmul.f32 %v163, %v163
  %v191 = vmul.f32 %v165, %v165
  %v192 = vmul.f32 %v167, %v167
  %v193 = vmul.f32 %v169, %v169
  %v194 = vadd.f32 %v190, %v191
  %195 = vadd.xlane.f32.xlu0 %v194
  %v196 = vpop.xlane.xlu0 %195
  %v197 = vadd.f32 %v192, %v193
  %198 = vadd.xlane.f32.xlu0 %v197
  %v199 = vpop.xlane.xlu0 %198
  %v200 = vadd.f32 %v188, %v196
  %v201 = vadd.f32 %v189, %v199
  %202 = vst.msk [vmem:[%s4] sm:$0xff] %vm185, %v200
  %203 = vst.msk [vmem:[%s4 + $0x8] sm:$0xff] %vm185, %v201
  // Predicated region
  $region14: #{nlayer_discriminator_forward.9} parent=0 // pred_check
    _
  $region15: #{nlayer_discriminator_forward.9} parent=0 // pred_check_branch
    %205 = sbr.rel (0) target = $region17
  $region16: #{nlayer_discriminator_forward.9} parent=0 // pred_region
    _
  $region17: #{nlayer_discriminator_forward.9} parent=0 // pred_fallthru
    _
  // Predicated region
  $region18: #{nlayer_discriminator_forward.9} parent=0 // pred_check
    _
  $region19: #{nlayer_discriminator_forward.9} parent=0 // pred_check_branch
    %207 = sbr.rel (0) target = $region21
  $region20: #{nlayer_discriminator_forward.9} parent=0 // pred_region
    _
  $region21: #{nlayer_discriminator_forward.9} parent=0 // pred_fallthru
    _
  // Predicated region
  $region22: #{nlayer_discriminator_forward.9} parent=0 // pred_check
    _
  $region23: #{nlayer_discriminator_forward.9} parent=0 // pred_check_branch
    %209 = sbr.rel (0) target = $region25
  $region24: #{nlayer_discriminator_forward.9} parent=0 // pred_region
    _
  $region25: #{nlayer_discriminator_forward.9} parent=0 // pred_fallthru
    _
  // Predicated region
  $region26: #{nlayer_discriminator_forward.9} parent=0 // pred_check
    _
  $region27: #{nlayer_discriminator_forward.9} parent=0 // pred_check_branch
    %211 = sbr.rel (0) target = $region29
  $region28: #{nlayer_discriminator_forward.9} parent=0 // pred_region
    _
  $region29: #{nlayer_discriminator_forward.9} parent=0 // pred_fallthru
    _
  // Predicated region
  $region30: #{nlayer_discriminator_forward.9} parent=0 // pred_check
    _
  $region31: #{nlayer_discriminator_forward.9} parent=0 // pred_check_branch
    %213 = sbr.rel (0) target = $region33
  $region32: #{nlayer_discriminator_forward.9} parent=0 // pred_region
    _
  $region33: #{nlayer_discriminator_forward.9} parent=0 // pred_fallthru
    _
  // Predicated region
  $region34: #{nlayer_discriminator_forward.9} parent=0 // pred_check
    _
  $region35: #{nlayer_discriminator_forward.9} parent=0 // pred_check_branch
    %215 = sbr.rel (0) target = $region37
  $region36: #{nlayer_discriminator_forward.9} parent=0 // pred_region
    _
  $region37: #{nlayer_discriminator_forward.9} parent=0 // pred_fallthru
    _

// kernel: nlayer_discriminator_forward.10
$region0: #{nlayer_discriminator_forward.10}
  #allocation0 [shape = 'u32[]', space=smem, size = 0x4, offset = 0x4, fixed_abs, tag = 'smem constant byte address 0x4 - core index']
  #allocation1 [shape = 'u32[144,128]{1,0:T(1,128)}', space=vmem, size = 0x12000, scoped, tag = 'internal scratch']
  %s0 = inlined_call_operand.vmem [shape: f32[16,1], index: 0, kind: input, shape index: {}]
  %s1 = inlined_call_operand.vmem [shape: f32[16,1], index: 1, kind: input, shape index: {}]
  %s2 = inlined_call_operand.vmem [shape: f32[16,1], index: 2, kind: input, shape index: {}]
  %s3 = inlined_call_operand.vmem [shape: f32[16,1], index: 3, kind: input, shape index: {}]
  %s4 = inlined_call_operand.vmem [shape: f32[16,256], index: 4, kind: input, shape index: {}]
  %s5 = inlined_call_operand.vmem [shape: bf16[16,256], index: 5, kind: output, shape index: {}]
  %s6 = sld [smem:[#allocation0]]
  $region30: #{nlayer_discriminator_forward.10} parent=0
    _
  %s8 = ssub.s32 1, %s6
  %s9 = scalar_select 0, %s8, %s6
  // Predicated region
  $region2: #{nlayer_discriminator_forward.10} parent=0 // pred_check
    _
  $region3: #{nlayer_discriminator_forward.10} parent=0 // pred_check_branch
    %11 = sbr.rel (0) target = $region5
  $region4: #{nlayer_discriminator_forward.10} parent=0 // pred_region
    _
  $region5: #{nlayer_discriminator_forward.10} parent=0 // pred_fallthru
    _
  // Predicated region
  $region6: #{nlayer_discriminator_forward.10} parent=0 // pred_check
    _
  $region7: #{nlayer_discriminator_forward.10} parent=0 // pred_check_branch
    %13 = sbr.rel (0) target = $region9
  $region8: #{nlayer_discriminator_forward.10} parent=0 // pred_region
    _
  $region9: #{nlayer_discriminator_forward.10} parent=0 // pred_fallthru
    _
  // Predicated region
  $region10: #{nlayer_discriminator_forward.10} parent=0 // pred_check
    _
  $region11: #{nlayer_discriminator_forward.10} parent=0 // pred_check_branch
    %15 = sbr.rel (0) target = $region13
  $region12: #{nlayer_discriminator_forward.10} parent=0 // pred_region
    _
  $region13: #{nlayer_discriminator_forward.10} parent=0 // pred_fallthru
    _
  // Predicated region
  $region14: #{nlayer_discriminator_forward.10} parent=0 // pred_check
    _
  $region15: #{nlayer_discriminator_forward.10} parent=0 // pred_check_branch
    %17 = sbr.rel (0) target = $region17
  $region16: #{nlayer_discriminator_forward.10} parent=0 // pred_region
    _
  $region17: #{nlayer_discriminator_forward.10} parent=0 // pred_fallthru
    _
  // Predicated region
  $region18: #{nlayer_discriminator_forward.10} parent=0 // pred_check
    _
  $region19: #{nlayer_discriminator_forward.10} parent=0 // pred_check_branch
    %19 = sbr.rel (0) target = $region21
  $region20: #{nlayer_discriminator_forward.10} parent=0 // pred_region
    _
  $region21: #{nlayer_discriminator_forward.10} parent=0 // pred_fallthru
    _
  %v20 = vld [vmem:[%s0] sm:$0xff]
  %v21 = vld [vmem:[%s0 + $0x8] sm:$0xff]
  %v22 = vmul.f32 %v20, 0.0061728396
  %v23 = vmul.f32 %v21, 0.0061728396
  %v24 = vld [vmem:[%s1] sm:$0xff]
  %v25 = vld [vmem:[%s1 + $0x8] sm:$0xff]
  %v26 = vmul.f32 %v24, 0.0061728396
  %v27 = vmul.f32 %v25, 0.0061728396
  %v28 = vmul.f32 %v22, %v22
  %v29 = vmul.f32 %v23, %v23
  %v30 = vsub.f32 %v26, %v28
  %v31 = vsub.f32 %v27, %v29
  %v32 = vld [vmem:[%s2] sm:$0xff]
  %v33 = vld [vmem:[%s2 + $0x8] sm:$0xff]
  %v34 = vadd.f32 %v30, 1e-05
  %v35 = vadd.f32 %v31, 1e-05
  %v36 = vrsqrt.pop %v34
  %v37 = vrsqrt.pop %v35
  %v38 = vmul.f32 %v32, %v36
  %v39 = vmul.f32 %v33, %v37
  %v40 = vld [vmem:[%s3] sm:$0xff]
  %v41 = vld [vmem:[%s3 + $0x8] sm:$0xff]
  %v42 = vmul.f32 %v22, %v38
  %v43 = vmul.f32 %v23, %v39
  %v44 = vsub.f32 %v40, %v42
  %v45 = vsub.f32 %v41, %v43
  %v46 = vld [vmem:[%s4] sm:$0xff]
  %v47 = vld [vmem:[%s4 + $0x8] sm:$0xff]
  %v48 = vld [vmem:[%s4 + $0x10] sm:$0xff]
  %v49 = vld [vmem:[%s4 + $0x18] sm:$0xff]
  %51 = vset.pattern.permute.xlu0 0
  %52 = vperm.xlu0 %51, %v38
  %v53 = vpop.permute.xlu0 %52
  %56 = vset.pattern.permute.xlu0 0
  %57 = vperm.xlu0 %56, %v39
  %v58 = vpop.permute.xlu0 %57
  %v60 = vmul.f32 %v46, %v53
  %v61 = vmul.f32 %v47, %v53
  %v62 = vmul.f32 %v48, %v58
  %v63 = vmul.f32 %v49, %v58
  %65 = vset.pattern.permute.xlu0 0
  %66 = vperm.xlu0 %65, %v44
  %v67 = vpop.permute.xlu0 %66
  %70 = vset.pattern.permute.xlu0 0
  %71 = vperm.xlu0 %70, %v45
  %v72 = vpop.permute.xlu0 %71
  %v74 = vadd.f32 %v60, %v67
  %v75 = vadd.f32 %v61, %v67
  %v76 = vadd.f32 %v62, %v72
  %v77 = vadd.f32 %v63, %v72
  %vm78 = vcmp.gt.f32.partialorder %v74, 0.0
  %vm79 = vcmp.gt.f32.partialorder %v75, 0.0
  %vm80 = vcmp.gt.f32.partialorder %v76, 0.0
  %vm81 = vcmp.gt.f32.partialorder %v77, 0.0
  %v82 = vmul.f32 %v74, 0.2
  %v83 = vmul.f32 %v75, 0.2
  %v84 = vmul.f32 %v76, 0.2
  %v85 = vmul.f32 %v77, 0.2
  %v86 = vsel %vm78, %v74, %v82
  %v87 = vsel %vm79, %v75, %v83
  %v88 = vsel %vm80, %v76, %v84
  %v89 = vsel %vm81, %v77, %v85
  %v90 = vpack.c.bf16 %v88, %v86
  %v91 = vpack.c.bf16 %v89, %v87
  %v94 = vunpack.c.l.b16 %v90
  %v95 = vunpack.c.l.b16 %v91
  %v96 = vunpack.c.h.b16 %v90
  %v97 = vunpack.c.h.b16 %v91
  %v98 = vpack.c.b16 %v95, %v94
  %v99 = vpack.c.b16 %v97, %v96
  %102 = vst [vmem:[%s5] sm:$0xff] %v98
  %103 = vst [vmem:[%s5 + $0x8] sm:$0xff] %v99
  // Predicated region
  $region22: #{nlayer_discriminator_forward.10} parent=0 // pred_check
    _
  $region23: #{nlayer_discriminator_forward.10} parent=0 // pred_check_branch
    %105 = sbr.rel (0) target = $region25
  $region24: #{nlayer_discriminator_forward.10} parent=0 // pred_region
    _
  $region25: #{nlayer_discriminator_forward.10} parent=0 // pred_fallthru
    _
  // Predicated region
  $region26: #{nlayer_discriminator_forward.10} parent=0 // pred_check
    _
  $region27: #{nlayer_discriminator_forward.10} parent=0 // pred_check_branch
    %107 = sbr.rel (0) target = $region29
  $region28: #{nlayer_discriminator_forward.10} parent=0 // pred_region
    _
  $region29: #{nlayer_discriminator_forward.10} parent=0 // pred_fallthru
    _

// kernel: nlayer_discriminator_forward.11
$region0: #{nlayer_discriminator_forward.11}
  #allocation0 [shape = 'u32[]', space=smem, size = 0x4, offset = 0x4, fixed_abs, tag = 'smem constant byte address 0x4 - core index']
  #allocation1 [shape = 'u32[144,128]{1,0:T(1,128)}', space=vmem, size = 0x12000, scoped, tag = 'internal scratch']
  %s0 = inlined_call_operand.vmem [shape: bf16[32,256], index: 0, kind: input, shape index: {}]
  %s1 = inlined_call_operand.vmem [shape: bf16[256,128], index: 1, kind: input, shape index: {}]
  %s2 = inlined_call_operand.vmem [shape: f32[32,128], index: 2, kind: output, shape index: {0}]
  %s3 = inlined_call_operand.vmem [shape: f32[32,1], index: 3, kind: output, shape index: {1}]
  %s4 = inlined_call_operand.vmem [shape: f32[32,1], index: 4, kind: output, shape index: {2}]
  %5 = xla_tuple %s2, %s3, %s4
  %s6 = sld [smem:[#allocation0]]
  $region38: #{nlayer_discriminator_forward.11} parent=0
    _
  %s8 = ssub.s32 1, %s6
  %s9 = scalar_select 0, %s8, %s6
  // Predicated region
  $region2: #{nlayer_discriminator_forward.11} parent=0 // pred_check
    _
  $region3: #{nlayer_discriminator_forward.11} parent=0 // pred_check_branch
    %11 = sbr.rel (0) target = $region5
  $region4: #{nlayer_discriminator_forward.11} parent=0 // pred_region
    _
  $region5: #{nlayer_discriminator_forward.11} parent=0 // pred_fallthru
    _
  // Predicated region
  $region6: #{nlayer_discriminator_forward.11} parent=0 // pred_check
    _
  $region7: #{nlayer_discriminator_forward.11} parent=0 // pred_check_branch
    %13 = sbr.rel (0) target = $region9
  $region8: #{nlayer_discriminator_forward.11} parent=0 // pred_region
    _
  $region9: #{nlayer_discriminator_forward.11} parent=0 // pred_fallthru
    _
  %p15 = scmp.eq.s32.totalorder 0, 0
  // Predicated region
  $region10: #{nlayer_discriminator_forward.11} parent=0 // pred_check
    %p16 = pneg %p15
  $region11: #{nlayer_discriminator_forward.11} parent=0 // pred_check_branch
    %18 = sbr.rel (%p16) target = $region13
  $region12: #{nlayer_discriminator_forward.11} parent=0 // pred_region
    %vm19 = vcmask 7168
    %20 = vst.msk [vmem:[%s3] sm:$0xff] %vm19, 0.0
    %21 = vst.msk [vmem:[%s3 + $0x8] sm:$0xff] %vm19, 0.0
    %22 = vst.msk [vmem:[%s3 + $0x10] sm:$0xff] %vm19, 0.0
    %23 = vst.msk [vmem:[%s3 + $0x18] sm:$0xff] %vm19, 0.0
    %24 = vst.msk [vmem:[%s4] sm:$0xff] %vm19, 0.0
    %25 = vst.msk [vmem:[%s4 + $0x8] sm:$0xff] %vm19, 0.0
    %26 = vst.msk [vmem:[%s4 + $0x10] sm:$0xff] %vm19, 0.0
    %27 = vst.msk [vmem:[%s4 + $0x18] sm:$0xff] %vm19, 0.0
  $region13: #{nlayer_discriminator_forward.11} parent=0 // pred_fallthru
    _
  %v28 = vld [vmem:[%s0] sm:$0xff]
  %v29 = vld [vmem:[%s0 + $0x8] sm:$0xff]
  %v30 = vld [vmem:[%s0 + $0x10] sm:$0xff]
  %v31 = vld [vmem:[%s0 + $0x18] sm:$0xff]
  %v32 = vld [vmem:[%s1] sm:$0xf]
  %v33 = vld [vmem:[%s1 + $0x4] sm:$0xf]
  %v34 = vld [vmem:[%s1 + $0x8] sm:$0xf]
  %v35 = vld [vmem:[%s1 + $0xc] sm:$0xf]
  %v36 = vld [vmem:[%s1 + $0x10] sm:$0xf]
  %v37 = vld [vmem:[%s1 + $0x14] sm:$0xf]
  %v38 = vld [vmem:[%s1 + $0x18] sm:$0xf]
  %v39 = vld [vmem:[%s1 + $0x1c] sm:$0xf]
  %v40 = vld [vmem:[%s1 + $0x20] sm:$0xf]
  %v41 = vld [vmem:[%s1 + $0x24] sm:$0xf]
  %v42 = vld [vmem:[%s1 + $0x28] sm:$0xf]
  %v43 = vld [vmem:[%s1 + $0x2c] sm:$0xf]
  %v44 = vld [vmem:[%s1 + $0x30] sm:$0xf]
  %v45 = vld [vmem:[%s1 + $0x34] sm:$0xf]
  %v46 = vld [vmem:[%s1 + $0x38] sm:$0xf]
  %v47 = vld [vmem:[%s1 + $0x3c] sm:$0xf]
  %v48 = vld [vmem:[%s1 + $0x40] sm:$0xf]
  %v49 = vld [vmem:[%s1 + $0x44] sm:$0xf]
  %v50 = vld [vmem:[%s1 + $0x48] sm:$0xf]
  %v51 = vld [vmem:[%s1 + $0x4c] sm:$0xf]
  %v52 = vld [vmem:[%s1 + $0x50] sm:$0xf]
  %v53 = vld [vmem:[%s1 + $0x54] sm:$0xf]
  %v54 = vld [vmem:[%s1 + $0x58] sm:$0xf]
  %v55 = vld [vmem:[%s1 + $0x5c] sm:$0xf]
  %v56 = vld [vmem:[%s1 + $0x60] sm:$0xf]
  %v57 = vld [vmem:[%s1 + $0x64] sm:$0xf]
  %v58 = vld [vmem:[%s1 + $0x68] sm:$0xf]
  %v59 = vld [vmem:[%s1 + $0x6c] sm:$0xf]
  %v60 = vld [vmem:[%s1 + $0x70] sm:$0xf]
  %v61 = vld [vmem:[%s1 + $0x74] sm:$0xf]
  %v62 = vld [vmem:[%s1 + $0x78] sm:$0xf]
  %v63 = vld [vmem:[%s1 + $0x7c] sm:$0xf]
  %v68 = vunpack.c.l.b16 %v28
  %v69 = vunpack.c.h.b16 %v28
  %v70 = vunpack.c.l.b16 %v29
  %v71 = vunpack.c.h.b16 %v29
  %v72 = vunpack.c.l.b16 %v30
  %v73 = vunpack.c.h.b16 %v30
  %v74 = vunpack.c.l.b16 %v31
  %v75 = vunpack.c.h.b16 %v31
  %v76 = vpack.c.b16 %v70, %v68
  %v77 = vpack.c.b16 %v71, %v69
  %v78 = vpack.c.b16 %v74, %v72
  %v79 = vpack.c.b16 %v75, %v73
  %v116 = vunpack.c.l.b16 %v32
  %v117 = vunpack.c.l.b16 %v33
  %v118 = vunpack.c.l.b16 %v34
  %v119 = vunpack.c.l.b16 %v35
  %v120 = vunpack.c.l.b16 %v36
  %v121 = vunpack.c.l.b16 %v37
  %v122 = vunpack.c.l.b16 %v38
  %v123 = vunpack.c.l.b16 %v39
  %v124 = vunpack.c.l.b16 %v40
  %v125 = vunpack.c.l.b16 %v41
  %v126 = vunpack.c.l.b16 %v42
  %v127 = vunpack.c.l.b16 %v43
  %v128 = vunpack.c.l.b16 %v44
  %v129 = vunpack.c.l.b16 %v45
  %v130 = vunpack.c.l.b16 %v46
  %v131 = vunpack.c.l.b16 %v47
  %v132 = vunpack.c.l.b16 %v48
  %v133 = vunpack.c.l.b16 %v49
  %v134 = vunpack.c.l.b16 %v50
  %v135 = vunpack.c.l.b16 %v51
  %v136 = vunpack.c.l.b16 %v52
  %v137 = vunpack.c.l.b16 %v53
  %v138 = vunpack.c.l.b16 %v54
  %v139 = vunpack.c.l.b16 %v55
  %v140 = vunpack.c.l.b16 %v56
  %v141 = vunpack.c.l.b16 %v57
  %v142 = vunpack.c.l.b16 %v58
  %v143 = vunpack.c.l.b16 %v59
  %v144 = vunpack.c.l.b16 %v60
  %v145 = vunpack.c.l.b16 %v61
  %v146 = vunpack.c.l.b16 %v62
  %v147 = vunpack.c.l.b16 %v63
  %v148 = vpack.c.b16 %v117, %v116
  %v149 = vpack.c.b16 %v119, %v118
  %v150 = vpack.c.b16 %v121, %v120
  %v151 = vpack.c.b16 %v123, %v122
  %v152 = vpack.c.b16 %v125, %v124
  %v153 = vpack.c.b16 %v127, %v126
  %v154 = vpack.c.b16 %v129, %v128
  %v155 = vpack.c.b16 %v131, %v130
  %v156 = vpack.c.b16 %v133, %v132
  %v157 = vpack.c.b16 %v135, %v134
  %v158 = vpack.c.b16 %v137, %v136
  %v159 = vpack.c.b16 %v139, %v138
  %v160 = vpack.c.b16 %v141, %v140
  %v161 = vpack.c.b16 %v143, %v142
  %v162 = vpack.c.b16 %v145, %v144
  %v163 = vpack.c.b16 %v147, %v146
  %180 = vmatprep.subr.bf16.mxu0 0
  %181 = vmatpush1.bf16.msra.mxu0 %v155
  %182 = vmatprep.subr.bf16.mxu0 0
  %183 = vmatpush1.bf16.msra.mxu0 %v154
  %184 = vmatprep.subr.bf16.mxu0 0
  %185 = vmatpush1.bf16.msra.mxu0 %v153
  %186 = vmatprep.subr.bf16.mxu0 0
  %187 = vmatpush1.bf16.msra.mxu0 %v152
  %188 = vmatprep.subr.bf16.mxu0 0
  %189 = vmatpush1.bf16.msra.mxu0 %v151
  %190 = vmatprep.subr.bf16.mxu0 0
  %191 = vmatpush1.bf16.msra.mxu0 %v150
  %192 = vmatprep.subr.bf16.mxu0 0
  %193 = vmatpush1.bf16.msra.mxu0 %v149
  %194 = vmatprep.subr.bf16.mxu0 0
  %195 = vmatpush1.bf16.msra.mxu0 %v148
  %196 = vmatprep.subr.bf16.mxu0 0
  %197 = vmatpush2.bf16.msra.mxu0 %v163
  %198 = vmatprep.subr.bf16.mxu0 0
  %199 = vmatpush2.bf16.msra.mxu0 %v162
  %200 = vmatprep.subr.bf16.mxu0 0
  %201 = vmatpush2.bf16.msra.mxu0 %v161
  %202 = vmatprep.subr.bf16.mxu0 0
  %203 = vmatpush2.bf16.msra.mxu0 %v160
  %204 = vmatprep.subr.bf16.mxu0 0
  %205 = vmatpush2.bf16.msra.mxu0 %v159
  %206 = vmatprep.subr.bf16.mxu0 0
  %207 = vmatpush2.bf16.msra.mxu0 %v158
  %208 = vmatprep.subr.bf16.mxu0 0
  %209 = vmatpush2.bf16.msra.mxu0 %v157
  %210 = vmatprep.subr.bf16.mxu0 0
  %211 = vmatpush2.bf16.msra.mxu0 %v156
  %212 = vmatprep.mubr.bf16.mxu0 %v77
  %213 = vmatmul.mubr.bf16.gmra.mxu0 %v76
  %v214 = vpop.f32.mrf.mxu0
  %v215 = vadd.f32 0.0, %v214
  %v216 = vpop.f32.mrf.mxu0
  %v217 = vpop.f32.mrf.mxu0
  %v218 = vadd.f32 0.0, %v217
  %v219 = vpop.f32.mrf.mxu0
  %220 = vmatprep.mubr.bf16.mxu0 %v79
  %221 = vmatmul.mubr.bf16.gmra.mxu0 %v78
  %v222 = vpop.f32.mrf.mxu0
  %v223 = vadd.f32 0.0, %v222
  %v224 = vpop.f32.mrf.mxu0
  %v225 = vpop.f32.mrf.mxu0
  %v226 = vadd.f32 0.0, %v225
  %v227 = vpop.f32.mrf.mxu0
  %228 = vdwg.mxu0
  %229 = vst [vmem:[%s2] sm:$0xff] %v215
  %230 = vst [vmem:[%s2 + $0x8] sm:$0xff] %v218
  %231 = vst [vmem:[%s2 + $0x10] sm:$0xff] %v223
  %232 = vst [vmem:[%s2 + $0x18] sm:$0xff] %v226
  %v233 = vld [vmem:[%s3] sm:$0xff]
  %v234 = vld [vmem:[%s3 + $0x8] sm:$0xff]
  %v235 = vld [vmem:[%s3 + $0x10] sm:$0xff]
  %v236 = vld [vmem:[%s3 + $0x18] sm:$0xff]
  %237 = vadd.xlane.f32.xlu0 %v215
  %v238 = vpop.xlane.xlu0 %237
  %239 = vadd.xlane.f32.xlu0 %v218
  %v240 = vpop.xlane.xlu0 %239
  %241 = vadd.xlane.f32.xlu0 %v223
  %v242 = vpop.xlane.xlu0 %241
  %243 = vadd.xlane.f32.xlu0 %v226
  %v244 = vpop.xlane.xlu0 %243
  %v245 = vadd.f32 %v233, %v238
  %v246 = vadd.f32 %v234, %v240
  %v247 = vadd.f32 %v235, %v242
  %v248 = vadd.f32 %v236, %v244
  %vm249 = vcmask 7168
  %250 = vst.msk [vmem:[%s3] sm:$0xff] %vm249, %v245
  %251 = vst.msk [vmem:[%s3 + $0x8] sm:$0xff] %vm249, %v246
  %252 = vst.msk [vmem:[%s3 + $0x10] sm:$0xff] %vm249, %v247
  %253 = vst.msk [vmem:[%s3 + $0x18] sm:$0xff] %vm249, %v248
  %v254 = vld [vmem:[%s4] sm:$0xff]
  %v255 = vld [vmem:[%s4 + $0x8] sm:$0xff]
  %v256 = vld [vmem:[%s4 + $0x10] sm:$0xff]
  %v257 = vld [vmem:[%s4 + $0x18] sm:$0xff]
  %v258 = vmul.f32 %v215, %v215
  %v259 = vmul.f32 %v218, %v218
  %v260 = vmul.f32 %v223, %v223
  %v261 = vmul.f32 %v226, %v226
  %262 = vadd.xlane.f32.xlu0 %v258
  %v263 = vpop.xlane.xlu0 %262
  %264 = vadd.xlane.f32.xlu0 %v259
  %v265 = vpop.xlane.xlu0 %264
  %266 = vadd.xlane.f32.xlu0 %v260
  %v267 = vpop.xlane.xlu0 %266
  %268 = vadd.xlane.f32.xlu0 %v261
  %v269 = vpop.xlane.xlu0 %268
  %v270 = vadd.f32 %v254, %v263
  %v271 = vadd.f32 %v255, %v265
  %v272 = vadd.f32 %v256, %v267
  %v273 = vadd.f32 %v257, %v269
  %274 = vst.msk [vmem:[%s4] sm:$0xff] %vm249, %v270
  %275 = vst.msk [vmem:[%s4 + $0x8] sm:$0xff] %vm249, %v271
  %276 = vst.msk [vmem:[%s4 + $0x10] sm:$0xff] %vm249, %v272
  %277 = vst.msk [vmem:[%s4 + $0x18] sm:$0xff] %vm249, %v273
  // Predicated region
  $region14: #{nlayer_discriminator_forward.11} parent=0 // pred_check
    _
  $region15: #{nlayer_discriminator_forward.11} parent=0 // pred_check_branch
    %279 = sbr.rel (0) target = $region17
  $region16: #{nlayer_discriminator_forward.11} parent=0 // pred_region
    _
  $region17: #{nlayer_discriminator_forward.11} parent=0 // pred_fallthru
    _
  // Predicated region
  $region18: #{nlayer_discriminator_forward.11} parent=0 // pred_check
    _
  $region19: #{nlayer_discriminator_forward.11} parent=0 // pred_check_branch
    %281 = sbr.rel (0) target = $region21
  $region20: #{nlayer_discriminator_forward.11} parent=0 // pred_region
    _
  $region21: #{nlayer_discriminator_forward.11} parent=0 // pred_fallthru
    _
  // Predicated region
  $region22: #{nlayer_discriminator_forward.11} parent=0 // pred_check
    _
  $region23: #{nlayer_discriminator_forward.11} parent=0 // pred_check_branch
    %283 = sbr.rel (0) target = $region25
  $region24: #{nlayer_discriminator_forward.11} parent=0 // pred_region
    _
  $region25: #{nlayer_discriminator_forward.11} parent=0 // pred_fallthru
    _
  // Predicated region
  $region26: #{nlayer_discriminator_forward.11} parent=0 // pred_check
    _
  $region27: #{nlayer_discriminator_forward.11} parent=0 // pred_check_branch
    %285 = sbr.rel (0) target = $region29
  $region28: #{nlayer_discriminator_forward.11} parent=0 // pred_region
    _
  $region29: #{nlayer_discriminator_forward.11} parent=0 // pred_fallthru
    _
  // Predicated region
  $region30: #{nlayer_discriminator_forward.11} parent=0 // pred_check
    _
  $region31: #{nlayer_discriminator_forward.11} parent=0 // pred_check_branch
    %287 = sbr.rel (0) target = $region33
  $region32: #{nlayer_discriminator_forward.11} parent=0 // pred_region
    _
  $region33: #{nlayer_discriminator_forward.11} parent=0 // pred_fallthru
    _
  // Predicated region
  $region34: #{nlayer_discriminator_forward.11} parent=0 // pred_check
    _
  $region35: #{nlayer_discriminator_forward.11} parent=0 // pred_check_branch
    %289 = sbr.rel (0) target = $region37
  $region36: #{nlayer_discriminator_forward.11} parent=0 // pred_region
    _
  $region37: #{nlayer_discriminator_forward.11} parent=0 // pred_fallthru
    _

// kernel: nlayer_discriminator_forward.12
$region0: #{nlayer_discriminator_forward.12}
  #allocation0 [shape = 'u32[]', space=smem, size = 0x4, offset = 0x4, fixed_abs, tag = 'smem constant byte address 0x4 - core index']
  #allocation1 [shape = 'u32[144,128]{1,0:T(1,128)}', space=vmem, size = 0x12000, scoped, tag = 'internal scratch']
  %s0 = inlined_call_operand.vmem [shape: f32[32,1], index: 0, kind: input, shape index: {}]
  %s1 = inlined_call_operand.vmem [shape: f32[32,1], index: 1, kind: input, shape index: {}]
  %s2 = inlined_call_operand.vmem [shape: f32[32,1], index: 2, kind: input, shape index: {}]
  %s3 = inlined_call_operand.vmem [shape: f32[32,1], index: 3, kind: input, shape index: {}]
  %s4 = inlined_call_operand.vmem [shape: f32[32,128], index: 4, kind: input, shape index: {}]
  %s5 = inlined_call_operand.vmem [shape: bf16[32,128], index: 5, kind: output, shape index: {}]
  %s6 = sld [smem:[#allocation0]]
  $region30: #{nlayer_discriminator_forward.12} parent=0
    _
  %s8 = ssub.s32 1, %s6
  %s9 = scalar_select 0, %s8, %s6
  // Predicated region
  $region2: #{nlayer_discriminator_forward.12} parent=0 // pred_check
    _
  $region3: #{nlayer_discriminator_forward.12} parent=0 // pred_check_branch
    %11 = sbr.rel (0) target = $region5
  $region4: #{nlayer_discriminator_forward.12} parent=0 // pred_region
    _
  $region5: #{nlayer_discriminator_forward.12} parent=0 // pred_fallthru
    _
  // Predicated region
  $region6: #{nlayer_discriminator_forward.12} parent=0 // pred_check
    _
  $region7: #{nlayer_discriminator_forward.12} parent=0 // pred_check_branch
    %13 = sbr.rel (0) target = $region9
  $region8: #{nlayer_discriminator_forward.12} parent=0 // pred_region
    _
  $region9: #{nlayer_discriminator_forward.12} parent=0 // pred_fallthru
    _
  // Predicated region
  $region10: #{nlayer_discriminator_forward.12} parent=0 // pred_check
    _
  $region11: #{nlayer_discriminator_forward.12} parent=0 // pred_check_branch
    %15 = sbr.rel (0) target = $region13
  $region12: #{nlayer_discriminator_forward.12} parent=0 // pred_region
    _
  $region13: #{nlayer_discriminator_forward.12} parent=0 // pred_fallthru
    _
  // Predicated region
  $region14: #{nlayer_discriminator_forward.12} parent=0 // pred_check
    _
  $region15: #{nlayer_discriminator_forward.12} parent=0 // pred_check_branch
    %17 = sbr.rel (0) target = $region17
  $region16: #{nlayer_discriminator_forward.12} parent=0 // pred_region
    _
  $region17: #{nlayer_discriminator_forward.12} parent=0 // pred_fallthru
    _
  // Predicated region
  $region18: #{nlayer_discriminator_forward.12} parent=0 // pred_check
    _
  $region19: #{nlayer_discriminator_forward.12} parent=0 // pred_check_branch
    %19 = sbr.rel (0) target = $region21
  $region20: #{nlayer_discriminator_forward.12} parent=0 // pred_region
    _
  $region21: #{nlayer_discriminator_forward.12} parent=0 // pred_fallthru
    _
  %v20 = vld [vmem:[%s0] sm:$0xff]
  %v21 = vld [vmem:[%s0 + $0x8] sm:$0xff]
  %v22 = vld [vmem:[%s0 + $0x10] sm:$0xff]
  %v23 = vld [vmem:[%s0 + $0x18] sm:$0xff]
  %v24 = vmul.f32 %v20, 0.02
  %v25 = vmul.f32 %v21, 0.02
  %v26 = vmul.f32 %v22, 0.02
  %v27 = vmul.f32 %v23, 0.02
  %v28 = vld [vmem:[%s1] sm:$0xff]
  %v29 = vld [vmem:[%s1 + $0x8] sm:$0xff]
  %v30 = vld [vmem:[%s1 + $0x10] sm:$0xff]
  %v31 = vld [vmem:[%s1 + $0x18] sm:$0xff]
  %v32 = vmul.f32 %v28, 0.02
  %v33 = vmul.f32 %v29, 0.02
  %v34 = vmul.f32 %v30, 0.02
  %v35 = vmul.f32 %v31, 0.02
  %v36 = vmul.f32 %v24, %v24
  %v37 = vmul.f32 %v25, %v25
  %v38 = vmul.f32 %v26, %v26
  %v39 = vmul.f32 %v27, %v27
  %v40 = vsub.f32 %v32, %v36
  %v41 = vsub.f32 %v33, %v37
  %v42 = vsub.f32 %v34, %v38
  %v43 = vsub.f32 %v35, %v39
  %v44 = vld [vmem:[%s2] sm:$0xff]
  %v45 = vld [vmem:[%s2 + $0x8] sm:$0xff]
  %v46 = vld [vmem:[%s2 + $0x10] sm:$0xff]
  %v47 = vld [vmem:[%s2 + $0x18] sm:$0xff]
  %v48 = vadd.f32 %v40, 1e-05
  %v49 = vadd.f32 %v41, 1e-05
  %v50 = vadd.f32 %v42, 1e-05
  %v51 = vadd.f32 %v43, 1e-05
  %v52 = vrsqrt.pop %v48
  %v53 = vrsqrt.pop %v49
  %v54 = vrsqrt.pop %v50
  %v55 = vrsqrt.pop %v51
  %v56 = vmul.f32 %v44, %v52
  %v57 = vmul.f32 %v45, %v53
  %v58 = vmul.f32 %v46, %v54
  %v59 = vmul.f32 %v47, %v55
  %v60 = vld [vmem:[%s3] sm:$0xff]
  %v61 = vld [vmem:[%s3 + $0x8] sm:$0xff]
  %v62 = vld [vmem:[%s3 + $0x10] sm:$0xff]
  %v63 = vld [vmem:[%s3 + $0x18] sm:$0xff]
  %v64 = vmul.f32 %v24, %v56
  %v65 = vmul.f32 %v25, %v57
  %v66 = vmul.f32 %v26, %v58
  %v67 = vmul.f32 %v27, %v59
  %v68 = vsub.f32 %v60, %v64
  %v69 = vsub.f32 %v61, %v65
  %v70 = vsub.f32 %v62, %v66
  %v71 = vsub.f32 %v63, %v67
  %v72 = vld [vmem:[%s4] sm:$0xff]
  %v73 = vld [vmem:[%s4 + $0x8] sm:$0xff]
  %v74 = vld [vmem:[%s4 + $0x10] sm:$0xff]
  %v75 = vld [vmem:[%s4 + $0x18] sm:$0xff]
  %77 = vset.pattern.permute.xlu0 0
  %78 = vperm.xlu0 %77, %v56
  %v79 = vpop.permute.xlu0 %78
  %82 = vset.pattern.permute.xlu0 0
  %83 = vperm.xlu0 %82, %v57
  %v84 = vpop.permute.xlu0 %83
  %87 = vset.pattern.permute.xlu0 0
  %88 = vperm.xlu0 %87, %v58
  %v89 = vpop.permute.xlu0 %88
  %92 = vset.pattern.permute.xlu0 0
  %93 = vperm.xlu0 %92, %v59
  %v94 = vpop.permute.xlu0 %93
  %v96 = vmul.f32 %v72, %v79
  %v97 = vmul.f32 %v73, %v84
  %v98 = vmul.f32 %v74, %v89
  %v99 = vmul.f32 %v75, %v94
  %101 = vset.pattern.permute.xlu0 0
  %102 = vperm.xlu0 %101, %v68
  %v103 = vpop.permute.xlu0 %102
  %106 = vset.pattern.permute.xlu0 0
  %107 = vperm.xlu0 %106, %v69
  %v108 = vpop.permute.xlu0 %107
  %111 = vset.pattern.permute.xlu0 0
  %112 = vperm.xlu0 %111, %v70
  %v113 = vpop.permute.xlu0 %112
  %116 = vset.pattern.permute.xlu0 0
  %117 = vperm.xlu0 %116, %v71
  %v118 = vpop.permute.xlu0 %117
  %v120 = vadd.f32 %v96, %v103
  %v121 = vadd.f32 %v97, %v108
  %v122 = vadd.f32 %v98, %v113
  %v123 = vadd.f32 %v99, %v118
  %vm124 = vcmp.gt.f32.partialorder %v120, 0.0
  %vm125 = vcmp.gt.f32.partialorder %v121, 0.0
  %vm126 = vcmp.gt.f32.partialorder %v122, 0.0
  %vm127 = vcmp.gt.f32.partialorder %v123, 0.0
  %v128 = vmul.f32 %v120, 0.2
  %v129 = vmul.f32 %v121, 0.2
  %v130 = vmul.f32 %v122, 0.2
  %v131 = vmul.f32 %v123, 0.2
  %v132 = vsel %vm124, %v120, %v128
  %v133 = vsel %vm125, %v121, %v129
  %v134 = vsel %vm126, %v122, %v130
  %v135 = vsel %vm127, %v123, %v131
  %v136 = vpack.c.bf16 %v133, %v132
  %v137 = vpack.c.bf16 %v135, %v134
  %v140 = vunpack.c.l.b16 %v136
  %v141 = vunpack.c.h.b16 %v136
  %v142 = vunpack.c.l.b16 %v137
  %v143 = vunpack.c.h.b16 %v137
  %v144 = vpack.c.b16 %v140, %v140
  %v145 = vpack.c.b16 %v141, %v141
  %v146 = vpack.c.b16 %v142, %v142
  %v147 = vpack.c.b16 %v143, %v143
  %152 = vst [vmem:[%s5] sm:$0xf] %v144
  %153 = vst [vmem:[%s5 + $0x4] sm:$0xf] %v145
  %154 = vst [vmem:[%s5 + $0x8] sm:$0xf] %v146
  %155 = vst [vmem:[%s5 + $0xc] sm:$0xf] %v147
  // Predicated region
  $region22: #{nlayer_discriminator_forward.12} parent=0 // pred_check
    _
  $region23: #{nlayer_discriminator_forward.12} parent=0 // pred_check_branch
    %157 = sbr.rel (0) target = $region25
  $region24: #{nlayer_discriminator_forward.12} parent=0 // pred_region
    _
  $region25: #{nlayer_discriminator_forward.12} parent=0 // pred_fallthru
    _
  // Predicated region
  $region26: #{nlayer_discriminator_forward.12} parent=0 // pred_check
    _
  $region27: #{nlayer_discriminator_forward.12} parent=0 // pred_check_branch
    %159 = sbr.rel (0) target = $region29
  $region28: #{nlayer_discriminator_forward.12} parent=0 // pred_region
    _
  $region29: #{nlayer_discriminator_forward.12} parent=0 // pred_fallthru
    _

// kernel: nlayer_discriminator_forward.13
$region0: #{nlayer_discriminator_forward.13}
  #allocation0 [shape = 'u32[]', space=smem, size = 0x4, offset = 0x4, fixed_abs, tag = 'smem constant byte address 0x4 - core index']
  #allocation1 [shape = 'u32[144,128]{1,0:T(1,128)}', space=vmem, size = 0x12000, scoped, tag = 'internal scratch']
  %s0 = inlined_call_operand.vmem [shape: bf16[64,512], index: 0, kind: input, shape index: {}]
  %s1 = inlined_call_operand.vmem [shape: bf16[512,128], index: 1, kind: input, shape index: {}]
  %s2 = inlined_call_operand.vmem [shape: f32[64,128], index: 2, kind: output, shape index: {0}]
  %s3 = inlined_call_operand.vmem [shape: f32[64,1], index: 3, kind: output, shape index: {1}]
  %s4 = inlined_call_operand.vmem [shape: f32[64,1], index: 4, kind: output, shape index: {2}]
  %5 = xla_tuple %s2, %s3, %s4
  %s6 = sld [smem:[#allocation0]]
  $region38: #{nlayer_discriminator_forward.13} parent=0
    _
  %s8 = ssub.s32 1, %s6
  %s9 = scalar_select 0, %s8, %s6
  // Predicated region
  $region2: #{nlayer_discriminator_forward.13} parent=0 // pred_check
    _
  $region3: #{nlayer_discriminator_forward.13} parent=0 // pred_check_branch
    %11 = sbr.rel (0) target = $region5
  $region4: #{nlayer_discriminator_forward.13} parent=0 // pred_region
    _
  $region5: #{nlayer_discriminator_forward.13} parent=0 // pred_fallthru
    _
  // Predicated region
  $region6: #{nlayer_discriminator_forward.13} parent=0 // pred_check
    _
  $region7: #{nlayer_discriminator_forward.13} parent=0 // pred_check_branch
    %13 = sbr.rel (0) target = $region9
  $region8: #{nlayer_discriminator_forward.13} parent=0 // pred_region
    _
  $region9: #{nlayer_discriminator_forward.13} parent=0 // pred_fallthru
    _
  %p15 = scmp.eq.s32.totalorder 0, 0
  // Predicated region
  $region10: #{nlayer_discriminator_forward.13} parent=0 // pred_check
    %p16 = pneg %p15
  $region11: #{nlayer_discriminator_forward.13} parent=0 // pred_check_branch
    %18 = sbr.rel (%p16) target = $region13
  $region12: #{nlayer_discriminator_forward.13} parent=0 // pred_region
    %vm19 = vcmask 7168
    %20 = vst.msk [vmem:[%s3] sm:$0xff] %vm19, 0.0
    %21 = vst.msk [vmem:[%s3 + $0x8] sm:$0xff] %vm19, 0.0
    %22 = vst.msk [vmem:[%s3 + $0x10] sm:$0xff] %vm19, 0.0
    %23 = vst.msk [vmem:[%s3 + $0x18] sm:$0xff] %vm19, 0.0
    %24 = vst.msk [vmem:[%s3 + $0x20] sm:$0xff] %vm19, 0.0
    %25 = vst.msk [vmem:[%s3 + $0x28] sm:$0xff] %vm19, 0.0
    %26 = vst.msk [vmem:[%s3 + $0x30] sm:$0xff] %vm19, 0.0
    %27 = vst.msk [vmem:[%s3 + $0x38] sm:$0xff] %vm19, 0.0
    %28 = vst.msk [vmem:[%s4] sm:$0xff] %vm19, 0.0
    %29 = vst.msk [vmem:[%s4 + $0x8] sm:$0xff] %vm19, 0.0
    %30 = vst.msk [vmem:[%s4 + $0x10] sm:$0xff] %vm19, 0.0
    %31 = vst.msk [vmem:[%s4 + $0x18] sm:$0xff] %vm19, 0.0
    %32 = vst.msk [vmem:[%s4 + $0x20] sm:$0xff] %vm19, 0.0
    %33 = vst.msk [vmem:[%s4 + $0x28] sm:$0xff] %vm19, 0.0
    %34 = vst.msk [vmem:[%s4 + $0x30] sm:$0xff] %vm19, 0.0
    %35 = vst.msk [vmem:[%s4 + $0x38] sm:$0xff] %vm19, 0.0
  $region13: #{nlayer_discriminator_forward.13} parent=0 // pred_fallthru
    _
  %v36 = vld [vmem:[%s0] sm:$0xff]
  %v37 = vld [vmem:[%s0 + $0x8] sm:$0xff]
  %v38 = vld [vmem:[%s0 + $0x10] sm:$0xff]
  %v39 = vld [vmem:[%s0 + $0x18] sm:$0xff]
  %v40 = vld [vmem:[%s0 + $0x20] sm:$0xff]
  %v41 = vld [vmem:[%s0 + $0x28] sm:$0xff]
  %v42 = vld [vmem:[%s0 + $0x30] sm:$0xff]
  %v43 = vld [vmem:[%s0 + $0x38] sm:$0xff]
  %v44 = vld [vmem:[%s0 + $0x40] sm:$0xff]
  %v45 = vld [vmem:[%s0 + $0x48] sm:$0xff]
  %v46 = vld [vmem:[%s0 + $0x50] sm:$0xff]
  %v47 = vld [vmem:[%s0 + $0x58] sm:$0xff]
  %v48 = vld [vmem:[%s0 + $0x60] sm:$0xff]
  %v49 = vld [vmem:[%s0 + $0x68] sm:$0xff]
  %v50 = vld [vmem:[%s0 + $0x70] sm:$0xff]
  %v51 = vld [vmem:[%s0 + $0x78] sm:$0xff]
  %v52 = vld [vmem:[%s1] sm:$0xf]
  %v53 = vld [vmem:[%s1 + $0x4] sm:$0xf]
  %v54 = vld [vmem:[%s1 + $0x8] sm:$0xf]
  %v55 = vld [vmem:[%s1 + $0xc] sm:$0xf]
  %v56 = vld [vmem:[%s1 + $0x10] sm:$0xf]
  %v57 = vld [vmem:[%s1 + $0x14] sm:$0xf]
  %v58 = vld [vmem:[%s1 + $0x18] sm:$0xf]
  %v59 = vld [vmem:[%s1 + $0x1c] sm:$0xf]
  %v60 = vld [vmem:[%s1 + $0x20] sm:$0xf]
  %v61 = vld [vmem:[%s1 + $0x24] sm:$0xf]
  %v62 = vld [vmem:[%s1 + $0x28] sm:$0xf]
  %v63 = vld [vmem:[%s1 + $0x2c] sm:$0xf]
  %v64 = vld [vmem:[%s1 + $0x30] sm:$0xf]
  %v65 = vld [vmem:[%s1 + $0x34] sm:$0xf]
  %v66 = vld [vmem:[%s1 + $0x38] sm:$0xf]
  %v67 = vld [vmem:[%s1 + $0x3c] sm:$0xf]
  %v68 = vld [vmem:[%s1 + $0x40] sm:$0xf]
  %v69 = vld [vmem:[%s1 + $0x44] sm:$0xf]
  %v70 = vld [vmem:[%s1 + $0x48] sm:$0xf]
  %v71 = vld [vmem:[%s1 + $0x4c] sm:$0xf]
  %v72 = vld [vmem:[%s1 + $0x50] sm:$0xf]
  %v73 = vld [vmem:[%s1 + $0x54] sm:$0xf]
  %v74 = vld [vmem:[%s1 + $0x58] sm:$0xf]
  %v75 = vld [vmem:[%s1 + $0x5c] sm:$0xf]
  %v76 = vld [vmem:[%s1 + $0x60] sm:$0xf]
  %v77 = vld [vmem:[%s1 + $0x64] sm:$0xf]
  %v78 = vld [vmem:[%s1 + $0x68] sm:$0xf]
  %v79 = vld [vmem:[%s1 + $0x6c] sm:$0xf]
  %v80 = vld [vmem:[%s1 + $0x70] sm:$0xf]
  %v81 = vld [vmem:[%s1 + $0x74] sm:$0xf]
  %v82 = vld [vmem:[%s1 + $0x78] sm:$0xf]
  %v83 = vld [vmem:[%s1 + $0x7c] sm:$0xf]
  %v84 = vld [vmem:[%s1 + $0x80] sm:$0xf]
  %v85 = vld [vmem:[%s1 + $0x84] sm:$0xf]
  %v86 = vld [vmem:[%s1 + $0x88] sm:$0xf]
  %v87 = vld [vmem:[%s1 + $0x8c] sm:$0xf]
  %v88 = vld [vmem:[%s1 + $0x90] sm:$0xf]
  %v89 = vld [vmem:[%s1 + $0x94] sm:$0xf]
  %v90 = vld [vmem:[%s1 + $0x98] sm:$0xf]
  %v91 = vld [vmem:[%s1 + $0x9c] sm:$0xf]
  %v92 = vld [vmem:[%s1 + $0xa0] sm:$0xf]
  %v93 = vld [vmem:[%s1 + $0xa4] sm:$0xf]
  %v94 = vld [vmem:[%s1 + $0xa8] sm:$0xf]
  %v95 = vld [vmem:[%s1 + $0xac] sm:$0xf]
  %v96 = vld [vmem:[%s1 + $0xb0] sm:$0xf]
  %v97 = vld [vmem:[%s1 + $0xb4] sm:$0xf]
  %v98 = vld [vmem:[%s1 + $0xb8] sm:$0xf]
  %v99 = vld [vmem:[%s1 + $0xbc] sm:$0xf]
  %v100 = vld [vmem:[%s1 + $0xc0] sm:$0xf]
  %v101 = vld [vmem:[%s1 + $0xc4] sm:$0xf]
  %v102 = vld [vmem:[%s1 + $0xc8] sm:$0xf]
  %v103 = vld [vmem:[%s1 + $0xcc] sm:$0xf]
  %v104 = vld [vmem:[%s1 + $0xd0] sm:$0xf]
  %v105 = vld [vmem:[%s1 + $0xd4] sm:$0xf]
  %v106 = vld [vmem:[%s1 + $0xd8] sm:$0xf]
  %v107 = vld [vmem:[%s1 + $0xdc] sm:$0xf]
  %v108 = vld [vmem:[%s1 + $0xe0] sm:$0xf]
  %v109 = vld [vmem:[%s1 + $0xe4] sm:$0xf]
  %v110 = vld [vmem:[%s1 + $0xe8] sm:$0xf]
  %v111 = vld [vmem:[%s1 + $0xec] sm:$0xf]
  %v112 = vld [vmem:[%s1 + $0xf0] sm:$0xf]
  %v113 = vld [vmem:[%s1 + $0xf4] sm:$0xf]
  %v114 = vld [vmem:[%s1 + $0xf8] sm:$0xf]
  %v115 = vld [vmem:[%s1 + $0xfc] sm:$0xf]
  %v132 = vunpack.c.l.b16 %v36
  %v133 = vunpack.c.h.b16 %v36
  %v134 = vunpack.c.l.b16 %v37
  %v135 = vunpack.c.h.b16 %v37
  %v136 = vunpack.c.l.b16 %v38
  %v137 = vunpack.c.h.b16 %v38
  %v138 = vunpack.c.l.b16 %v39
  %v139 = vunpack.c.h.b16 %v39
  %v140 = vunpack.c.l.b16 %v40
  %v141 = vunpack.c.h.b16 %v40
  %v142 = vunpack.c.l.b16 %v41
  %v143 = vunpack.c.h.b16 %v41
  %v144 = vunpack.c.l.b16 %v42
  %v145 = vunpack.c.h.b16 %v42
  %v146 = vunpack.c.l.b16 %v43
  %v147 = vunpack.c.h.b16 %v43
  %v148 = vunpack.c.l.b16 %v44
  %v149 = vunpack.c.h.b16 %v44
  %v150 = vunpack.c.l.b16 %v45
  %v151 = vunpack.c.h.b16 %v45
  %v152 = vunpack.c.l.b16 %v46
  %v153 = vunpack.c.h.b16 %v46
  %v154 = vunpack.c.l.b16 %v47
  %v155 = vunpack.c.h.b16 %v47
  %v156 = vunpack.c.l.b16 %v48
  %v157 = vunpack.c.h.b16 %v48
  %v158 = vunpack.c.l.b16 %v49
  %v159 = vunpack.c.h.b16 %v49
  %v160 = vunpack.c.l.b16 %v50
  %v161 = vunpack.c.h.b16 %v50
  %v162 = vunpack.c.l.b16 %v51
  %v163 = vunpack.c.h.b16 %v51
  %v164 = vpack.c.b16 %v136, %v132
  %v165 = vpack.c.b16 %v137, %v133
  %v166 = vpack.c.b16 %v138, %v134
  %v167 = vpack.c.b16 %v139, %v135
  %v168 = vpack.c.b16 %v144, %v140
  %v169 = vpack.c.b16 %v145, %v141
  %v170 = vpack.c.b16 %v146, %v142
  %v171 = vpack.c.b16 %v147, %v143
  %v172 = vpack.c.b16 %v152, %v148
  %v173 = vpack.c.b16 %v153, %v149
  %v174 = vpack.c.b16 %v154, %v150
  %v175 = vpack.c.b16 %v155, %v151
  %v176 = vpack.c.b16 %v160, %v156
  %v177 = vpack.c.b16 %v161, %v157
  %v178 = vpack.c.b16 %v162, %v158
  %v179 = vpack.c.b16 %v163, %v159
  %v260 = vunpack.c.l.b16 %v52
  %v261 = vunpack.c.l.b16 %v53
  %v262 = vunpack.c.l.b16 %v54
  %v263 = vunpack.c.l.b16 %v55
  %v264 = vunpack.c.l.b16 %v56
  %v265 = vunpack.c.l.b16 %v57
  %v266 = vunpack.c.l.b16 %v58
  %v267 = vunpack.c.l.b16 %v59
  %v268 = vunpack.c.l.b16 %v60
  %v269 = vunpack.c.l.b16 %v61
  %v270 = vunpack.c.l.b16 %v62
  %v271 = vunpack.c.l.b16 %v63
  %v272 = vunpack.c.l.b16 %v64
  %v273 = vunpack.c.l.b16 %v65
  %v274 = vunpack.c.l.b16 %v66
  %v275 = vunpack.c.l.b16 %v67
  %v276 = vunpack.c.l.b16 %v68
  %v277 = vunpack.c.l.b16 %v69
  %v278 = vunpack.c.l.b16 %v70
  %v279 = vunpack.c.l.b16 %v71
  %v280 = vunpack.c.l.b16 %v72
  %v281 = vunpack.c.l.b16 %v73
  %v282 = vunpack.c.l.b16 %v74
  %v283 = vunpack.c.l.b16 %v75
  %v284 = vunpack.c.l.b16 %v76
  %v285 = vunpack.c.l.b16 %v77
  %v286 = vunpack.c.l.b16 %v78
  %v287 = vunpack.c.l.b16 %v79
  %v288 = vunpack.c.l.b16 %v80
  %v289 = vunpack.c.l.b16 %v81
  %v290 = vunpack.c.l.b16 %v82
  %v291 = vunpack.c.l.b16 %v83
  %v292 = vunpack.c.l.b16 %v84
  %v293 = vunpack.c.l.b16 %v85
  %v294 = vunpack.c.l.b16 %v86
  %v295 = vunpack.c.l.b16 %v87
  %v296 = vunpack.c.l.b16 %v88
  %v297 = vunpack.c.l.b16 %v89
  %v298 = vunpack.c.l.b16 %v90
  %v299 = vunpack.c.l.b16 %v91
  %v300 = vunpack.c.l.b16 %v92
  %v301 = vunpack.c.l.b16 %v93
  %v302 = vunpack.c.l.b16 %v94
  %v303 = vunpack.c.l.b16 %v95
  %v304 = vunpack.c.l.b16 %v96
  %v305 = vunpack.c.l.b16 %v97
  %v306 = vunpack.c.l.b16 %v98
  %v307 = vunpack.c.l.b16 %v99
  %v308 = vunpack.c.l.b16 %v100
  %v309 = vunpack.c.l.b16 %v101
  %v310 = vunpack.c.l.b16 %v102
  %v311 = vunpack.c.l.b16 %v103
  %v312 = vunpack.c.l.b16 %v104
  %v313 = vunpack.c.l.b16 %v105
  %v314 = vunpack.c.l.b16 %v106
  %v315 = vunpack.c.l.b16 %v107
  %v316 = vunpack.c.l.b16 %v108
  %v317 = vunpack.c.l.b16 %v109
  %v318 = vunpack.c.l.b16 %v110
  %v319 = vunpack.c.l.b16 %v111
  %v320 = vunpack.c.l.b16 %v112
  %v321 = vunpack.c.l.b16 %v113
  %v322 = vunpack.c.l.b16 %v114
  %v323 = vunpack.c.l.b16 %v115
  %v324 = vpack.c.b16 %v261, %v260
  %v325 = vpack.c.b16 %v263, %v262
  %v326 = vpack.c.b16 %v265, %v264
  %v327 = vpack.c.b16 %v267, %v266
  %v328 = vpack.c.b16 %v269, %v268
  %v329 = vpack.c.b16 %v271, %v270
  %v330 = vpack.c.b16 %v273, %v272
  %v331 = vpack.c.b16 %v275, %v274
  %v332 = vpack.c.b16 %v277, %v276
  %v333 = vpack.c.b16 %v279, %v278
  %v334 = vpack.c.b16 %v281, %v280
  %v335 = vpack.c.b16 %v283, %v282
  %v336 = vpack.c.b16 %v285, %v284
  %v337 = vpack.c.b16 %v287, %v286
  %v338 = vpack.c.b16 %v289, %v288
  %v339 = vpack.c.b16 %v291, %v290
  %v340 = vpack.c.b16 %v293, %v292
  %v341 = vpack.c.b16 %v295, %v294
  %v342 = vpack.c.b16 %v297, %v296
  %v343 = vpack.c.b16 %v299, %v298
  %v344 = vpack.c.b16 %v301, %v300
  %v345 = vpack.c.b16 %v303, %v302
  %v346 = vpack.c.b16 %v305, %v304
  %v347 = vpack.c.b16 %v307, %v306
  %v348 = vpack.c.b16 %v309, %v308
  %v349 = vpack.c.b16 %v311, %v310
  %v350 = vpack.c.b16 %v313, %v312
  %v351 = vpack.c.b16 %v315, %v314
  %v352 = vpack.c.b16 %v317, %v316
  %v353 = vpack.c.b16 %v319, %v318
  %v354 = vpack.c.b16 %v321, %v320
  %v355 = vpack.c.b16 %v323, %v322
  %388 = vmatprep.subr.bf16.mxu0 0
  %389 = vmatpush1.bf16.msra.mxu0 %v331
  %390 = vmatprep.subr.bf16.mxu0 0
  %391 = vmatpush1.bf16.msra.mxu0 %v330
  %392 = vmatprep.subr.bf16.mxu0 0
  %393 = vmatpush1.bf16.msra.mxu0 %v329
  %394 = vmatprep.subr.bf16.mxu0 0
  %395 = vmatpush1.bf16.msra.mxu0 %v328
  %396 = vmatprep.subr.bf16.mxu0 0
  %397 = vmatpush1.bf16.msra.mxu0 %v327
  %398 = vmatprep.subr.bf16.mxu0 0
  %399 = vmatpush1.bf16.msra.mxu0 %v326
  %400 = vmatprep.subr.bf16.mxu0 0
  %401 = vmatpush1.bf16.msra.mxu0 %v325
  %402 = vmatprep.subr.bf16.mxu0 0
  %403 = vmatpush1.bf16.msra.mxu0 %v324
  %404 = vmatprep.subr.bf16.mxu0 0
  %405 = vmatpush2.bf16.msra.mxu0 %v339
  %406 = vmatprep.subr.bf16.mxu0 0
  %407 = vmatpush2.bf16.msra.mxu0 %v338
  %408 = vmatprep.subr.bf16.mxu0 0
  %409 = vmatpush2.bf16.msra.mxu0 %v337
  %410 = vmatprep.subr.bf16.mxu0 0
  %411 = vmatpush2.bf16.msra.mxu0 %v336
  %412 = vmatprep.subr.bf16.mxu0 0
  %413 = vmatpush2.bf16.msra.mxu0 %v335
  %414 = vmatprep.subr.bf16.mxu0 0
  %415 = vmatpush2.bf16.msra.mxu0 %v334
  %416 = vmatprep.subr.bf16.mxu0 0
  %417 = vmatpush2.bf16.msra.mxu0 %v333
  %418 = vmatprep.subr.bf16.mxu0 0
  %419 = vmatpush2.bf16.msra.mxu0 %v332
  %420 = vmatprep.mubr.bf16.mxu0 %v165
  %421 = vmatmul.mubr.bf16.gmra.mxu0 %v164
  %v422 = vpop.f32.mrf.mxu0
  %v423 = vadd.f32 0.0, %v422
  %v424 = vpop.f32.mrf.mxu0
  %v425 = vpop.f32.mrf.mxu0
  %v426 = vadd.f32 0.0, %v425
  %v427 = vpop.f32.mrf.mxu0
  %428 = vmatprep.mubr.bf16.mxu0 %v169
  %429 = vmatmul.mubr.bf16.gmra.mxu0 %v168
  %v430 = vpop.f32.mrf.mxu0
  %v431 = vadd.f32 0.0, %v430
  %v432 = vpop.f32.mrf.mxu0
  %v433 = vpop.f32.mrf.mxu0
  %v434 = vadd.f32 0.0, %v433
  %v435 = vpop.f32.mrf.mxu0
  %436 = vmatprep.mubr.bf16.mxu0 %v173
  %437 = vmatmul.mubr.bf16.gmra.mxu0 %v172
  %v438 = vpop.f32.mrf.mxu0
  %v439 = vadd.f32 0.0, %v438
  %v440 = vpop.f32.mrf.mxu0
  %v441 = vpop.f32.mrf.mxu0
  %v442 = vadd.f32 0.0, %v441
  %v443 = vpop.f32.mrf.mxu0
  %444 = vmatprep.mubr.bf16.mxu0 %v177
  %445 = vmatmul.mubr.bf16.gmra.mxu0 %v176
  %v446 = vpop.f32.mrf.mxu0
  %v447 = vadd.f32 0.0, %v446
  %v448 = vpop.f32.mrf.mxu0
  %v449 = vpop.f32.mrf.mxu0
  %v450 = vadd.f32 0.0, %v449
  %v451 = vpop.f32.mrf.mxu0
  %452 = vdwg.mxu0
  %453 = vmatprep.subr.bf16.mxu0 0
  %454 = vmatpush1.bf16.msra.mxu0 %v347
  %455 = vmatprep.subr.bf16.mxu0 0
  %456 = vmatpush1.bf16.msra.mxu0 %v346
  %457 = vmatprep.subr.bf16.mxu0 0
  %458 = vmatpush1.bf16.msra.mxu0 %v345
  %459 = vmatprep.subr.bf16.mxu0 0
  %460 = vmatpush1.bf16.msra.mxu0 %v344
  %461 = vmatprep.subr.bf16.mxu0 0
  %462 = vmatpush1.bf16.msra.mxu0 %v343
  %463 = vmatprep.subr.bf16.mxu0 0
  %464 = vmatpush1.bf16.msra.mxu0 %v342
  %465 = vmatprep.subr.bf16.mxu0 0
  %466 = vmatpush1.bf16.msra.mxu0 %v341
  %467 = vmatprep.subr.bf16.mxu0 0
  %468 = vmatpush1.bf16.msra.mxu0 %v340
  %469 = vmatprep.subr.bf16.mxu0 0
  %470 = vmatpush2.bf16.msra.mxu0 %v355
  %471 = vmatprep.subr.bf16.mxu0 0
  %472 = vmatpush2.bf16.msra.mxu0 %v354
  %473 = vmatprep.subr.bf16.mxu0 0
  %474 = vmatpush2.bf16.msra.mxu0 %v353
  %475 = vmatprep.subr.bf16.mxu0 0
  %476 = vmatpush2.bf16.msra.mxu0 %v352
  %477 = vmatprep.subr.bf16.mxu0 0
  %478 = vmatpush2.bf16.msra.mxu0 %v351
  %479 = vmatprep.subr.bf16.mxu0 0
  %480 = vmatpush2.bf16.msra.mxu0 %v350
  %481 = vmatprep.subr.bf16.mxu0 0
  %482 = vmatpush2.bf16.msra.mxu0 %v349
  %483 = vmatprep.subr.bf16.mxu0 0
  %484 = vmatpush2.bf16.msra.mxu0 %v348
  %485 = vmatprep.mubr.bf16.mxu0 %v167
  %486 = vmatmul.mubr.bf16.gmra.mxu0 %v166
  %v487 = vpop.f32.mrf.mxu0
  %v488 = vadd.f32 %v423, %v487
  %v489 = vpop.f32.mrf.mxu0
  %v490 = vpop.f32.mrf.mxu0
  %v491 = vadd.f32 %v426, %v490
  %v492 = vpop.f32.mrf.mxu0
  %493 = vmatprep.mubr.bf16.mxu0 %v171
  %494 = vmatmul.mubr.bf16.gmra.mxu0 %v170
  %v495 = vpop.f32.mrf.mxu0
  %v496 = vadd.f32 %v431, %v495
  %v497 = vpop.f32.mrf.mxu0
  %v498 = vpop.f32.mrf.mxu0
  %v499 = vadd.f32 %v434, %v498
  %v500 = vpop.f32.mrf.mxu0
  %501 = vmatprep.mubr.bf16.mxu0 %v175
  %502 = vmatmul.mubr.bf16.gmra.mxu0 %v174
  %v503 = vpop.f32.mrf.mxu0
  %v504 = vadd.f32 %v439, %v503
  %v505 = vpop.f32.mrf.mxu0
  %v506 = vpop.f32.mrf.mxu0
  %v507 = vadd.f32 %v442, %v506
  %v508 = vpop.f32.mrf.mxu0
  %509 = vmatprep.mubr.bf16.mxu0 %v179
  %510 = vmatmul.mubr.bf16.gmra.mxu0 %v178
  %v511 = vpop.f32.mrf.mxu0
  %v512 = vadd.f32 %v447, %v511
  %v513 = vpop.f32.mrf.mxu0
  %v514 = vpop.f32.mrf.mxu0
  %v515 = vadd.f32 %v450, %v514
  %v516 = vpop.f32.mrf.mxu0
  %517 = vdwg.mxu0
  %518 = vst [vmem:[%s2] sm:$0xff] %v488
  %519 = vst [vmem:[%s2 + $0x8] sm:$0xff] %v491
  %520 = vst [vmem:[%s2 + $0x10] sm:$0xff] %v496
  %521 = vst [vmem:[%s2 + $0x18] sm:$0xff] %v499
  %522 = vst [vmem:[%s2 + $0x20] sm:$0xff] %v504
  %523 = vst [vmem:[%s2 + $0x28] sm:$0xff] %v507
  %524 = vst [vmem:[%s2 + $0x30] sm:$0xff] %v512
  %525 = vst [vmem:[%s2 + $0x38] sm:$0xff] %v515
  %v526 = vld [vmem:[%s3] sm:$0xff]
  %v527 = vld [vmem:[%s3 + $0x8] sm:$0xff]
  %v528 = vld [vmem:[%s3 + $0x10] sm:$0xff]
  %v529 = vld [vmem:[%s3 + $0x18] sm:$0xff]
  %v530 = vld [vmem:[%s3 + $0x20] sm:$0xff]
  %v531 = vld [vmem:[%s3 + $0x28] sm:$0xff]
  %v532 = vld [vmem:[%s3 + $0x30] sm:$0xff]
  %v533 = vld [vmem:[%s3 + $0x38] sm:$0xff]
  %534 = vadd.xlane.f32.xlu0 %v488
  %v535 = vpop.xlane.xlu0 %534
  %536 = vadd.xlane.f32.xlu0 %v491
  %v537 = vpop.xlane.xlu0 %536
  %538 = vadd.xlane.f32.xlu0 %v496
  %v539 = vpop.xlane.xlu0 %538
  %540 = vadd.xlane.f32.xlu0 %v499
  %v541 = vpop.xlane.xlu0 %540
  %542 = vadd.xlane.f32.xlu0 %v504
  %v543 = vpop.xlane.xlu0 %542
  %544 = vadd.xlane.f32.xlu0 %v507
  %v545 = vpop.xlane.xlu0 %544
  %546 = vadd.xlane.f32.xlu0 %v512
  %v547 = vpop.xlane.xlu0 %546
  %548 = vadd.xlane.f32.xlu0 %v515
  %v549 = vpop.xlane.xlu0 %548
  %v550 = vadd.f32 %v526, %v535
  %v551 = vadd.f32 %v527, %v537
  %v552 = vadd.f32 %v528, %v539
  %v553 = vadd.f32 %v529, %v541
  %v554 = vadd.f32 %v530, %v543
  %v555 = vadd.f32 %v531, %v545
  %v556 = vadd.f32 %v532, %v547
  %v557 = vadd.f32 %v533, %v549
  %vm558 = vcmask 7168
  %559 = vst.msk [vmem:[%s3] sm:$0xff] %vm558, %v550
  %560 = vst.msk [vmem:[%s3 + $0x8] sm:$0xff] %vm558, %v551
  %561 = vst.msk [vmem:[%s3 + $0x10] sm:$0xff] %vm558, %v552
  %562 = vst.msk [vmem:[%s3 + $0x18] sm:$0xff] %vm558, %v553
  %563 = vst.msk [vmem:[%s3 + $0x20] sm:$0xff] %vm558, %v554
  %564 = vst.msk [vmem:[%s3 + $0x28] sm:$0xff] %vm558, %v555
  %565 = vst.msk [vmem:[%s3 + $0x30] sm:$0xff] %vm558, %v556
  %566 = vst.msk [vmem:[%s3 + $0x38] sm:$0xff] %vm558, %v557
  %v567 = vld [vmem:[%s4] sm:$0xff]
  %v568 = vld [vmem:[%s4 + $0x8] sm:$0xff]
  %v569 = vld [vmem:[%s4 + $0x10] sm:$0xff]
  %v570 = vld [vmem:[%s4 + $0x18] sm:$0xff]
  %v571 = vld [vmem:[%s4 + $0x20] sm:$0xff]
  %v572 = vld [vmem:[%s4 + $0x28] sm:$0xff]
  %v573 = vld [vmem:[%s4 + $0x30] sm:$0xff]
  %v574 = vld [vmem:[%s4 + $0x38] sm:$0xff]
  %v575 = vmul.f32 %v488, %v488
  %v576 = vmul.f32 %v491, %v491
  %v577 = vmul.f32 %v496, %v496
  %v578 = vmul.f32 %v499, %v499
  %v579 = vmul.f32 %v504, %v504
  %v580 = vmul.f32 %v507, %v507
  %v581 = vmul.f32 %v512, %v512
  %v582 = vmul.f32 %v515, %v515
  %583 = vadd.xlane.f32.xlu0 %v575
  %v584 = vpop.xlane.xlu0 %583
  %585 = vadd.xlane.f32.xlu0 %v576
  %v586 = vpop.xlane.xlu0 %585
  %587 = vadd.xlane.f32.xlu0 %v577
  %v588 = vpop.xlane.xlu0 %587
  %589 = vadd.xlane.f32.xlu0 %v578
  %v590 = vpop.xlane.xlu0 %589
  %591 = vadd.xlane.f32.xlu0 %v579
  %v592 = vpop.xlane.xlu0 %591
  %593 = vadd.xlane.f32.xlu0 %v580
  %v594 = vpop.xlane.xlu0 %593
  %595 = vadd.xlane.f32.xlu0 %v581
  %v596 = vpop.xlane.xlu0 %595
  %597 = vadd.xlane.f32.xlu0 %v582
  %v598 = vpop.xlane.xlu0 %597
  %v599 = vadd.f32 %v567, %v584
  %v600 = vadd.f32 %v568, %v586
  %v601 = vadd.f32 %v569, %v588
  %v602 = vadd.f32 %v570, %v590
  %v603 = vadd.f32 %v571, %v592
  %v604 = vadd.f32 %v572, %v594
  %v605 = vadd.f32 %v573, %v596
  %v606 = vadd.f32 %v574, %v598
  %607 = vst.msk [vmem:[%s4] sm:$0xff] %vm558, %v599
  %608 = vst.msk [vmem:[%s4 + $0x8] sm:$0xff] %vm558, %v600
  %609 = vst.msk [vmem:[%s4 + $0x10] sm:$0xff] %vm558, %v601
  %610 = vst.msk [vmem:[%s4 + $0x18] sm:$0xff] %vm558, %v602
  %611 = vst.msk [vmem:[%s4 + $0x20] sm:$0xff] %vm558, %v603
  %612 = vst.msk [vmem:[%s4 + $0x28] sm:$0xff] %vm558, %v604
  %613 = vst.msk [vmem:[%s4 + $0x30] sm:$0xff] %vm558, %v605
  %614 = vst.msk [vmem:[%s4 + $0x38] sm:$0xff] %vm558, %v606
  // Predicated region
  $region14: #{nlayer_discriminator_forward.13} parent=0 // pred_check
    _
  $region15: #{nlayer_discriminator_forward.13} parent=0 // pred_check_branch
    %616 = sbr.rel (0) target = $region17
  $region16: #{nlayer_discriminator_forward.13} parent=0 // pred_region
    _
  $region17: #{nlayer_discriminator_forward.13} parent=0 // pred_fallthru
    _
  // Predicated region
  $region18: #{nlayer_discriminator_forward.13} parent=0 // pred_check
    _
  $region19: #{nlayer_discriminator_forward.13} parent=0 // pred_check_branch
    %618 = sbr.rel (0) target = $region21
  $region20: #{nlayer_discriminator_forward.13} parent=0 // pred_region
    _
  $region21: #{nlayer_discriminator_forward.13} parent=0 // pred_fallthru
    _
  // Predicated region
  $region22: #{nlayer_discriminator_forward.13} parent=0 // pred_check
    _
  $region23: #{nlayer_discriminator_forward.13} parent=0 // pred_check_branch
    %620 = sbr.rel (0) target = $region25
  $region24: #{nlayer_discriminator_forward.13} parent=0 // pred_region
    _
  $region25: #{nlayer_discriminator_forward.13} parent=0 // pred_fallthru
    _
  // Predicated region
  $region26: #{nlayer_discriminator_forward.13} parent=0 // pred_check
    _
  $region27: #{nlayer_discriminator_forward.13} parent=0 // pred_check_branch
    %622 = sbr.rel (0) target = $region29
  $region28: #{nlayer_discriminator_forward.13} parent=0 // pred_region
    _
  $region29: #{nlayer_discriminator_forward.13} parent=0 // pred_fallthru
    _
  // Predicated region
  $region30: #{nlayer_discriminator_forward.13} parent=0 // pred_check
    _
  $region31: #{nlayer_discriminator_forward.13} parent=0 // pred_check_branch
    %624 = sbr.rel (0) target = $region33
  $region32: #{nlayer_discriminator_forward.13} parent=0 // pred_region
    _
  $region33: #{nlayer_discriminator_forward.13} parent=0 // pred_fallthru
    _
  // Predicated region
  $region34: #{nlayer_discriminator_forward.13} parent=0 // pred_check
    _
  $region35: #{nlayer_discriminator_forward.13} parent=0 // pred_check_branch
    %626 = sbr.rel (0) target = $region37
  $region36: #{nlayer_discriminator_forward.13} parent=0 // pred_region
    _
  $region37: #{nlayer_discriminator_forward.13} parent=0 // pred_fallthru
    _

// kernel: nlayer_discriminator_forward.14
$region0: #{nlayer_discriminator_forward.14}
  #allocation0 [shape = 'u32[]', space=smem, size = 0x4, offset = 0x4, fixed_abs, tag = 'smem constant byte address 0x4 - core index']
  #allocation1 [shape = 'u32[144,128]{1,0:T(1,128)}', space=vmem, size = 0x12000, scoped, tag = 'internal scratch']
  %s0 = inlined_call_operand.vmem [shape: f32[64,1], index: 0, kind: input, shape index: {}]
  %s1 = inlined_call_operand.vmem [shape: f32[64,1], index: 1, kind: input, shape index: {}]
  %s2 = inlined_call_operand.vmem [shape: f32[64,1], index: 2, kind: input, shape index: {}]
  %s3 = inlined_call_operand.vmem [shape: f32[64,1], index: 3, kind: input, shape index: {}]
  %s4 = inlined_call_operand.vmem [shape: f32[64,128], index: 4, kind: input, shape index: {}]
  %s5 = inlined_call_operand.vmem [shape: bf16[64,128], index: 5, kind: output, shape index: {}]
  %s6 = sld [smem:[#allocation0]]
  $region30: #{nlayer_discriminator_forward.14} parent=0
    _
  %s8 = ssub.s32 1, %s6
  %s9 = scalar_select 0, %s8, %s6
  // Predicated region
  $region2: #{nlayer_discriminator_forward.14} parent=0 // pred_check
    _
  $region3: #{nlayer_discriminator_forward.14} parent=0 // pred_check_branch
    %11 = sbr.rel (0) target = $region5
  $region4: #{nlayer_discriminator_forward.14} parent=0 // pred_region
    _
  $region5: #{nlayer_discriminator_forward.14} parent=0 // pred_fallthru
    _
  // Predicated region
  $region6: #{nlayer_discriminator_forward.14} parent=0 // pred_check
    _
  $region7: #{nlayer_discriminator_forward.14} parent=0 // pred_check_branch
    %13 = sbr.rel (0) target = $region9
  $region8: #{nlayer_discriminator_forward.14} parent=0 // pred_region
    _
  $region9: #{nlayer_discriminator_forward.14} parent=0 // pred_fallthru
    _
  // Predicated region
  $region10: #{nlayer_discriminator_forward.14} parent=0 // pred_check
    _
  $region11: #{nlayer_discriminator_forward.14} parent=0 // pred_check_branch
    %15 = sbr.rel (0) target = $region13
  $region12: #{nlayer_discriminator_forward.14} parent=0 // pred_region
    _
  $region13: #{nlayer_discriminator_forward.14} parent=0 // pred_fallthru
    _
  // Predicated region
  $region14: #{nlayer_discriminator_forward.14} parent=0 // pred_check
    _
  $region15: #{nlayer_discriminator_forward.14} parent=0 // pred_check_branch
    %17 = sbr.rel (0) target = $region17
  $region16: #{nlayer_discriminator_forward.14} parent=0 // pred_region
    _
  $region17: #{nlayer_discriminator_forward.14} parent=0 // pred_fallthru
    _
  // Predicated region
  $region18: #{nlayer_discriminator_forward.14} parent=0 // pred_check
    _
  $region19: #{nlayer_discriminator_forward.14} parent=0 // pred_check_branch
    %19 = sbr.rel (0) target = $region21
  $region20: #{nlayer_discriminator_forward.14} parent=0 // pred_region
    _
  $region21: #{nlayer_discriminator_forward.14} parent=0 // pred_fallthru
    _
  %v20 = vld [vmem:[%s0] sm:$0xff]
  %v21 = vld [vmem:[%s0 + $0x8] sm:$0xff]
  %v22 = vld [vmem:[%s0 + $0x10] sm:$0xff]
  %v23 = vld [vmem:[%s0 + $0x18] sm:$0xff]
  %v24 = vld [vmem:[%s0 + $0x20] sm:$0xff]
  %v25 = vld [vmem:[%s0 + $0x28] sm:$0xff]
  %v26 = vld [vmem:[%s0 + $0x30] sm:$0xff]
  %v27 = vld [vmem:[%s0 + $0x38] sm:$0xff]
  %v28 = vmul.f32 %v20, 0.013888889
  %v29 = vmul.f32 %v21, 0.013888889
  %v30 = vmul.f32 %v22, 0.013888889
  %v31 = vmul.f32 %v23, 0.013888889
  %v32 = vmul.f32 %v24, 0.013888889
  %v33 = vmul.f32 %v25, 0.013888889
  %v34 = vmul.f32 %v26, 0.013888889
  %v35 = vmul.f32 %v27, 0.013888889
  %v36 = vld [vmem:[%s1] sm:$0xff]
  %v37 = vld [vmem:[%s1 + $0x8] sm:$0xff]
  %v38 = vld [vmem:[%s1 + $0x10] sm:$0xff]
  %v39 = vld [vmem:[%s1 + $0x18] sm:$0xff]
  %v40 = vld [vmem:[%s1 + $0x20] sm:$0xff]
  %v41 = vld [vmem:[%s1 + $0x28] sm:$0xff]
  %v42 = vld [vmem:[%s1 + $0x30] sm:$0xff]
  %v43 = vld [vmem:[%s1 + $0x38] sm:$0xff]
  %v44 = vmul.f32 %v36, 0.013888889
  %v45 = vmul.f32 %v37, 0.013888889
  %v46 = vmul.f32 %v38, 0.013888889
  %v47 = vmul.f32 %v39, 0.013888889
  %v48 = vmul.f32 %v40, 0.013888889
  %v49 = vmul.f32 %v41, 0.013888889
  %v50 = vmul.f32 %v42, 0.013888889
  %v51 = vmul.f32 %v43, 0.013888889
  %v52 = vmul.f32 %v28, %v28
  %v53 = vmul.f32 %v29, %v29
  %v54 = vmul.f32 %v30, %v30
  %v55 = vmul.f32 %v31, %v31
  %v56 = vmul.f32 %v32, %v32
  %v57 = vmul.f32 %v33, %v33
  %v58 = vmul.f32 %v34, %v34
  %v59 = vmul.f32 %v35, %v35
  %v60 = vsub.f32 %v44, %v52
  %v61 = vsub.f32 %v45, %v53
  %v62 = vsub.f32 %v46, %v54
  %v63 = vsub.f32 %v47, %v55
  %v64 = vsub.f32 %v48, %v56
  %v65 = vsub.f32 %v49, %v57
  %v66 = vsub.f32 %v50, %v58
  %v67 = vsub.f32 %v51, %v59
  %v68 = vld [vmem:[%s2] sm:$0xff]
  %v69 = vld [vmem:[%s2 + $0x8] sm:$0xff]
  %v70 = vld [vmem:[%s2 + $0x10] sm:$0xff]
  %v71 = vld [vmem:[%s2 + $0x18] sm:$0xff]
  %v72 = vld [vmem:[%s2 + $0x20] sm:$0xff]
  %v73 = vld [vmem:[%s2 + $0x28] sm:$0xff]
  %v74 = vld [vmem:[%s2 + $0x30] sm:$0xff]
  %v75 = vld [vmem:[%s2 + $0x38] sm:$0xff]
  %v76 = vadd.f32 %v60, 1e-05
  %v77 = vadd.f32 %v61, 1e-05
  %v78 = vadd.f32 %v62, 1e-05
  %v79 = vadd.f32 %v63, 1e-05
  %v80 = vadd.f32 %v64, 1e-05
  %v81 = vadd.f32 %v65, 1e-05
  %v82 = vadd.f32 %v66, 1e-05
  %v83 = vadd.f32 %v67, 1e-05
  %v84 = vrsqrt.pop %v76
  %v85 = vrsqrt.pop %v77
  %v86 = vrsqrt.pop %v78
  %v87 = vrsqrt.pop %v79
  %v88 = vrsqrt.pop %v80
  %v89 = vrsqrt.pop %v81
  %v90 = vrsqrt.pop %v82
  %v91 = vrsqrt.pop %v83
  %v92 = vmul.f32 %v68, %v84
  %v93 = vmul.f32 %v69, %v85
  %v94 = vmul.f32 %v70, %v86
  %v95 = vmul.f32 %v71, %v87
  %v96 = vmul.f32 %v72, %v88
  %v97 = vmul.f32 %v73, %v89
  %v98 = vmul.f32 %v74, %v90
  %v99 = vmul.f32 %v75, %v91
  %v100 = vld [vmem:[%s3] sm:$0xff]
  %v101 = vld [vmem:[%s3 + $0x8] sm:$0xff]
  %v102 = vld [vmem:[%s3 + $0x10] sm:$0xff]
  %v103 = vld [vmem:[%s3 + $0x18] sm:$0xff]
  %v104 = vld [vmem:[%s3 + $0x20] sm:$0xff]
  %v105 = vld [vmem:[%s3 + $0x28] sm:$0xff]
  %v106 = vld [vmem:[%s3 + $0x30] sm:$0xff]
  %v107 = vld [vmem:[%s3 + $0x38] sm:$0xff]
  %v108 = vmul.f32 %v28, %v92
  %v109 = vmul.f32 %v29, %v93
  %v110 = vmul.f32 %v30, %v94
  %v111 = vmul.f32 %v31, %v95
  %v112 = vmul.f32 %v32, %v96
  %v113 = vmul.f32 %v33, %v97
  %v114 = vmul.f32 %v34, %v98
  %v115 = vmul.f32 %v35, %v99
  %v116 = vsub.f32 %v100, %v108
  %v117 = vsub.f32 %v101, %v109
  %v118 = vsub.f32 %v102, %v110
  %v119 = vsub.f32 %v103, %v111
  %v120 = vsub.f32 %v104, %v112
  %v121 = vsub.f32 %v105, %v113
  %v122 = vsub.f32 %v106, %v114
  %v123 = vsub.f32 %v107, %v115
  %v124 = vld [vmem:[%s4] sm:$0xff]
  %v125 = vld [vmem:[%s4 + $0x8] sm:$0xff]
  %v126 = vld [vmem:[%s4 + $0x10] sm:$0xff]
  %v127 = vld [vmem:[%s4 + $0x18] sm:$0xff]
  %v128 = vld [vmem:[%s4 + $0x20] sm:$0xff]
  %v129 = vld [vmem:[%s4 + $0x28] sm:$0xff]
  %v130 = vld [vmem:[%s4 + $0x30] sm:$0xff]
  %v131 = vld [vmem:[%s4 + $0x38] sm:$0xff]
  %133 = vset.pattern.permute.xlu0 0
  %134 = vperm.xlu0 %133, %v92
  %v135 = vpop.permute.xlu0 %134
  %138 = vset.pattern.permute.xlu0 0
  %139 = vperm.xlu0 %138, %v93
  %v140 = vpop.permute.xlu0 %139
  %143 = vset.pattern.permute.xlu0 0
  %144 = vperm.xlu0 %143, %v94
  %v145 = vpop.permute.xlu0 %144
  %148 = vset.pattern.permute.xlu0 0
  %149 = vperm.xlu0 %148, %v95
  %v150 = vpop.permute.xlu0 %149
  %153 = vset.pattern.permute.xlu0 0
  %154 = vperm.xlu0 %153, %v96
  %v155 = vpop.permute.xlu0 %154
  %158 = vset.pattern.permute.xlu0 0
  %159 = vperm.xlu0 %158, %v97
  %v160 = vpop.permute.xlu0 %159
  %163 = vset.pattern.permute.xlu0 0
  %164 = vperm.xlu0 %163, %v98
  %v165 = vpop.permute.xlu0 %164
  %168 = vset.pattern.permute.xlu0 0
  %169 = vperm.xlu0 %168, %v99
  %v170 = vpop.permute.xlu0 %169
  %v172 = vmul.f32 %v124, %v135
  %v173 = vmul.f32 %v125, %v140
  %v174 = vmul.f32 %v126, %v145
  %v175 = vmul.f32 %v127, %v150
  %v176 = vmul.f32 %v128, %v155
  %v177 = vmul.f32 %v129, %v160
  %v178 = vmul.f32 %v130, %v165
  %v179 = vmul.f32 %v131, %v170
  %181 = vset.pattern.permute.xlu0 0
  %182 = vperm.xlu0 %181, %v116
  %v183 = vpop.permute.xlu0 %182
  %186 = vset.pattern.permute.xlu0 0
  %187 = vperm.xlu0 %186, %v117
  %v188 = vpop.permute.xlu0 %187
  %191 = vset.pattern.permute.xlu0 0
  %192 = vperm.xlu0 %191, %v118
  %v193 = vpop.permute.xlu0 %192
  %196 = vset.pattern.permute.xlu0 0
  %197 = vperm.xlu0 %196, %v119
  %v198 = vpop.permute.xlu0 %197
  %201 = vset.pattern.permute.xlu0 0
  %202 = vperm.xlu0 %201, %v120
  %v203 = vpop.permute.xlu0 %202
  %206 = vset.pattern.permute.xlu0 0
  %207 = vperm.xlu0 %206, %v121
  %v208 = vpop.permute.xlu0 %207
  %211 = vset.pattern.permute.xlu0 0
  %212 = vperm.xlu0 %211, %v122
  %v213 = vpop.permute.xlu0 %212
  %216 = vset.pattern.permute.xlu0 0
  %217 = vperm.xlu0 %216, %v123
  %v218 = vpop.permute.xlu0 %217
  %v220 = vadd.f32 %v172, %v183
  %v221 = vadd.f32 %v173, %v188
  %v222 = vadd.f32 %v174, %v193
  %v223 = vadd.f32 %v175, %v198
  %v224 = vadd.f32 %v176, %v203
  %v225 = vadd.f32 %v177, %v208
  %v226 = vadd.f32 %v178, %v213
  %v227 = vadd.f32 %v179, %v218
  %vm228 = vcmp.gt.f32.partialorder %v220, 0.0
  %vm229 = vcmp.gt.f32.partialorder %v221, 0.0
  %vm230 = vcmp.gt.f32.partialorder %v222, 0.0
  %vm231 = vcmp.gt.f32.partialorder %v223, 0.0
  %vm232 = vcmp.gt.f32.partialorder %v224, 0.0
  %vm233 = vcmp.gt.f32.partialorder %v225, 0.0
  %vm234 = vcmp.gt.f32.partialorder %v226, 0.0
  %vm235 = vcmp.gt.f32.partialorder %v227, 0.0
  %v236 = vmul.f32 %v220, 0.2
  %v237 = vmul.f32 %v221, 0.2
  %v238 = vmul.f32 %v222, 0.2
  %v239 = vmul.f32 %v223, 0.2
  %v240 = vmul.f32 %v224, 0.2
  %v241 = vmul.f32 %v225, 0.2
  %v242 = vmul.f32 %v226, 0.2
  %v243 = vmul.f32 %v227, 0.2
  %v244 = vsel %vm228, %v220, %v236
  %v245 = vsel %vm229, %v221, %v237
  %v246 = vsel %vm230, %v222, %v238
  %v247 = vsel %vm231, %v223, %v239
  %v248 = vsel %vm232, %v224, %v240
  %v249 = vsel %vm233, %v225, %v241
  %v250 = vsel %vm234, %v226, %v242
  %v251 = vsel %vm235, %v227, %v243
  %v252 = vpack.c.bf16 %v245, %v244
  %v253 = vpack.c.bf16 %v247, %v246
  %v254 = vpack.c.bf16 %v249, %v248
  %v255 = vpack.c.bf16 %v251, %v250
  %v260 = vunpack.c.l.b16 %v252
  %v261 = vunpack.c.h.b16 %v252
  %v262 = vunpack.c.l.b16 %v253
  %v263 = vunpack.c.h.b16 %v253
  %v264 = vunpack.c.l.b16 %v254
  %v265 = vunpack.c.h.b16 %v254
  %v266 = vunpack.c.l.b16 %v255
  %v267 = vunpack.c.h.b16 %v255
  %v268 = vpack.c.b16 %v260, %v260
  %v269 = vpack.c.b16 %v261, %v261
  %v270 = vpack.c.b16 %v262, %v262
  %v271 = vpack.c.b16 %v263, %v263
  %v272 = vpack.c.b16 %v264, %v264
  %v273 = vpack.c.b16 %v265, %v265
  %v274 = vpack.c.b16 %v266, %v266
  %v275 = vpack.c.b16 %v267, %v267
  %284 = vst [vmem:[%s5] sm:$0xf] %v268
  %285 = vst [vmem:[%s5 + $0x4] sm:$0xf] %v269
  %286 = vst [vmem:[%s5 + $0x8] sm:$0xf] %v270
  %287 = vst [vmem:[%s5 + $0xc] sm:$0xf] %v271
  %288 = vst [vmem:[%s5 + $0x10] sm:$0xf] %v272
  %289 = vst [vmem:[%s5 + $0x14] sm:$0xf] %v273
  %290 = vst [vmem:[%s5 + $0x18] sm:$0xf] %v274
  %291 = vst [vmem:[%s5 + $0x1c] sm:$0xf] %v275
  // Predicated region
  $region22: #{nlayer_discriminator_forward.14} parent=0 // pred_check
    _
  $region23: #{nlayer_discriminator_forward.14} parent=0 // pred_check_branch
    %293 = sbr.rel (0) target = $region25
  $region24: #{nlayer_discriminator_forward.14} parent=0 // pred_region
    _
  $region25: #{nlayer_discriminator_forward.14} parent=0 // pred_fallthru
    _
  // Predicated region
  $region26: #{nlayer_discriminator_forward.14} parent=0 // pred_check
    _
  $region27: #{nlayer_discriminator_forward.14} parent=0 // pred_check_branch
    %295 = sbr.rel (0) target = $region29
  $region28: #{nlayer_discriminator_forward.14} parent=0 // pred_region
    _
  $region29: #{nlayer_discriminator_forward.14} parent=0 // pred_fallthru
    _

// kernel: nlayer_discriminator_forward.15
$region0: #{nlayer_discriminator_forward.15}
  #allocation0 [shape = 'u32[]', space=smem, size = 0x4, offset = 0x4, fixed_abs, tag = 'smem constant byte address 0x4 - core index']
  #allocation1 [shape = 'u32[144,128]{1,0:T(1,128)}', space=vmem, size = 0x12000, scoped, tag = 'internal scratch']
  %s0 = inlined_call_operand.vmem [shape: bf16[8,1024], index: 0, kind: input, shape index: {}]
  %s1 = inlined_call_operand.vmem [shape: f32[8,1], index: 1, kind: input, shape index: {}]
  %s2 = inlined_call_operand.vmem [shape: bf16[1024,128], index: 2, kind: input, shape index: {}]
  %s3 = inlined_call_operand.vmem [shape: f32[8,128], index: 3, kind: output, shape index: {}]
  %s4 = sld [smem:[#allocation0]]
  $region22: #{nlayer_discriminator_forward.15} parent=0
    _
  %s6 = ssub.s32 1, %s4
  %s7 = scalar_select 0, %s6, %s4
  // Predicated region
  $region2: #{nlayer_discriminator_forward.15} parent=0 // pred_check
    _
  $region3: #{nlayer_discriminator_forward.15} parent=0 // pred_check_branch
    %9 = sbr.rel (0) target = $region5
  $region4: #{nlayer_discriminator_forward.15} parent=0 // pred_region
    _
  $region5: #{nlayer_discriminator_forward.15} parent=0 // pred_fallthru
    _
  // Predicated region
  $region6: #{nlayer_discriminator_forward.15} parent=0 // pred_check
    _
  $region7: #{nlayer_discriminator_forward.15} parent=0 // pred_check_branch
    %11 = sbr.rel (0) target = $region9
  $region8: #{nlayer_discriminator_forward.15} parent=0 // pred_region
    _
  $region9: #{nlayer_discriminator_forward.15} parent=0 // pred_fallthru
    _
  // Predicated region
  $region10: #{nlayer_discriminator_forward.15} parent=0 // pred_check
    _
  $region11: #{nlayer_discriminator_forward.15} parent=0 // pred_check_branch
    %13 = sbr.rel (0) target = $region13
  $region12: #{nlayer_discriminator_forward.15} parent=0 // pred_region
    _
  $region13: #{nlayer_discriminator_forward.15} parent=0 // pred_fallthru
    _
  %v15 = vld [vmem:[%s0] sm:$0xff]
  %v16 = vld [vmem:[%s0 + $0x8] sm:$0xff]
  %v17 = vld [vmem:[%s0 + $0x10] sm:$0xff]
  %v18 = vld [vmem:[%s0 + $0x18] sm:$0xff]
  %v19 = vld [vmem:[%s2] sm:$0xf]
  %v20 = vld [vmem:[%s2 + $0x4] sm:$0xf]
  %v21 = vld [vmem:[%s2 + $0x8] sm:$0xf]
  %v22 = vld [vmem:[%s2 + $0xc] sm:$0xf]
  %v23 = vld [vmem:[%s2 + $0x10] sm:$0xf]
  %v24 = vld [vmem:[%s2 + $0x14] sm:$0xf]
  %v25 = vld [vmem:[%s2 + $0x18] sm:$0xf]
  %v26 = vld [vmem:[%s2 + $0x1c] sm:$0xf]
  %v27 = vld [vmem:[%s2 + $0x20] sm:$0xf]
  %v28 = vld [vmem:[%s2 + $0x24] sm:$0xf]
  %v29 = vld [vmem:[%s2 + $0x28] sm:$0xf]
  %v30 = vld [vmem:[%s2 + $0x2c] sm:$0xf]
  %v31 = vld [vmem:[%s2 + $0x30] sm:$0xf]
  %v32 = vld [vmem:[%s2 + $0x34] sm:$0xf]
  %v33 = vld [vmem:[%s2 + $0x38] sm:$0xf]
  %v34 = vld [vmem:[%s2 + $0x3c] sm:$0xf]
  %v35 = vld [vmem:[%s2 + $0x40] sm:$0xf]
  %v36 = vld [vmem:[%s2 + $0x44] sm:$0xf]
  %v37 = vld [vmem:[%s2 + $0x48] sm:$0xf]
  %v38 = vld [vmem:[%s2 + $0x4c] sm:$0xf]
  %v39 = vld [vmem:[%s2 + $0x50] sm:$0xf]
  %v40 = vld [vmem:[%s2 + $0x54] sm:$0xf]
  %v41 = vld [vmem:[%s2 + $0x58] sm:$0xf]
  %v42 = vld [vmem:[%s2 + $0x5c] sm:$0xf]
  %v43 = vld [vmem:[%s2 + $0x60] sm:$0xf]
  %v44 = vld [vmem:[%s2 + $0x64] sm:$0xf]
  %v45 = vld [vmem:[%s2 + $0x68] sm:$0xf]
  %v46 = vld [vmem:[%s2 + $0x6c] sm:$0xf]
  %v47 = vld [vmem:[%s2 + $0x70] sm:$0xf]
  %v48 = vld [vmem:[%s2 + $0x74] sm:$0xf]
  %v49 = vld [vmem:[%s2 + $0x78] sm:$0xf]
  %v50 = vld [vmem:[%s2 + $0x7c] sm:$0xf]
  %v51 = vld [vmem:[%s2 + $0x80] sm:$0xf]
  %v52 = vld [vmem:[%s2 + $0x84] sm:$0xf]
  %v53 = vld [vmem:[%s2 + $0x88] sm:$0xf]
  %v54 = vld [vmem:[%s2 + $0x8c] sm:$0xf]
  %v55 = vld [vmem:[%s2 + $0x90] sm:$0xf]
  %v56 = vld [vmem:[%s2 + $0x94] sm:$0xf]
  %v57 = vld [vmem:[%s2 + $0x98] sm:$0xf]
  %v58 = vld [vmem:[%s2 + $0x9c] sm:$0xf]
  %v59 = vld [vmem:[%s2 + $0xa0] sm:$0xf]
  %v60 = vld [vmem:[%s2 + $0xa4] sm:$0xf]
  %v61 = vld [vmem:[%s2 + $0xa8] sm:$0xf]
  %v62 = vld [vmem:[%s2 + $0xac] sm:$0xf]
  %v63 = vld [vmem:[%s2 + $0xb0] sm:$0xf]
  %v64 = vld [vmem:[%s2 + $0xb4] sm:$0xf]
  %v65 = vld [vmem:[%s2 + $0xb8] sm:$0xf]
  %v66 = vld [vmem:[%s2 + $0xbc] sm:$0xf]
  %v67 = vld [vmem:[%s2 + $0xc0] sm:$0xf]
  %v68 = vld [vmem:[%s2 + $0xc4] sm:$0xf]
  %v69 = vld [vmem:[%s2 + $0xc8] sm:$0xf]
  %v70 = vld [vmem:[%s2 + $0xcc] sm:$0xf]
  %v71 = vld [vmem:[%s2 + $0xd0] sm:$0xf]
  %v72 = vld [vmem:[%s2 + $0xd4] sm:$0xf]
  %v73 = vld [vmem:[%s2 + $0xd8] sm:$0xf]
  %v74 = vld [vmem:[%s2 + $0xdc] sm:$0xf]
  %v75 = vld [vmem:[%s2 + $0xe0] sm:$0xf]
  %v76 = vld [vmem:[%s2 + $0xe4] sm:$0xf]
  %v77 = vld [vmem:[%s2 + $0xe8] sm:$0xf]
  %v78 = vld [vmem:[%s2 + $0xec] sm:$0xf]
  %v79 = vld [vmem:[%s2 + $0xf0] sm:$0xf]
  %v80 = vld [vmem:[%s2 + $0xf4] sm:$0xf]
  %v81 = vld [vmem:[%s2 + $0xf8] sm:$0xf]
  %v82 = vld [vmem:[%s2 + $0xfc] sm:$0xf]
  %v83 = vld [vmem:[%s2 + $0x100] sm:$0xf]
  %v84 = vld [vmem:[%s2 + $0x104] sm:$0xf]
  %v85 = vld [vmem:[%s2 + $0x108] sm:$0xf]
  %v86 = vld [vmem:[%s2 + $0x10c] sm:$0xf]
  %v87 = vld [vmem:[%s2 + $0x110] sm:$0xf]
  %v88 = vld [vmem:[%s2 + $0x114] sm:$0xf]
  %v89 = vld [vmem:[%s2 + $0x118] sm:$0xf]
  %v90 = vld [vmem:[%s2 + $0x11c] sm:$0xf]
  %v91 = vld [vmem:[%s2 + $0x120] sm:$0xf]
  %v92 = vld [vmem:[%s2 + $0x124] sm:$0xf]
  %v93 = vld [vmem:[%s2 + $0x128] sm:$0xf]
  %v94 = vld [vmem:[%s2 + $0x12c] sm:$0xf]
  %v95 = vld [vmem:[%s2 + $0x130] sm:$0xf]
  %v96 = vld [vmem:[%s2 + $0x134] sm:$0xf]
  %v97 = vld [vmem:[%s2 + $0x138] sm:$0xf]
  %v98 = vld [vmem:[%s2 + $0x13c] sm:$0xf]
  %v99 = vld [vmem:[%s2 + $0x140] sm:$0xf]
  %v100 = vld [vmem:[%s2 + $0x144] sm:$0xf]
  %v101 = vld [vmem:[%s2 + $0x148] sm:$0xf]
  %v102 = vld [vmem:[%s2 + $0x14c] sm:$0xf]
  %v103 = vld [vmem:[%s2 + $0x150] sm:$0xf]
  %v104 = vld [vmem:[%s2 + $0x154] sm:$0xf]
  %v105 = vld [vmem:[%s2 + $0x158] sm:$0xf]
  %v106 = vld [vmem:[%s2 + $0x15c] sm:$0xf]
  %v107 = vld [vmem:[%s2 + $0x160] sm:$0xf]
  %v108 = vld [vmem:[%s2 + $0x164] sm:$0xf]
  %v109 = vld [vmem:[%s2 + $0x168] sm:$0xf]
  %v110 = vld [vmem:[%s2 + $0x16c] sm:$0xf]
  %v111 = vld [vmem:[%s2 + $0x170] sm:$0xf]
  %v112 = vld [vmem:[%s2 + $0x174] sm:$0xf]
  %v113 = vld [vmem:[%s2 + $0x178] sm:$0xf]
  %v114 = vld [vmem:[%s2 + $0x17c] sm:$0xf]
  %v115 = vld [vmem:[%s2 + $0x180] sm:$0xf]
  %v116 = vld [vmem:[%s2 + $0x184] sm:$0xf]
  %v117 = vld [vmem:[%s2 + $0x188] sm:$0xf]
  %v118 = vld [vmem:[%s2 + $0x18c] sm:$0xf]
  %v119 = vld [vmem:[%s2 + $0x190] sm:$0xf]
  %v120 = vld [vmem:[%s2 + $0x194] sm:$0xf]
  %v121 = vld [vmem:[%s2 + $0x198] sm:$0xf]
  %v122 = vld [vmem:[%s2 + $0x19c] sm:$0xf]
  %v123 = vld [vmem:[%s2 + $0x1a0] sm:$0xf]
  %v124 = vld [vmem:[%s2 + $0x1a4] sm:$0xf]
  %v125 = vld [vmem:[%s2 + $0x1a8] sm:$0xf]
  %v126 = vld [vmem:[%s2 + $0x1ac] sm:$0xf]
  %v127 = vld [vmem:[%s2 + $0x1b0] sm:$0xf]
  %v128 = vld [vmem:[%s2 + $0x1b4] sm:$0xf]
  %v129 = vld [vmem:[%s2 + $0x1b8] sm:$0xf]
  %v130 = vld [vmem:[%s2 + $0x1bc] sm:$0xf]
  %v131 = vld [vmem:[%s2 + $0x1c0] sm:$0xf]
  %v132 = vld [vmem:[%s2 + $0x1c4] sm:$0xf]
  %v133 = vld [vmem:[%s2 + $0x1c8] sm:$0xf]
  %v134 = vld [vmem:[%s2 + $0x1cc] sm:$0xf]
  %v135 = vld [vmem:[%s2 + $0x1d0] sm:$0xf]
  %v136 = vld [vmem:[%s2 + $0x1d4] sm:$0xf]
  %v137 = vld [vmem:[%s2 + $0x1d8] sm:$0xf]
  %v138 = vld [vmem:[%s2 + $0x1dc] sm:$0xf]
  %v139 = vld [vmem:[%s2 + $0x1e0] sm:$0xf]
  %v140 = vld [vmem:[%s2 + $0x1e4] sm:$0xf]
  %v141 = vld [vmem:[%s2 + $0x1e8] sm:$0xf]
  %v142 = vld [vmem:[%s2 + $0x1ec] sm:$0xf]
  %v143 = vld [vmem:[%s2 + $0x1f0] sm:$0xf]
  %v144 = vld [vmem:[%s2 + $0x1f4] sm:$0xf]
  %v145 = vld [vmem:[%s2 + $0x1f8] sm:$0xf]
  %v146 = vld [vmem:[%s2 + $0x1fc] sm:$0xf]
  %v147 = vld [vmem:[%s1] sm:$0xff]
  %149 = vset.pattern.permute.xlu0 0
  %150 = vperm.xlu0 %149, %v147
  %v151 = vpop.permute.xlu0 %150
  %v157 = vunpack.c.l.b16 %v15
  %v158 = vunpack.c.h.b16 %v15
  %v159 = vunpack.c.l.b16 %v16
  %v160 = vunpack.c.h.b16 %v16
  %v161 = vunpack.c.l.b16 %v17
  %v162 = vunpack.c.h.b16 %v17
  %v163 = vunpack.c.l.b16 %v18
  %v164 = vunpack.c.h.b16 %v18
  %v165 = vpack.c.b16 %v157, %v157
  %v166 = vpack.c.b16 %v158, %v158
  %v167 = vpack.c.b16 %v159, %v159
  %v168 = vpack.c.b16 %v160, %v160
  %v169 = vpack.c.b16 %v161, %v161
  %v170 = vpack.c.b16 %v162, %v162
  %v171 = vpack.c.b16 %v163, %v163
  %v172 = vpack.c.b16 %v164, %v164
  %v309 = vunpack.c.l.b16 %v19
  %v310 = vunpack.c.l.b16 %v20
  %v311 = vunpack.c.l.b16 %v21
  %v312 = vunpack.c.l.b16 %v22
  %v313 = vunpack.c.l.b16 %v23
  %v314 = vunpack.c.l.b16 %v24
  %v315 = vunpack.c.l.b16 %v25
  %v316 = vunpack.c.l.b16 %v26
  %v317 = vunpack.c.l.b16 %v27
  %v318 = vunpack.c.l.b16 %v28
  %v319 = vunpack.c.l.b16 %v29
  %v320 = vunpack.c.l.b16 %v30
  %v321 = vunpack.c.l.b16 %v31
  %v322 = vunpack.c.l.b16 %v32
  %v323 = vunpack.c.l.b16 %v33
  %v324 = vunpack.c.l.b16 %v34
  %v325 = vunpack.c.l.b16 %v35
  %v326 = vunpack.c.l.b16 %v36
  %v327 = vunpack.c.l.b16 %v37
  %v328 = vunpack.c.l.b16 %v38
  %v329 = vunpack.c.l.b16 %v39
  %v330 = vunpack.c.l.b16 %v40
  %v331 = vunpack.c.l.b16 %v41
  %v332 = vunpack.c.l.b16 %v42
  %v333 = vunpack.c.l.b16 %v43
  %v334 = vunpack.c.l.b16 %v44
  %v335 = vunpack.c.l.b16 %v45
  %v336 = vunpack.c.l.b16 %v46
  %v337 = vunpack.c.l.b16 %v47
  %v338 = vunpack.c.l.b16 %v48
  %v339 = vunpack.c.l.b16 %v49
  %v340 = vunpack.c.l.b16 %v50
  %v341 = vunpack.c.l.b16 %v51
  %v342 = vunpack.c.l.b16 %v52
  %v343 = vunpack.c.l.b16 %v53
  %v344 = vunpack.c.l.b16 %v54
  %v345 = vunpack.c.l.b16 %v55
  %v346 = vunpack.c.l.b16 %v56
  %v347 = vunpack.c.l.b16 %v57
  %v348 = vunpack.c.l.b16 %v58
  %v349 = vunpack.c.l.b16 %v59
  %v350 = vunpack.c.l.b16 %v60
  %v351 = vunpack.c.l.b16 %v61
  %v352 = vunpack.c.l.b16 %v62
  %v353 = vunpack.c.l.b16 %v63
  %v354 = vunpack.c.l.b16 %v64
  %v355 = vunpack.c.l.b16 %v65
  %v356 = vunpack.c.l.b16 %v66
  %v357 = vunpack.c.l.b16 %v67
  %v358 = vunpack.c.l.b16 %v68
  %v359 = vunpack.c.l.b16 %v69
  %v360 = vunpack.c.l.b16 %v70
  %v361 = vunpack.c.l.b16 %v71
  %v362 = vunpack.c.l.b16 %v72
  %v363 = vunpack.c.l.b16 %v73
  %v364 = vunpack.c.l.b16 %v74
  %v365 = vunpack.c.l.b16 %v75
  %v366 = vunpack.c.l.b16 %v76
  %v367 = vunpack.c.l.b16 %v77
  %v368 = vunpack.c.l.b16 %v78
  %v369 = vunpack.c.l.b16 %v79
  %v370 = vunpack.c.l.b16 %v80
  %v371 = vunpack.c.l.b16 %v81
  %v372 = vunpack.c.l.b16 %v82
  %v373 = vunpack.c.l.b16 %v83
  %v374 = vunpack.c.l.b16 %v84
  %v375 = vunpack.c.l.b16 %v85
  %v376 = vunpack.c.l.b16 %v86
  %v377 = vunpack.c.l.b16 %v87
  %v378 = vunpack.c.l.b16 %v88
  %v379 = vunpack.c.l.b16 %v89
  %v380 = vunpack.c.l.b16 %v90
  %v381 = vunpack.c.l.b16 %v91
  %v382 = vunpack.c.l.b16 %v92
  %v383 = vunpack.c.l.b16 %v93
  %v384 = vunpack.c.l.b16 %v94
  %v385 = vunpack.c.l.b16 %v95
  %v386 = vunpack.c.l.b16 %v96
  %v387 = vunpack.c.l.b16 %v97
  %v388 = vunpack.c.l.b16 %v98
  %v389 = vunpack.c.l.b16 %v99
  %v390 = vunpack.c.l.b16 %v100
  %v391 = vunpack.c.l.b16 %v101
  %v392 = vunpack.c.l.b16 %v102
  %v393 = vunpack.c.l.b16 %v103
  %v394 = vunpack.c.l.b16 %v104
  %v395 = vunpack.c.l.b16 %v105
  %v396 = vunpack.c.l.b16 %v106
  %v397 = vunpack.c.l.b16 %v107
  %v398 = vunpack.c.l.b16 %v108
  %v399 = vunpack.c.l.b16 %v109
  %v400 = vunpack.c.l.b16 %v110
  %v401 = vunpack.c.l.b16 %v111
  %v402 = vunpack.c.l.b16 %v112
  %v403 = vunpack.c.l.b16 %v113
  %v404 = vunpack.c.l.b16 %v114
  %v405 = vunpack.c.l.b16 %v115
  %v406 = vunpack.c.l.b16 %v116
  %v407 = vunpack.c.l.b16 %v117
  %v408 = vunpack.c.l.b16 %v118
  %v409 = vunpack.c.l.b16 %v119
  %v410 = vunpack.c.l.b16 %v120
  %v411 = vunpack.c.l.b16 %v121
  %v412 = vunpack.c.l.b16 %v122
  %v413 = vunpack.c.l.b16 %v123
  %v414 = vunpack.c.l.b16 %v124
  %v415 = vunpack.c.l.b16 %v125
  %v416 = vunpack.c.l.b16 %v126
  %v417 = vunpack.c.l.b16 %v127
  %v418 = vunpack.c.l.b16 %v128
  %v419 = vunpack.c.l.b16 %v129
  %v420 = vunpack.c.l.b16 %v130
  %v421 = vunpack.c.l.b16 %v131
  %v422 = vunpack.c.l.b16 %v132
  %v423 = vunpack.c.l.b16 %v133
  %v424 = vunpack.c.l.b16 %v134
  %v425 = vunpack.c.l.b16 %v135
  %v426 = vunpack.c.l.b16 %v136
  %v427 = vunpack.c.l.b16 %v137
  %v428 = vunpack.c.l.b16 %v138
  %v429 = vunpack.c.l.b16 %v139
  %v430 = vunpack.c.l.b16 %v140
  %v431 = vunpack.c.l.b16 %v141
  %v432 = vunpack.c.l.b16 %v142
  %v433 = vunpack.c.l.b16 %v143
  %v434 = vunpack.c.l.b16 %v144
  %v435 = vunpack.c.l.b16 %v145
  %v436 = vunpack.c.l.b16 %v146
  %v437 = vpack.c.b16 %v310, %v309
  %v438 = vpack.c.b16 %v312, %v311
  %v439 = vpack.c.b16 %v314, %v313
  %v440 = vpack.c.b16 %v316, %v315
  %v441 = vpack.c.b16 %v318, %v317
  %v442 = vpack.c.b16 %v320, %v319
  %v443 = vpack.c.b16 %v322, %v321
  %v444 = vpack.c.b16 %v324, %v323
  %v445 = vpack.c.b16 %v326, %v325
  %v446 = vpack.c.b16 %v328, %v327
  %v447 = vpack.c.b16 %v330, %v329
  %v448 = vpack.c.b16 %v332, %v331
  %v449 = vpack.c.b16 %v334, %v333
  %v450 = vpack.c.b16 %v336, %v335
  %v451 = vpack.c.b16 %v338, %v337
  %v452 = vpack.c.b16 %v340, %v339
  %v453 = vpack.c.b16 %v342, %v341
  %v454 = vpack.c.b16 %v344, %v343
  %v455 = vpack.c.b16 %v346, %v345
  %v456 = vpack.c.b16 %v348, %v347
  %v457 = vpack.c.b16 %v350, %v349
  %v458 = vpack.c.b16 %v352, %v351
  %v459 = vpack.c.b16 %v354, %v353
  %v460 = vpack.c.b16 %v356, %v355
  %v461 = vpack.c.b16 %v358, %v357
  %v462 = vpack.c.b16 %v360, %v359
  %v463 = vpack.c.b16 %v362, %v361
  %v464 = vpack.c.b16 %v364, %v363
  %v465 = vpack.c.b16 %v366, %v365
  %v466 = vpack.c.b16 %v368, %v367
  %v467 = vpack.c.b16 %v370, %v369
  %v468 = vpack.c.b16 %v372, %v371
  %v469 = vpack.c.b16 %v374, %v373
  %v470 = vpack.c.b16 %v376, %v375
  %v471 = vpack.c.b16 %v378, %v377
  %v472 = vpack.c.b16 %v380, %v379
  %v473 = vpack.c.b16 %v382, %v381
  %v474 = vpack.c.b16 %v384, %v383
  %v475 = vpack.c.b16 %v386, %v385
  %v476 = vpack.c.b16 %v388, %v387
  %v477 = vpack.c.b16 %v390, %v389
  %v478 = vpack.c.b16 %v392, %v391
  %v479 = vpack.c.b16 %v394, %v393
  %v480 = vpack.c.b16 %v396, %v395
  %v481 = vpack.c.b16 %v398, %v397
  %v482 = vpack.c.b16 %v400, %v399
  %v483 = vpack.c.b16 %v402, %v401
  %v484 = vpack.c.b16 %v404, %v403
  %v485 = vpack.c.b16 %v406, %v405
  %v486 = vpack.c.b16 %v408, %v407
  %v487 = vpack.c.b16 %v410, %v409
  %v488 = vpack.c.b16 %v412, %v411
  %v489 = vpack.c.b16 %v414, %v413
  %v490 = vpack.c.b16 %v416, %v415
  %v491 = vpack.c.b16 %v418, %v417
  %v492 = vpack.c.b16 %v420, %v419
  %v493 = vpack.c.b16 %v422, %v421
  %v494 = vpack.c.b16 %v424, %v423
  %v495 = vpack.c.b16 %v426, %v425
  %v496 = vpack.c.b16 %v428, %v427
  %v497 = vpack.c.b16 %v430, %v429
  %v498 = vpack.c.b16 %v432, %v431
  %v499 = vpack.c.b16 %v434, %v433
  %v500 = vpack.c.b16 %v436, %v435
  %565 = vmatprep.subr.bf16.mxu0 0
  %566 = vmatpush1.bf16.msra.mxu0 %v444
  %567 = vmatprep.subr.bf16.mxu0 0
  %568 = vmatpush1.bf16.msra.mxu0 %v443
  %569 = vmatprep.subr.bf16.mxu0 0
  %570 = vmatpush1.bf16.msra.mxu0 %v442
  %571 = vmatprep.subr.bf16.mxu0 0
  %572 = vmatpush1.bf16.msra.mxu0 %v441
  %573 = vmatprep.subr.bf16.mxu0 0
  %574 = vmatpush1.bf16.msra.mxu0 %v440
  %575 = vmatprep.subr.bf16.mxu0 0
  %576 = vmatpush1.bf16.msra.mxu0 %v439
  %577 = vmatprep.subr.bf16.mxu0 0
  %578 = vmatpush1.bf16.msra.mxu0 %v438
  %579 = vmatprep.subr.bf16.mxu0 0
  %580 = vmatpush1.bf16.msra.mxu0 %v437
  %581 = vmatprep.subr.bf16.mxu0 0
  %582 = vmatpush2.bf16.msra.mxu0 %v452
  %583 = vmatprep.subr.bf16.mxu0 0
  %584 = vmatpush2.bf16.msra.mxu0 %v451
  %585 = vmatprep.subr.bf16.mxu0 0
  %586 = vmatpush2.bf16.msra.mxu0 %v450
  %587 = vmatprep.subr.bf16.mxu0 0
  %588 = vmatpush2.bf16.msra.mxu0 %v449
  %589 = vmatprep.subr.bf16.mxu0 0
  %590 = vmatpush2.bf16.msra.mxu0 %v448
  %591 = vmatprep.subr.bf16.mxu0 0
  %592 = vmatpush2.bf16.msra.mxu0 %v447
  %593 = vmatprep.subr.bf16.mxu0 0
  %594 = vmatpush2.bf16.msra.mxu0 %v446
  %595 = vmatprep.subr.bf16.mxu0 0
  %596 = vmatpush2.bf16.msra.mxu0 %v445
  %597 = vmatprep.mubr.bf16.mxu0 %v166
  %598 = vmatmul.mubr.bf16.gmra.mxu0 %v165
  %v599 = vpop.f32.mrf.mxu0
  %v600 = vadd.f32 %v151, %v599
  %v601 = vpop.f32.mrf.mxu0
  %v602 = vpop.f32.mrf.mxu0
  %v603 = vpop.f32.mrf.mxu0
  %604 = vdwg.mxu0
  %605 = vmatprep.subr.bf16.mxu0 0
  %606 = vmatpush1.bf16.msra.mxu0 %v460
  %607 = vmatprep.subr.bf16.mxu0 0
  %608 = vmatpush1.bf16.msra.mxu0 %v459
  %609 = vmatprep.subr.bf16.mxu0 0
  %610 = vmatpush1.bf16.msra.mxu0 %v458
  %611 = vmatprep.subr.bf16.mxu0 0
  %612 = vmatpush1.bf16.msra.mxu0 %v457
  %613 = vmatprep.subr.bf16.mxu0 0
  %614 = vmatpush1.bf16.msra.mxu0 %v456
  %615 = vmatprep.subr.bf16.mxu0 0
  %616 = vmatpush1.bf16.msra.mxu0 %v455
  %617 = vmatprep.subr.bf16.mxu0 0
  %618 = vmatpush1.bf16.msra.mxu0 %v454
  %619 = vmatprep.subr.bf16.mxu0 0
  %620 = vmatpush1.bf16.msra.mxu0 %v453
  %621 = vmatprep.subr.bf16.mxu0 0
  %622 = vmatpush2.bf16.msra.mxu0 %v468
  %623 = vmatprep.subr.bf16.mxu0 0
  %624 = vmatpush2.bf16.msra.mxu0 %v467
  %625 = vmatprep.subr.bf16.mxu0 0
  %626 = vmatpush2.bf16.msra.mxu0 %v466
  %627 = vmatprep.subr.bf16.mxu0 0
  %628 = vmatpush2.bf16.msra.mxu0 %v465
  %629 = vmatprep.subr.bf16.mxu0 0
  %630 = vmatpush2.bf16.msra.mxu0 %v464
  %631 = vmatprep.subr.bf16.mxu0 0
  %632 = vmatpush2.bf16.msra.mxu0 %v463
  %633 = vmatprep.subr.bf16.mxu0 0
  %634 = vmatpush2.bf16.msra.mxu0 %v462
  %635 = vmatprep.subr.bf16.mxu0 0
  %636 = vmatpush2.bf16.msra.mxu0 %v461
  %637 = vmatprep.mubr.bf16.mxu0 %v168
  %638 = vmatmul.mubr.bf16.gmra.mxu0 %v167
  %v639 = vpop.f32.mrf.mxu0
  %v640 = vadd.f32 %v600, %v639
  %v641 = vpop.f32.mrf.mxu0
  %v642 = vpop.f32.mrf.mxu0
  %v643 = vpop.f32.mrf.mxu0
  %644 = vdwg.mxu0
  %645 = vmatprep.subr.bf16.mxu0 0
  %646 = vmatpush1.bf16.msra.mxu0 %v476
  %647 = vmatprep.subr.bf16.mxu0 0
  %648 = vmatpush1.bf16.msra.mxu0 %v475
  %649 = vmatprep.subr.bf16.mxu0 0
  %650 = vmatpush1.bf16.msra.mxu0 %v474
  %651 = vmatprep.subr.bf16.mxu0 0
  %652 = vmatpush1.bf16.msra.mxu0 %v473
  %653 = vmatprep.subr.bf16.mxu0 0
  %654 = vmatpush1.bf16.msra.mxu0 %v472
  %655 = vmatprep.subr.bf16.mxu0 0
  %656 = vmatpush1.bf16.msra.mxu0 %v471
  %657 = vmatprep.subr.bf16.mxu0 0
  %658 = vmatpush1.bf16.msra.mxu0 %v470
  %659 = vmatprep.subr.bf16.mxu0 0
  %660 = vmatpush1.bf16.msra.mxu0 %v469
  %661 = vmatprep.subr.bf16.mxu0 0
  %662 = vmatpush2.bf16.msra.mxu0 %v484
  %663 = vmatprep.subr.bf16.mxu0 0
  %664 = vmatpush2.bf16.msra.mxu0 %v483
  %665 = vmatprep.subr.bf16.mxu0 0
  %666 = vmatpush2.bf16.msra.mxu0 %v482
  %667 = vmatprep.subr.bf16.mxu0 0
  %668 = vmatpush2.bf16.msra.mxu0 %v481
  %669 = vmatprep.subr.bf16.mxu0 0
  %670 = vmatpush2.bf16.msra.mxu0 %v480
  %671 = vmatprep.subr.bf16.mxu0 0
  %672 = vmatpush2.bf16.msra.mxu0 %v479
  %673 = vmatprep.subr.bf16.mxu0 0
  %674 = vmatpush2.bf16.msra.mxu0 %v478
  %675 = vmatprep.subr.bf16.mxu0 0
  %676 = vmatpush2.bf16.msra.mxu0 %v477
  %677 = vmatprep.mubr.bf16.mxu0 %v170
  %678 = vmatmul.mubr.bf16.gmra.mxu0 %v169
  %v679 = vpop.f32.mrf.mxu0
  %v680 = vadd.f32 %v640, %v679
  %v681 = vpop.f32.mrf.mxu0
  %v682 = vpop.f32.mrf.mxu0
  %v683 = vpop.f32.mrf.mxu0
  %684 = vdwg.mxu0
  %685 = vmatprep.subr.bf16.mxu0 0
  %686 = vmatpush1.bf16.msra.mxu0 %v492
  %687 = vmatprep.subr.bf16.mxu0 0
  %688 = vmatpush1.bf16.msra.mxu0 %v491
  %689 = vmatprep.subr.bf16.mxu0 0
  %690 = vmatpush1.bf16.msra.mxu0 %v490
  %691 = vmatprep.subr.bf16.mxu0 0
  %692 = vmatpush1.bf16.msra.mxu0 %v489
  %693 = vmatprep.subr.bf16.mxu0 0
  %694 = vmatpush1.bf16.msra.mxu0 %v488
  %695 = vmatprep.subr.bf16.mxu0 0
  %696 = vmatpush1.bf16.msra.mxu0 %v487
  %697 = vmatprep.subr.bf16.mxu0 0
  %698 = vmatpush1.bf16.msra.mxu0 %v486
  %699 = vmatprep.subr.bf16.mxu0 0
  %700 = vmatpush1.bf16.msra.mxu0 %v485
  %701 = vmatprep.subr.bf16.mxu0 0
  %702 = vmatpush2.bf16.msra.mxu0 %v500
  %703 = vmatprep.subr.bf16.mxu0 0
  %704 = vmatpush2.bf16.msra.mxu0 %v499
  %705 = vmatprep.subr.bf16.mxu0 0
  %706 = vmatpush2.bf16.msra.mxu0 %v498
  %707 = vmatprep.subr.bf16.mxu0 0
  %708 = vmatpush2.bf16.msra.mxu0 %v497
  %709 = vmatprep.subr.bf16.mxu0 0
  %710 = vmatpush2.bf16.msra.mxu0 %v496
  %711 = vmatprep.subr.bf16.mxu0 0
  %712 = vmatpush2.bf16.msra.mxu0 %v495
  %713 = vmatprep.subr.bf16.mxu0 0
  %714 = vmatpush2.bf16.msra.mxu0 %v494
  %715 = vmatprep.subr.bf16.mxu0 0
  %716 = vmatpush2.bf16.msra.mxu0 %v493
  %717 = vmatprep.mubr.bf16.mxu0 %v172
  %718 = vmatmul.mubr.bf16.gmra.mxu0 %v171
  %v719 = vpop.f32.mrf.mxu0
  %v720 = vadd.f32 %v680, %v719
  %v721 = vpop.f32.mrf.mxu0
  %v722 = vpop.f32.mrf.mxu0
  %v723 = vpop.f32.mrf.mxu0
  %724 = vdwg.mxu0
  %725 = vst [vmem:[%s3] sm:$0xff] %v720
  // Predicated region
  $region14: #{nlayer_discriminator_forward.15} parent=0 // pred_check
    _
  $region15: #{nlayer_discriminator_forward.15} parent=0 // pred_check_branch
    %727 = sbr.rel (0) target = $region17
  $region16: #{nlayer_discriminator_forward.15} parent=0 // pred_region
    _
  $region17: #{nlayer_discriminator_forward.15} parent=0 // pred_fallthru
    _
  // Predicated region
  $region18: #{nlayer_discriminator_forward.15} parent=0 // pred_check
    _
  $region19: #{nlayer_discriminator_forward.15} parent=0 // pred_check_branch
    %729 = sbr.rel (0) target = $region21
  $region20: #{nlayer_discriminator_forward.15} parent=0 // pred_region
    _
  $region21: #{nlayer_discriminator_forward.15} parent=0 // pred_fallthru
    _

</llo_original>
